<compile_context>
chip_gen: v6e
topology: v6e:2x2x1
jax: 0.10.0
libtpu: 0.0.40
codegen_flags: <defaults>
</compile_context>

<pallas_src>
import functools
import math

import jax
import jax.numpy as jnp
from jax import lax
from jax.experimental import pallas as pl
from jax.experimental.pallas import tpu as pltpu

LANE = 128  # padded lane width used for every hidden/feature slab


# ------------------------------ Fused kernel -------------------------------

def _fused_kernel(nb, no, num_heads, num_rounds, n_ground, n_block,
                  x_ref, w_ref, b_ref, out_ref):
    """One graph per grid step; weights/biases resident in VMEM across steps."""
    L = LANE
    H = num_heads
    f32 = jnp.float32

    x_in = x_ref[...]                    # (n, 128) packed raw node features
    n = x_in.shape[0]

    # Static, lane-aligned column-block views into the two packed parameter slabs.
    def W(i, k=1):
        return w_ref[:, i * L:(i + k) * L]

    def Bc(i, k=1):
        return b_ref[:, i * L:(i + k) * L]

    # ---- encoders: fused first layer (block|obstacle|target), per-encoder 2nd layer
    h1 = jnp.maximum(jnp.dot(x_in, W(0, 3), preferred_element_type=f32) + Bc(0, 3), 0.0)
    e_b = jnp.dot(h1[:, 0:L], W(3), preferred_element_type=f32) + Bc(3)
    e_o = jnp.dot(h1[:, L:2 * L], W(4), preferred_element_type=f32) + Bc(4)
    e_t = jnp.dot(h1[:, 2 * L:3 * L], W(5), preferred_element_type=f32) + Bc(5)

    # ---- node stacking via row masks (rows: ground | blocks | obstacles | targets)
    row = lax.broadcasted_iota(jnp.int32, (n, 1), 0)
    m_g = (row == 0).astype(f32)
    m_b = ((row >= 1) & (row < 1 + nb)).astype(f32)
    m_o = ((row >= 1 + nb) & (row < 1 + nb + no)).astype(f32)
    m_t = (row >= 1 + nb + no).astype(f32)
    x = m_g * Bc(6) + m_b * e_b + m_o * e_o + m_t * e_t      # (n, 128); cols >= hd stay 0

    # ---- GAT rounds: one fused QKV matmul per round; each head's Q/K/(Wm*V) sits in
    #      its own 128-lane block so every slice below is a free, lane-aligned view.
    contract_feat = (((1,), (1,)), ((), ()))   # q @ k.T contracting the feature axis
    QKV = 6
    G = 6 + 3 * H
    for _ in range(num_rounds):
        qkv = jnp.dot(x, W(QKV, 3 * H), preferred_element_type=f32)    # (n, 3*H*128)
        out = jnp.zeros((n, L), f32)
        for h in range(H):
            q = qkv[:, h * L:(h + 1) * L]
            k = qkv[:, (H + h) * L:(H + h + 1) * L]
            v = qkv[:, (2 * H + h) * L:(2 * H + h + 1) * L]
            e = lax.dot_general(q, k, contract_feat, preferred_element_type=f32)  # (n, n)
            e = e - jnp.max(e, axis=1, keepdims=True)        # softmax over dim=1
            p = jnp.exp(e)
            attn = p * (1.0 / jnp.sum(p, axis=1, keepdims=True))   # exact reciprocal
            out = out + jnp.dot(attn, v, preferred_element_type=f32)
        z = x + out
        gact = jnp.maximum(jnp.dot(z, W(G), preferred_element_type=f32) + Bc(7), 0.0)
        x = x + gact

    # ---- decoders: ground+blocks first layers fused; value layer on the mean row
    D1 = G + 1
    D2 = D1 + 3
    h_gb = jnp.maximum(jnp.dot(x, W(D1, 2), preferred_element_type=f32) + Bc(8, 2), 0.0)
    mean_x = jnp.mean(x, axis=0, keepdims=True)                              # (1, 128)
    h_v = jnp.maximum(jnp.dot(mean_x, W(D1 + 2), preferred_element_type=f32) + Bc(10), 0.0)

    a_ground = jnp.dot(h_gb[0:1, 0:L], W(D2), preferred_element_type=f32) + Bc(11)     # (1,128)
    a_blocks = jnp.dot(h_gb[:, L:2 * L], W(D2 + 1), preferred_element_type=f32) + Bc(12)
    value = jnp.dot(h_v, W(D2 + 2), preferred_element_type=f32) + Bc(13)  # scalar, lane-replicated

    # ---- dueling combine (padded columns of a_ground / a_blocks are exactly zero)
    a_sum = jnp.sum(a_ground, keepdims=True) + jnp.sum(a_blocks * m_b, keepdims=True)
    a_mean = a_sum * (1.0 / float(n_ground + nb * n_block))

    out_ref[0:n, :] = value + a_blocks - a_mean          # per-node q_blocks rows
    out_ref[n:n + 1, :] = value + a_ground - a_mean      # q_ground row


# --------------------------- One-time weight packing -------------------------

def prepare_params(params):
    """Pack all weights/biases once into two lane-padded VMEM slabs (hoisted out of
    the per-call path).  Returns (w_pack, b_pack, cfg)."""
    f32 = jnp.float32
    g = params["gat"]
    H = int(g["W_q"].shape[0])
    hd = int(params["ground_param"].shape[0])
    d_b = int(params["block_encoder"][0].shape[1])
    d_o = int(params["obstacle_encoder"][0].shape[1])
    d_t = int(params["target_encoder"][0].shape[1])
    n_ground = int(params["decoder_ground"][2].shape[0])
    n_block = int(params["decoder_blocks"][2].shape[0])

    assert hd <= LANE and (d_b + d_o + d_t) <= LANE
    assert n_ground <= LANE and n_block <= LANE
    # TODO(synk): hidden/feature/action dims > 128 would need multi-block packing.

    n_wblk = 13 + 3 * H
    w_pack = jnp.zeros((LANE, n_wblk * LANE), f32)
    b_pack = jnp.zeros((1, 14 * LANE), f32)

    def put_w(Wm, blk, w, row_off=0):
        w = jnp.asarray(w, f32)
        return Wm.at[row_off:row_off + w.shape[0],
                     blk * LANE: blk * LANE + w.shape[1]].set(w)

    def put_b(Bm, blk, b):
        b = jnp.asarray(b, f32).reshape(-1)
        return Bm.at[0, blk * LANE: blk * LANE + b.shape[0]].set(b)

    be_w1, be_b1, be_w2, be_b2 = params["block_encoder"]
    oe_w1, oe_b1, oe_w2, oe_b2 = params["obstacle_encoder"]
    te_w1, te_b1, te_w2, te_b2 = params["target_encoder"]

    # Encoder first layers: fused input slab (block features in input cols [0,d_b),
    # obstacle in [d_b,d_b+d_o), target in [d_b+d_o,...)).
    w_pack = put_w(w_pack, 0, jnp.asarray(be_w1).T, 0)
    w_pack = put_w(w_pack, 1, jnp.asarray(oe_w1).T, d_b)
    w_pack = put_w(w_pack, 2, jnp.asarray(te_w1).T, d_b + d_o)
    w_pack = put_w(w_pack, 3, jnp.asarray(be_w2).T)
    w_pack = put_w(w_pack, 4, jnp.asarray(oe_w2).T)
    w_pack = put_w(w_pack, 5, jnp.asarray(te_w2).T)
    b_pack = put_b(b_pack, 0, be_b1)
    b_pack = put_b(b_pack, 1, oe_b1)
    b_pack = put_b(b_pack, 2, te_b1)
    b_pack = put_b(b_pack, 3, be_b2)
    b_pack = put_b(b_pack, 4, oe_b2)
    b_pack = put_b(b_pack, 5, te_b2)
    b_pack = put_b(b_pack, 6, params["ground_param"])

    # GAT: per-head Q / K / (W_m·W_v) each in their own 128-lane block; W_m folded
    # into V (attn @ (m*V) == m*(attn @ V)).
    for h in range(H):
        w_pack = put_w(w_pack, 6 + h, g["W_q"][h])
        w_pack = put_w(w_pack, 6 + H + h, g["W_k"][h])
        w_pack = put_w(w_pack, 6 + 2 * H + h, g["W_m"][h] * g["W_v"][h])
    w_pack = put_w(w_pack, 6 + 3 * H, jnp.asarray(g["g_w"]).T)
    b_pack = put_b(b_pack, 7, g["g_b"])

    dg_w1, dg_b1, dg_w2, dg_b2 = params["decoder_ground"]
    db_w1, db_b1, db_w2, db_b2 = params["decoder_blocks"]
    dv_w1, dv_b1, dv_w2, dv_b2 = params["decoder_value"]
    D1 = 7 + 3 * H
    D2 = D1 + 3
    w_pack = put_w(w_pack, D1 + 0, jnp.asarray(dg_w1).T)
    w_pack = put_w(w_pack, D1 + 1, jnp.asarray(db_w1).T)
    w_pack = put_w(w_pack, D1 + 2, jnp.asarray(dv_w1).T)
    b_pack = put_b(b_pack, 8, dg_b1)
    b_pack = put_b(b_pack, 9, db_b1)
    b_pack = put_b(b_pack, 10, dv_b1)
    w_pack = put_w(w_pack, D2 + 0, jnp.asarray(dg_w2).T)
    w_pack = put_w(w_pack, D2 + 1, jnp.asarray(db_w2).T)
    # Value head: replicate the single output column across all 128 lanes so the
    # scalar value is lane-broadcast for free inside the kernel.
    w_pack = w_pack.at[0:hd, (D2 + 2) * LANE:(D2 + 3) * LANE].set(
        jnp.tile(jnp.asarray(dv_w2, f32).T, (1, LANE)))
    b_pack = put_b(b_pack, 11, dg_b2)
    b_pack = put_b(b_pack, 12, db_b2)
    b_pack = b_pack.at[0, 13 * LANE:14 * LANE].set(
        jnp.full((LANE,), jnp.asarray(dv_b2, f32).reshape(-1)[0]))

    cfg = dict(num_heads=H, hidden_dim=hd, dims=(d_b, d_o, d_t),
               n_ground=n_ground, n_block=n_block)
    return w_pack, b_pack, cfg


# --------------------------- Forward (batched + single) ----------------------

@functools.partial(jax.jit,
                   static_argnames=("num_rounds", "num_heads", "n_ground", "n_block"))
def forward_batched(w_pack, b_pack, blocks, obstacles, targets, *,
                    num_rounds, num_heads, n_ground, n_block):
    """Batched forward: one graph per grid step (all graphs share nb/no/nt)."""
    f32 = jnp.float32
    blocks = jnp.asarray(blocks, f32)
    obstacles = jnp.asarray(obstacles, f32)
    targets = jnp.asarray(targets, f32)
    B, nb, d_b = blocks.shape
    _, no, d_o = obstacles.shape
    _, nt, d_t = targets.shape
    n = 1 + nb + no + nt

    # TODO(synk): the PyTorch reference skips empty 'blocks'/'obstacles' groups;
    # this implementation assumes nb > 0 and no > 0.

    # Pack raw node features into one lane-padded (B, n, 128) slab (row 0 = ground).
    x_in = jnp.zeros((B, n, LANE), f32)
    x_in = x_in.at[:, 1:1 + nb, 0:d_b].set(blocks)
    x_in = x_in.at[:, 1 + nb:1 + nb + no, d_b:d_b + d_o].set(obstacles)
    x_in = x_in.at[:, 1 + nb + no:, d_b + d_o:d_b + d_o + d_t].set(targets)

    cw = w_pack.shape[1]
    cb = b_pack.shape[1]
    kernel = functools.partial(_fused_kernel, nb, no, num_heads, num_rounds,
                               n_ground, n_block)

    out = pl.pallas_call(
        kernel,
        out_shape=jax.ShapeDtypeStruct((B, n + 1, LANE), jnp.float32),
        grid=(B,),
        in_specs=[
            pl.BlockSpec((None, n, LANE), lambda b: (b, 0, 0)),    # per-graph nodes
            pl.BlockSpec((LANE, cw), lambda b: (0, 0)),            # weights: resident
            pl.BlockSpec((1, cb), lambda b: (0, 0)),               # biases:  resident
        ],
        out_specs=pl.BlockSpec((None, n + 1, LANE), lambda b: (b, 0, 0)),
        compiler_params=pltpu.CompilerParams(
            dimension_semantics=("parallel",)),    # v7x: batch split over both TCs
    )(x_in, w_pack, b_pack)

    # TODO(synk): self.sigma (nn.Sigmoid) is defined in __init__ but unused in forward.
    return {"ground": out[:, n, :n_ground], "cube": out[:, 1:1 + nb, :n_block]}


def forward(w_pack, b_pack, cfg, x, num_rounds):
    """Single-graph forward matching the original module's interface."""
    q = forward_batched(w_pack, b_pack,
                        x["blocks"][None], x["obstacles"][None], x["targets"][None],
                        num_rounds=num_rounds, num_heads=cfg["num_heads"],
                        n_ground=cfg["n_ground"], n_block=cfg["n_block"])
    return {"ground": q["ground"][0], "cube": q["cube"][0]}


# --------------------------- Parameter creation -----------------------------

def init_params(seed, block_dim, obstacle_dim, target_dim, hidden_dim,
                num_heads, n_ground_actions, n_block_actions):
    keys = iter(jax.random.split(jax.random.PRNGKey(seed), 64))

    def linear(in_f, out_f):
        bound = 1.0 / math.sqrt(in_f)
        w = jax.random.uniform(next(keys), (out_f, in_f), jnp.float32, -bound, bound)
        b = jax.random.uniform(next(keys), (out_f,), jnp.float32, -bound, bound)
        return w, b

    def two_layer(in_f, out_f):
        w1, b1 = linear(in_f, hidden_dim)
        w2, b2 = linear(hidden_dim, out_f)
        return (w1, b1, w2, b2)

    def xavier(shape):
        fan_in, fan_out = shape[-2], shape[-1]
        bound = math.sqrt(6.0 / (fan_in + fan_out))
        return jax.random.uniform(next(keys), shape, jnp.float32, -bound, bound)

    g_w, g_b = linear(hidden_dim, hidden_dim)
    return {
        "block_encoder": two_layer(block_dim, hidden_dim),
        "obstacle_encoder": two_layer(obstacle_dim, hidden_dim),
        "target_encoder": two_layer(target_dim, hidden_dim),
        "ground_param": jax.random.normal(next(keys), (hidden_dim,), jnp.float32),
        "gat": {
            "W_k": xavier((num_heads, hidden_dim, hidden_dim)),
            "W_q": xavier((num_heads, hidden_dim, hidden_dim)),
            "W_v": xavier((num_heads, hidden_dim, hidden_dim)),
            "W_m": jnp.ones((num_heads,), jnp.float32),
            "g_w": g_w,
            "g_b": g_b,
        },
        "decoder_ground": two_layer(hidden_dim, n_ground_actions),
        "decoder_blocks": two_layer(hidden_dim, n_block_actions),
        "decoder_value": two_layer(hidden_dim, 1),
    }


# --------------------------- Pure-JAX reference -----------------------------

def forward_ref(params, x, num_rounds):
    def mlp(v, p):
        w1, b1, w2, b2 = p
        h = jnp.maximum(v @ w1.T + b1, 0.0)
        return h @ w2.T + b2

    xb = mlp(x["blocks"], params["block_encoder"])
    xo = mlp(x["obstacles"], params["obstacle_encoder"])
    xt = mlp(x["targets"], params["target_encoder"])
    x_ = jnp.vstack([params["ground_param"][None, :], xb, xo, xt])
    nb = x["blocks"].shape[0]

    g = params["gat"]
    for _ in range(num_rounds):
        out = 0.0
        for i in range(g["W_k"].shape[0]):
            key = x_ @ g["W_k"][i]
            query = x_ @ g["W_q"][i]
            value = x_ @ g["W_v"][i]
            attn = jax.nn.softmax(query @ key.T, axis=1)
            out = out + g["W_m"][i] * (attn @ value)
        x_ = x_ + jnp.maximum((x_ + out) @ g["g_w"].T + g["g_b"], 0.0)

    A_ground = mlp(x_[0], params["decoder_ground"])
    A_blocks = mlp(x_[1:nb + 1], params["decoder_blocks"])
    value = mlp(x_.mean(axis=0), params["decoder_value"])
    A_mean = jnp.concatenate([A_ground, A_blocks.reshape(-1)]).mean()
    return {"ground": value + A_ground - A_mean,
            "cube": value + A_blocks - A_mean}


# ----------------------------------- Main ------------------------------------

if __name__ == "__main__":
    block_dim, obstacle_dim, target_dim = 6, 4, 3
    hidden_dim = 32
    num_rounds, num_heads = 2, 2
    n_ground_actions, n_block_actions = 5, 7
    nb, no, nt = 3, 2, 2            # N nodes = 1 + 3 + 2 + 2 = 8
    B = 4                           # batch of graphs -> grid=(B,)

    params = init_params(0, block_dim, obstacle_dim, target_dim, hidden_dim,
                         num_heads, n_ground_actions, n_block_actions)
    w_pack, b_pack, cfg = prepare_params(params)   # one-time packing (not per call)

    key = jax.random.PRNGKey(0)
    kb, ko, kt = jax.random.split(key, 3)
    blocks = jax.random.normal(kb, (B, nb, block_dim), jnp.float32)
    obstacles = jax.random.normal(ko, (B, no, obstacle_dim), jnp.float32)
    targets = jax.random.normal(kt, (B, nt, target_dim), jnp.float32)

    q = forward_batched(w_pack, b_pack, blocks, obstacles, targets,
                        num_rounds=num_rounds, num_heads=cfg["num_heads"],
                        n_ground=cfg["n_ground"], n_block=cfg["n_block"])
    jax.block_until_ready(q["ground"])
    jax.block_until_ready(q["cube"])
    assert q["ground"].shape == (B, n_ground_actions)
    assert q["cube"].shape == (B, nb, n_block_actions)

    # Single-graph entry point (original module semantics).
    x0 = {"blocks": blocks[0], "obstacles": obstacles[0], "targets": targets[0]}
    q0 = forward(w_pack, b_pack, cfg, x0, num_rounds)
    jax.block_until_ready(q0["ground"])
    assert q0["ground"].shape == (n_ground_actions,)
    assert q0["cube"].shape == (nb, n_block_actions)

    # Correctness vs pure-JAX per-graph reference (softmax now uses exact division;
    # residual error is MXU f32 matmul precision).
    max_err = 0.0
    for b in range(B):
        xr = {"blocks": blocks[b], "obstacles": obstacles[b], "targets": targets[b]}
        qr = forward_ref(params, xr, num_rounds)
        max_err = max(max_err,
                      float(jnp.max(jnp.abs(q["ground"][b] - qr["ground"]))),
                      float(jnp.max(jnp.abs(q["cube"][b] - qr["cube"]))))
    max_err = max(max_err,
                  float(jnp.max(jnp.abs(q0["ground"] - q["ground"][0]))),
                  float(jnp.max(jnp.abs(q0["cube"] - q["cube"][0]))))
    assert max_err < 5e-2, f"mismatch vs reference: {max_err}"
    print("KERNEL_OK")
</pallas_src>

<mosaic_0001>
module attributes {stable_mosaic.version = 11 : i64} {
  func.func @_fused_kernel(%arg0: i32, %arg1: memref<1x8x128xf32, #tpu.memory_space<vmem>>, %arg2: memref<128x2432xf32, #tpu.memory_space<vmem>>, %arg3: memref<1x1792xf32, #tpu.memory_space<vmem>>, %arg4: memref<1x9x128xf32, #tpu.memory_space<vmem>>) attributes {dimension_semantics = [#tpu.dimension_semantics<parallel>], iteration_bounds = array<i64: 4>, scalar_prefetch = 0 : i64, scratch_operands = 0 : i64, tpu.core_type = #tpu.core_type<tc>, window_params = [{transform_indices = @transform_0, window_bounds = array<i64: 1, 8, 128>}, {pipeline_mode = #tpu.pipeline_mode<synchronous>, transform_indices = @transform_1, window_bounds = array<i64: 128, 2432>}, {pipeline_mode = #tpu.pipeline_mode<synchronous>, transform_indices = @transform_2, window_bounds = array<i64: 1, 1792>}, {transform_indices = @transform_3, window_bounds = array<i64: 1, 9, 128>}]} {
    %c0 = arith.constant 0 : index
    %c0_0 = arith.constant 0 : index
    %c0_1 = arith.constant 0 : index
    %0 = vector.load %arg1[%c0, %c0_0, %c0_1] : memref<1x8x128xf32, #tpu.memory_space<vmem>>, vector<1x8x128xf32>
    %1 = vector.shape_cast %0 : vector<1x8x128xf32> to vector<8x128xf32>
    %c0_2 = arith.constant 0 : index
    %c0_3 = arith.constant 0 : index
    %2 = vector.load %arg2[%c0_2, %c0_3] : memref<128x2432xf32, #tpu.memory_space<vmem>>, vector<128x384xf32>
    %cst = arith.constant dense<0.000000e+00> : vector<8x384xf32>
    %3 = tpu.matmul %1, %2, %cst {dimension_numbers = #tpu.dot_dimension_numbers<[1], [0], [0], [1], [0, 0, 1, 1], [], []>} : vector<8x128xf32>, vector<128x384xf32>, vector<8x384xf32> -> vector<8x384xf32>
    %c0_4 = arith.constant 0 : index
    %c0_5 = arith.constant 0 : index
    %4 = vector.load %arg3[%c0_4, %c0_5] : memref<1x1792xf32, #tpu.memory_space<vmem>>, vector<1x384xf32>
    %5 = vector.broadcast %4 : vector<1x384xf32> to vector<8x384xf32>
    %6 = arith.addf %3, %5 : vector<8x384xf32>
    %cst_6 = arith.constant 0.000000e+00 : f32
    %7 = vector.broadcast %cst_6 : f32 to vector<8x384xf32>
    %8 = arith.maximumf %6, %7 : vector<8x384xf32>
    %9 = vector.extract_strided_slice %8 {offsets = [0, 0], sizes = [8, 128], strides = [1, 1]} : vector<8x384xf32> to vector<8x128xf32>
    %c0_7 = arith.constant 0 : index
    %c384 = arith.constant 384 : index
    %10 = vector.load %arg2[%c0_7, %c384] : memref<128x2432xf32, #tpu.memory_space<vmem>>, vector<128x128xf32>
    %cst_8 = arith.constant dense<0.000000e+00> : vector<8x128xf32>
    %11 = tpu.matmul %9, %10, %cst_8 {dimension_numbers = #tpu.dot_dimension_numbers<[1], [0], [0], [1], [0, 0, 1, 1], [], []>} : vector<8x128xf32>, vector<128x128xf32>, vector<8x128xf32> -> vector<8x128xf32>
    %c0_9 = arith.constant 0 : index
    %c384_10 = arith.constant 384 : index
    %12 = vector.load %arg3[%c0_9, %c384_10] : memref<1x1792xf32, #tpu.memory_space<vmem>>, vector<1x128xf32>
    %13 = vector.broadcast %12 : vector<1x128xf32> to vector<8x128xf32>
    %14 = arith.addf %11, %13 : vector<8x128xf32>
    %15 = vector.extract_strided_slice %8 {offsets = [0, 128], sizes = [8, 128], strides = [1, 1]} : vector<8x384xf32> to vector<8x128xf32>
    %c0_11 = arith.constant 0 : index
    %c512 = arith.constant 512 : index
    %16 = vector.load %arg2[%c0_11, %c512] : memref<128x2432xf32, #tpu.memory_space<vmem>>, vector<128x128xf32>
    %cst_12 = arith.constant dense<0.000000e+00> : vector<8x128xf32>
    %17 = tpu.matmul %15, %16, %cst_12 {dimension_numbers = #tpu.dot_dimension_numbers<[1], [0], [0], [1], [0, 0, 1, 1], [], []>} : vector<8x128xf32>, vector<128x128xf32>, vector<8x128xf32> -> vector<8x128xf32>
    %c0_13 = arith.constant 0 : index
    %c512_14 = arith.constant 512 : index
    %18 = vector.load %arg3[%c0_13, %c512_14] : memref<1x1792xf32, #tpu.memory_space<vmem>>, vector<1x128xf32>
    %19 = vector.broadcast %18 : vector<1x128xf32> to vector<8x128xf32>
    %20 = arith.addf %17, %19 : vector<8x128xf32>
    %21 = vector.extract_strided_slice %8 {offsets = [0, 256], sizes = [8, 128], strides = [1, 1]} : vector<8x384xf32> to vector<8x128xf32>
    %c0_15 = arith.constant 0 : index
    %c640 = arith.constant 640 : index
    %22 = vector.load %arg2[%c0_15, %c640] : memref<128x2432xf32, #tpu.memory_space<vmem>>, vector<128x128xf32>
    %cst_16 = arith.constant dense<0.000000e+00> : vector<8x128xf32>
    %23 = tpu.matmul %21, %22, %cst_16 {dimension_numbers = #tpu.dot_dimension_numbers<[1], [0], [0], [1], [0, 0, 1, 1], [], []>} : vector<8x128xf32>, vector<128x128xf32>, vector<8x128xf32> -> vector<8x128xf32>
    %c0_17 = arith.constant 0 : index
    %c640_18 = arith.constant 640 : index
    %24 = vector.load %arg3[%c0_17, %c640_18] : memref<1x1792xf32, #tpu.memory_space<vmem>>, vector<1x128xf32>
    %25 = vector.broadcast %24 : vector<1x128xf32> to vector<8x128xf32>
    %26 = arith.addf %23, %25 : vector<8x128xf32>
    %27 = tpu.iota {dimensions = array<i32: 0>} : vector<8x1xi32>
    %c0_i32 = arith.constant 0 : i32
    %28 = vector.broadcast %c0_i32 : i32 to vector<8x1xi32>
    %29 = arith.cmpi eq, %27, %28 : vector<8x1xi32>
    %30 = arith.extui %29 : vector<8x1xi1> to vector<8x1xi32>
    %31 = arith.sitofp %30 : vector<8x1xi32> to vector<8x1xf32>
    %c1_i32 = arith.constant 1 : i32
    %32 = vector.broadcast %c1_i32 : i32 to vector<8x1xi32>
    %33 = arith.cmpi sge, %27, %32 : vector<8x1xi32>
    %c4_i32 = arith.constant 4 : i32
    %34 = vector.broadcast %c4_i32 : i32 to vector<8x1xi32>
    %35 = arith.cmpi slt, %27, %34 : vector<8x1xi32>
    %36 = arith.andi %33, %35 : vector<8x1xi1>
    %37 = arith.extui %36 : vector<8x1xi1> to vector<8x1xi32>
    %38 = arith.sitofp %37 : vector<8x1xi32> to vector<8x1xf32>
    %c4_i32_19 = arith.constant 4 : i32
    %39 = vector.broadcast %c4_i32_19 : i32 to vector<8x1xi32>
    %40 = arith.cmpi sge, %27, %39 : vector<8x1xi32>
    %c6_i32 = arith.constant 6 : i32
    %41 = vector.broadcast %c6_i32 : i32 to vector<8x1xi32>
    %42 = arith.cmpi slt, %27, %41 : vector<8x1xi32>
    %43 = arith.andi %40, %42 : vector<8x1xi1>
    %44 = arith.extui %43 : vector<8x1xi1> to vector<8x1xi32>
    %45 = arith.sitofp %44 : vector<8x1xi32> to vector<8x1xf32>
    %c6_i32_20 = arith.constant 6 : i32
    %46 = vector.broadcast %c6_i32_20 : i32 to vector<8x1xi32>
    %47 = arith.cmpi sge, %27, %46 : vector<8x1xi32>
    %48 = arith.extui %47 : vector<8x1xi1> to vector<8x1xi32>
    %49 = arith.sitofp %48 : vector<8x1xi32> to vector<8x1xf32>
    %c0_21 = arith.constant 0 : index
    %c768 = arith.constant 768 : index
    %50 = vector.load %arg3[%c0_21, %c768] : memref<1x1792xf32, #tpu.memory_space<vmem>>, vector<1x128xf32>
    %51 = vector.broadcast %31 : vector<8x1xf32> to vector<8x128xf32>
    %52 = vector.broadcast %50 : vector<1x128xf32> to vector<8x128xf32>
    %53 = arith.mulf %51, %52 : vector<8x128xf32>
    %54 = vector.broadcast %38 : vector<8x1xf32> to vector<8x128xf32>
    %55 = arith.mulf %54, %14 : vector<8x128xf32>
    %56 = arith.addf %53, %55 : vector<8x128xf32>
    %57 = vector.broadcast %45 : vector<8x1xf32> to vector<8x128xf32>
    %58 = arith.mulf %57, %20 : vector<8x128xf32>
    %59 = arith.addf %56, %58 : vector<8x128xf32>
    %60 = vector.broadcast %49 : vector<8x1xf32> to vector<8x128xf32>
    %61 = arith.mulf %60, %26 : vector<8x128xf32>
    %62 = arith.addf %59, %61 : vector<8x128xf32>
    %c0_22 = arith.constant 0 : index
    %c768_23 = arith.constant 768 : index
    %63 = vector.load %arg2[%c0_22, %c768_23] : memref<128x2432xf32, #tpu.memory_space<vmem>>, vector<128x768xf32>
    %cst_24 = arith.constant dense<0.000000e+00> : vector<8x768xf32>
    %64 = tpu.matmul %62, %63, %cst_24 {dimension_numbers = #tpu.dot_dimension_numbers<[1], [0], [0], [1], [0, 0, 1, 1], [], []>} : vector<8x128xf32>, vector<128x768xf32>, vector<8x768xf32> -> vector<8x768xf32>
    %cst_25 = arith.constant 0.000000e+00 : f32
    %65 = vector.broadcast %cst_25 : f32 to vector<8x128xf32>
    %66 = vector.extract_strided_slice %64 {offsets = [0, 0], sizes = [8, 128], strides = [1, 1]} : vector<8x768xf32> to vector<8x128xf32>
    %67 = vector.extract_strided_slice %64 {offsets = [0, 256], sizes = [8, 128], strides = [1, 1]} : vector<8x768xf32> to vector<8x128xf32>
    %68 = vector.extract_strided_slice %64 {offsets = [0, 512], sizes = [8, 128], strides = [1, 1]} : vector<8x768xf32> to vector<8x128xf32>
    %cst_26 = arith.constant dense<0.000000e+00> : vector<8x8xf32>
    %69 = tpu.matmul %66, %67, %cst_26 {dimension_numbers = #tpu.dot_dimension_numbers<[1], [1], [0], [0], [0, 0, 1, 0], [], []>} : vector<8x128xf32>, vector<8x128xf32>, vector<8x8xf32> -> vector<8x8xf32>
    %cst_27 = arith.constant dense<0xFF800000> : vector<8xf32>
    %70 = vector.multi_reduction <maximumf>, %69, %cst_27 [1] : vector<8x8xf32> to vector<8xf32>
    %71 = vector.shape_cast %70 : vector<8xf32> to vector<8x1xf32>
    %72 = vector.broadcast %71 : vector<8x1xf32> to vector<8x8xf32>
    %73 = arith.subf %69, %72 : vector<8x8xf32>
    %74 = math.exp %73 : vector<8x8xf32>
    %cst_28 = arith.constant dense<0.000000e+00> : vector<8xf32>
    %75 = vector.multi_reduction <add>, %74, %cst_28 [1] : vector<8x8xf32> to vector<8xf32>
    %76 = vector.shape_cast %75 : vector<8xf32> to vector<8x1xf32>
    %cst_29 = arith.constant 1.000000e+00 : f32
    %77 = vector.broadcast %cst_29 : f32 to vector<8x1xf32>
    %78 = arith.divf %77, %76 : vector<8x1xf32>
    %79 = vector.broadcast %78 : vector<8x1xf32> to vector<8x8xf32>
    %80 = arith.mulf %74, %79 : vector<8x8xf32>
    %cst_30 = arith.constant dense<0.000000e+00> : vector<8x128xf32>
    %81 = tpu.matmul %80, %68, %cst_30 {dimension_numbers = #tpu.dot_dimension_numbers<[1], [0], [0], [1], [0, 0, 1, 1], [], []>} : vector<8x8xf32>, vector<8x128xf32>, vector<8x128xf32> -> vector<8x128xf32>
    %82 = arith.addf %65, %81 : vector<8x128xf32>
    %83 = vector.extract_strided_slice %64 {offsets = [0, 128], sizes = [8, 128], strides = [1, 1]} : vector<8x768xf32> to vector<8x128xf32>
    %84 = vector.extract_strided_slice %64 {offsets = [0, 384], sizes = [8, 128], strides = [1, 1]} : vector<8x768xf32> to vector<8x128xf32>
    %85 = vector.extract_strided_slice %64 {offsets = [0, 640], sizes = [8, 128], strides = [1, 1]} : vector<8x768xf32> to vector<8x128xf32>
    %cst_31 = arith.constant dense<0.000000e+00> : vector<8x8xf32>
    %86 = tpu.matmul %83, %84, %cst_31 {dimension_numbers = #tpu.dot_dimension_numbers<[1], [1], [0], [0], [0, 0, 1, 0], [], []>} : vector<8x128xf32>, vector<8x128xf32>, vector<8x8xf32> -> vector<8x8xf32>
    %cst_32 = arith.constant dense<0xFF800000> : vector<8xf32>
    %87 = vector.multi_reduction <maximumf>, %86, %cst_32 [1] : vector<8x8xf32> to vector<8xf32>
    %88 = vector.shape_cast %87 : vector<8xf32> to vector<8x1xf32>
    %89 = vector.broadcast %88 : vector<8x1xf32> to vector<8x8xf32>
    %90 = arith.subf %86, %89 : vector<8x8xf32>
    %91 = math.exp %90 : vector<8x8xf32>
    %cst_33 = arith.constant dense<0.000000e+00> : vector<8xf32>
    %92 = vector.multi_reduction <add>, %91, %cst_33 [1] : vector<8x8xf32> to vector<8xf32>
    %93 = vector.shape_cast %92 : vector<8xf32> to vector<8x1xf32>
    %cst_34 = arith.constant 1.000000e+00 : f32
    %94 = vector.broadcast %cst_34 : f32 to vector<8x1xf32>
    %95 = arith.divf %94, %93 : vector<8x1xf32>
    %96 = vector.broadcast %95 : vector<8x1xf32> to vector<8x8xf32>
    %97 = arith.mulf %91, %96 : vector<8x8xf32>
    %cst_35 = arith.constant dense<0.000000e+00> : vector<8x128xf32>
    %98 = tpu.matmul %97, %85, %cst_35 {dimension_numbers = #tpu.dot_dimension_numbers<[1], [0], [0], [1], [0, 0, 1, 1], [], []>} : vector<8x8xf32>, vector<8x128xf32>, vector<8x128xf32> -> vector<8x128xf32>
    %99 = arith.addf %82, %98 : vector<8x128xf32>
    %100 = arith.addf %62, %99 : vector<8x128xf32>
    %c0_36 = arith.constant 0 : index
    %c1536 = arith.constant 1536 : index
    %101 = vector.load %arg2[%c0_36, %c1536] : memref<128x2432xf32, #tpu.memory_space<vmem>>, vector<128x128xf32>
    %cst_37 = arith.constant dense<0.000000e+00> : vector<8x128xf32>
    %102 = tpu.matmul %100, %101, %cst_37 {dimension_numbers = #tpu.dot_dimension_numbers<[1], [0], [0], [1], [0, 0, 1, 1], [], []>} : vector<8x128xf32>, vector<128x128xf32>, vector<8x128xf32> -> vector<8x128xf32>
    %c0_38 = arith.constant 0 : index
    %c896 = arith.constant 896 : index
    %103 = vector.load %arg3[%c0_38, %c896] : memref<1x1792xf32, #tpu.memory_space<vmem>>, vector<1x128xf32>
    %104 = vector.broadcast %103 : vector<1x128xf32> to vector<8x128xf32>
    %105 = arith.addf %102, %104 : vector<8x128xf32>
    %cst_39 = arith.constant 0.000000e+00 : f32
    %106 = vector.broadcast %cst_39 : f32 to vector<8x128xf32>
    %107 = arith.maximumf %105, %106 : vector<8x128xf32>
    %108 = arith.addf %62, %107 : vector<8x128xf32>
    %c0_40 = arith.constant 0 : index
    %c768_41 = arith.constant 768 : index
    %109 = vector.load %arg2[%c0_40, %c768_41] : memref<128x2432xf32, #tpu.memory_space<vmem>>, vector<128x768xf32>
    %cst_42 = arith.constant dense<0.000000e+00> : vector<8x768xf32>
    %110 = tpu.matmul %108, %109, %cst_42 {dimension_numbers = #tpu.dot_dimension_numbers<[1], [0], [0], [1], [0, 0, 1, 1], [], []>} : vector<8x128xf32>, vector<128x768xf32>, vector<8x768xf32> -> vector<8x768xf32>
    %cst_43 = arith.constant 0.000000e+00 : f32
    %111 = vector.broadcast %cst_43 : f32 to vector<8x128xf32>
    %112 = vector.extract_strided_slice %110 {offsets = [0, 0], sizes = [8, 128], strides = [1, 1]} : vector<8x768xf32> to vector<8x128xf32>
    %113 = vector.extract_strided_slice %110 {offsets = [0, 256], sizes = [8, 128], strides = [1, 1]} : vector<8x768xf32> to vector<8x128xf32>
    %114 = vector.extract_strided_slice %110 {offsets = [0, 512], sizes = [8, 128], strides = [1, 1]} : vector<8x768xf32> to vector<8x128xf32>
    %cst_44 = arith.constant dense<0.000000e+00> : vector<8x8xf32>
    %115 = tpu.matmul %112, %113, %cst_44 {dimension_numbers = #tpu.dot_dimension_numbers<[1], [1], [0], [0], [0, 0, 1, 0], [], []>} : vector<8x128xf32>, vector<8x128xf32>, vector<8x8xf32> -> vector<8x8xf32>
    %cst_45 = arith.constant dense<0xFF800000> : vector<8xf32>
    %116 = vector.multi_reduction <maximumf>, %115, %cst_45 [1] : vector<8x8xf32> to vector<8xf32>
    %117 = vector.shape_cast %116 : vector<8xf32> to vector<8x1xf32>
    %118 = vector.broadcast %117 : vector<8x1xf32> to vector<8x8xf32>
    %119 = arith.subf %115, %118 : vector<8x8xf32>
    %120 = math.exp %119 : vector<8x8xf32>
    %cst_46 = arith.constant dense<0.000000e+00> : vector<8xf32>
    %121 = vector.multi_reduction <add>, %120, %cst_46 [1] : vector<8x8xf32> to vector<8xf32>
    %122 = vector.shape_cast %121 : vector<8xf32> to vector<8x1xf32>
    %cst_47 = arith.constant 1.000000e+00 : f32
    %123 = vector.broadcast %cst_47 : f32 to vector<8x1xf32>
    %124 = arith.divf %123, %122 : vector<8x1xf32>
    %125 = vector.broadcast %124 : vector<8x1xf32> to vector<8x8xf32>
    %126 = arith.mulf %120, %125 : vector<8x8xf32>
    %cst_48 = arith.constant dense<0.000000e+00> : vector<8x128xf32>
    %127 = tpu.matmul %126, %114, %cst_48 {dimension_numbers = #tpu.dot_dimension_numbers<[1], [0], [0], [1], [0, 0, 1, 1], [], []>} : vector<8x8xf32>, vector<8x128xf32>, vector<8x128xf32> -> vector<8x128xf32>
    %128 = arith.addf %111, %127 : vector<8x128xf32>
    %129 = vector.extract_strided_slice %110 {offsets = [0, 128], sizes = [8, 128], strides = [1, 1]} : vector<8x768xf32> to vector<8x128xf32>
    %130 = vector.extract_strided_slice %110 {offsets = [0, 384], sizes = [8, 128], strides = [1, 1]} : vector<8x768xf32> to vector<8x128xf32>
    %131 = vector.extract_strided_slice %110 {offsets = [0, 640], sizes = [8, 128], strides = [1, 1]} : vector<8x768xf32> to vector<8x128xf32>
    %cst_49 = arith.constant dense<0.000000e+00> : vector<8x8xf32>
    %132 = tpu.matmul %129, %130, %cst_49 {dimension_numbers = #tpu.dot_dimension_numbers<[1], [1], [0], [0], [0, 0, 1, 0], [], []>} : vector<8x128xf32>, vector<8x128xf32>, vector<8x8xf32> -> vector<8x8xf32>
    %cst_50 = arith.constant dense<0xFF800000> : vector<8xf32>
    %133 = vector.multi_reduction <maximumf>, %132, %cst_50 [1] : vector<8x8xf32> to vector<8xf32>
    %134 = vector.shape_cast %133 : vector<8xf32> to vector<8x1xf32>
    %135 = vector.broadcast %134 : vector<8x1xf32> to vector<8x8xf32>
    %136 = arith.subf %132, %135 : vector<8x8xf32>
    %137 = math.exp %136 : vector<8x8xf32>
    %cst_51 = arith.constant dense<0.000000e+00> : vector<8xf32>
    %138 = vector.multi_reduction <add>, %137, %cst_51 [1] : vector<8x8xf32> to vector<8xf32>
    %139 = vector.shape_cast %138 : vector<8xf32> to vector<8x1xf32>
    %cst_52 = arith.constant 1.000000e+00 : f32
    %140 = vector.broadcast %cst_52 : f32 to vector<8x1xf32>
    %141 = arith.divf %140, %139 : vector<8x1xf32>
    %142 = vector.broadcast %141 : vector<8x1xf32> to vector<8x8xf32>
    %143 = arith.mulf %137, %142 : vector<8x8xf32>
    %cst_53 = arith.constant dense<0.000000e+00> : vector<8x128xf32>
    %144 = tpu.matmul %143, %131, %cst_53 {dimension_numbers = #tpu.dot_dimension_numbers<[1], [0], [0], [1], [0, 0, 1, 1], [], []>} : vector<8x8xf32>, vector<8x128xf32>, vector<8x128xf32> -> vector<8x128xf32>
    %145 = arith.addf %128, %144 : vector<8x128xf32>
    %146 = arith.addf %108, %145 : vector<8x128xf32>
    %c0_54 = arith.constant 0 : index
    %c1536_55 = arith.constant 1536 : index
    %147 = vector.load %arg2[%c0_54, %c1536_55] : memref<128x2432xf32, #tpu.memory_space<vmem>>, vector<128x128xf32>
    %cst_56 = arith.constant dense<0.000000e+00> : vector<8x128xf32>
    %148 = tpu.matmul %146, %147, %cst_56 {dimension_numbers = #tpu.dot_dimension_numbers<[1], [0], [0], [1], [0, 0, 1, 1], [], []>} : vector<8x128xf32>, vector<128x128xf32>, vector<8x128xf32> -> vector<8x128xf32>
    %c0_57 = arith.constant 0 : index
    %c896_58 = arith.constant 896 : index
    %149 = vector.load %arg3[%c0_57, %c896_58] : memref<1x1792xf32, #tpu.memory_space<vmem>>, vector<1x128xf32>
    %150 = vector.broadcast %149 : vector<1x128xf32> to vector<8x128xf32>
    %151 = arith.addf %148, %150 : vector<8x128xf32>
    %cst_59 = arith.constant 0.000000e+00 : f32
    %152 = vector.broadcast %cst_59 : f32 to vector<8x128xf32>
    %153 = arith.maximumf %151, %152 : vector<8x128xf32>
    %154 = arith.addf %108, %153 : vector<8x128xf32>
    %c0_60 = arith.constant 0 : index
    %c1664 = arith.constant 1664 : index
    %155 = vector.load %arg2[%c0_60, %c1664] : memref<128x2432xf32, #tpu.memory_space<vmem>>, vector<128x256xf32>
    %cst_61 = arith.constant dense<0.000000e+00> : vector<8x256xf32>
    %156 = tpu.matmul %154, %155, %cst_61 {dimension_numbers = #tpu.dot_dimension_numbers<[1], [0], [0], [1], [0, 0, 1, 1], [], []>} : vector<8x128xf32>, vector<128x256xf32>, vector<8x256xf32> -> vector<8x256xf32>
    %c0_62 = arith.constant 0 : index
    %c1024 = arith.constant 1024 : index
    %157 = vector.load %arg3[%c0_62, %c1024] : memref<1x1792xf32, #tpu.memory_space<vmem>>, vector<1x256xf32>
    %158 = vector.broadcast %157 : vector<1x256xf32> to vector<8x256xf32>
    %159 = arith.addf %156, %158 : vector<8x256xf32>
    %cst_63 = arith.constant 0.000000e+00 : f32
    %160 = vector.broadcast %cst_63 : f32 to vector<8x256xf32>
    %161 = arith.maximumf %159, %160 : vector<8x256xf32>
    %cst_64 = arith.constant dense<0.000000e+00> : vector<128xf32>
    %162 = vector.multi_reduction <add>, %154, %cst_64 [0] : vector<8x128xf32> to vector<128xf32>
    %163 = vector.shape_cast %162 : vector<128xf32> to vector<1x128xf32>
    %cst_65 = arith.constant 8.000000e+00 : f32
    %164 = vector.broadcast %cst_65 : f32 to vector<1x128xf32>
    %165 = arith.divf %163, %164 : vector<1x128xf32>
    %c0_66 = arith.constant 0 : index
    %c1920 = arith.constant 1920 : index
    %166 = vector.load %arg2[%c0_66, %c1920] : memref<128x2432xf32, #tpu.memory_space<vmem>>, vector<128x128xf32>
    %cst_67 = arith.constant dense<0.000000e+00> : vector<1x128xf32>
    %167 = tpu.matmul %165, %166, %cst_67 {dimension_numbers = #tpu.dot_dimension_numbers<[1], [0], [0], [1], [0, 0, 1, 1], [], []>} : vector<1x128xf32>, vector<128x128xf32>, vector<1x128xf32> -> vector<1x128xf32>
    %c0_68 = arith.constant 0 : index
    %c1280 = arith.constant 1280 : index
    %168 = vector.load %arg3[%c0_68, %c1280] : memref<1x1792xf32, #tpu.memory_space<vmem>>, vector<1x128xf32>
    %169 = arith.addf %167, %168 : vector<1x128xf32>
    %cst_69 = arith.constant 0.000000e+00 : f32
    %170 = vector.broadcast %cst_69 : f32 to vector<1x128xf32>
    %171 = arith.maximumf %169, %170 : vector<1x128xf32>
    %172 = vector.extract_strided_slice %161 {offsets = [0, 0], sizes = [1, 128], strides = [1, 1]} : vector<8x256xf32> to vector<1x128xf32>
    %c0_70 = arith.constant 0 : index
    %c2048 = arith.constant 2048 : index
    %173 = vector.load %arg2[%c0_70, %c2048] : memref<128x2432xf32, #tpu.memory_space<vmem>>, vector<128x128xf32>
    %cst_71 = arith.constant dense<0.000000e+00> : vector<1x128xf32>
    %174 = tpu.matmul %172, %173, %cst_71 {dimension_numbers = #tpu.dot_dimension_numbers<[1], [0], [0], [1], [0, 0, 1, 1], [], []>} : vector<1x128xf32>, vector<128x128xf32>, vector<1x128xf32> -> vector<1x128xf32>
    %c0_72 = arith.constant 0 : index
    %c1408 = arith.constant 1408 : index
    %175 = vector.load %arg3[%c0_72, %c1408] : memref<1x1792xf32, #tpu.memory_space<vmem>>, vector<1x128xf32>
    %176 = arith.addf %174, %175 : vector<1x128xf32>
    %177 = vector.extract_strided_slice %161 {offsets = [0, 128], sizes = [8, 128], strides = [1, 1]} : vector<8x256xf32> to vector<8x128xf32>
    %c0_73 = arith.constant 0 : index
    %c2176 = arith.constant 2176 : index
    %178 = vector.load %arg2[%c0_73, %c2176] : memref<128x2432xf32, #tpu.memory_space<vmem>>, vector<128x128xf32>
    %cst_74 = arith.constant dense<0.000000e+00> : vector<8x128xf32>
    %179 = tpu.matmul %177, %178, %cst_74 {dimension_numbers = #tpu.dot_dimension_numbers<[1], [0], [0], [1], [0, 0, 1, 1], [], []>} : vector<8x128xf32>, vector<128x128xf32>, vector<8x128xf32> -> vector<8x128xf32>
    %c0_75 = arith.constant 0 : index
    %c1536_76 = arith.constant 1536 : index
    %180 = vector.load %arg3[%c0_75, %c1536_76] : memref<1x1792xf32, #tpu.memory_space<vmem>>, vector<1x128xf32>
    %181 = vector.broadcast %180 : vector<1x128xf32> to vector<8x128xf32>
    %182 = arith.addf %179, %181 : vector<8x128xf32>
    %c0_77 = arith.constant 0 : index
    %c2304 = arith.constant 2304 : index
    %183 = vector.load %arg2[%c0_77, %c2304] : memref<128x2432xf32, #tpu.memory_space<vmem>>, vector<128x128xf32>
    %cst_78 = arith.constant dense<0.000000e+00> : vector<1x128xf32>
    %184 = tpu.matmul %171, %183, %cst_78 {dimension_numbers = #tpu.dot_dimension_numbers<[1], [0], [0], [1], [0, 0, 1, 1], [], []>} : vector<1x128xf32>, vector<128x128xf32>, vector<1x128xf32> -> vector<1x128xf32>
    %c0_79 = arith.constant 0 : index
    %c1664_80 = arith.constant 1664 : index
    %185 = vector.load %arg3[%c0_79, %c1664_80] : memref<1x1792xf32, #tpu.memory_space<vmem>>, vector<1x128xf32>
    %186 = arith.addf %184, %185 : vector<1x128xf32>
    %187 = vector.shape_cast %176 : vector<1x128xf32> to vector<1x1x128xf32>
    %cst_81 = arith.constant dense<0.000000e+00> : vector<1xf32>
    %188 = vector.multi_reduction <add>, %187, %cst_81 [1, 2] : vector<1x1x128xf32> to vector<1xf32>
    %189 = vector.shape_cast %188 : vector<1xf32> to vector<1x1x1xf32>
    %190 = vector.extract %189[0, 0, 0] : f32 from vector<1x1x1xf32>
    %191 = vector.broadcast %190 : f32 to vector<1x1xf32>
    %192 = vector.broadcast %38 : vector<8x1xf32> to vector<8x128xf32>
    %193 = arith.mulf %182, %192 : vector<8x128xf32>
    %194 = vector.shape_cast %193 : vector<8x128xf32> to vector<1x8x128xf32>
    %cst_82 = arith.constant dense<0.000000e+00> : vector<1xf32>
    %195 = vector.multi_reduction <add>, %194, %cst_82 [1, 2] : vector<1x8x128xf32> to vector<1xf32>
    %196 = vector.shape_cast %195 : vector<1xf32> to vector<1x1x1xf32>
    %197 = vector.extract %196[0, 0, 0] : f32 from vector<1x1x1xf32>
    %198 = vector.broadcast %197 : f32 to vector<1x1xf32>
    %199 = arith.addf %191, %198 : vector<1x1xf32>
    %cst_83 = arith.constant 0.0384615399 : f32
    %200 = vector.broadcast %cst_83 : f32 to vector<1x1xf32>
    %201 = arith.mulf %199, %200 : vector<1x1xf32>
    %202 = vector.broadcast %186 : vector<1x128xf32> to vector<8x128xf32>
    %203 = arith.addf %202, %182 : vector<8x128xf32>
    %204 = vector.broadcast %201 : vector<1x1xf32> to vector<8x128xf32>
    %205 = arith.subf %203, %204 : vector<8x128xf32>
    %c0_84 = arith.constant 0 : index
    %c0_85 = arith.constant 0 : index
    %c0_86 = arith.constant 0 : index
    %206 = vector.load %arg4[%c0_84, %c0_85, %c0_86] : memref<1x9x128xf32, #tpu.memory_space<vmem>>, vector<1x8x128xf32>
    %207 = vector.shape_cast %206 : vector<1x8x128xf32> to vector<8x128xf32>
    %208 = vector.shape_cast %205 : vector<8x128xf32> to vector<1x8x128xf32>
    tpu.vector_store %arg4[%c0_84, %c0_85, %c0_86], %208 {strides = array<i32>} : memref<1x9x128xf32, #tpu.memory_space<vmem>>, vector<1x8x128xf32>,
    %209 = arith.addf %186, %176 : vector<1x128xf32>
    %210 = vector.broadcast %201 : vector<1x1xf32> to vector<1x128xf32>
    %211 = arith.subf %209, %210 : vector<1x128xf32>
    %c0_87 = arith.constant 0 : index
    %c8 = arith.constant 8 : index
    %c0_88 = arith.constant 0 : index
    %212 = vector.load %arg4[%c0_87, %c8, %c0_88] : memref<1x9x128xf32, #tpu.memory_space<vmem>>, vector<1x1x128xf32>
    %213 = vector.shape_cast %212 : vector<1x1x128xf32> to vector<1x128xf32>
    %214 = vector.shape_cast %211 : vector<1x128xf32> to vector<1x1x128xf32>
    tpu.vector_store %arg4[%c0_87, %c8, %c0_88], %214 {strides = array<i32>} : memref<1x9x128xf32, #tpu.memory_space<vmem>>, vector<1x1x128xf32>,
    return
  }
  func.func @transform_0(%arg0: i32) -> (i32, i32, i32) {
    %c0_i32 = arith.constant 0 : i32
    %c0_i32_0 = arith.constant 0 : i32
    %c0_i32_1 = arith.constant 0 : i32
    return %arg0, %c0_i32, %c0_i32_0 : i32, i32, i32
  }
  func.func @transform_1(%arg0: i32) -> (i32, i32) {
    %c0_i32 = arith.constant 0 : i32
    %c0_i32_0 = arith.constant 0 : i32
    %c0_i32_1 = arith.constant 0 : i32
    return %c0_i32, %c0_i32_0 : i32, i32
  }
  func.func @transform_2(%arg0: i32) -> (i32, i32) {
    %c0_i32 = arith.constant 0 : i32
    %c0_i32_0 = arith.constant 0 : i32
    %c0_i32_1 = arith.constant 0 : i32
    return %c0_i32, %c0_i32_0 : i32, i32
  }
  func.func @transform_3(%arg0: i32) -> (i32, i32, i32) {
    %c0_i32 = arith.constant 0 : i32
    %c0_i32_0 = arith.constant 0 : i32
    %c0_i32_1 = arith.constant 0 : i32
    return %arg0, %c0_i32, %c0_i32_0 : i32, i32, i32
  }
}

</mosaic_0001>

<llo_original>
// kernel: forward_batched.1
$region0: #{forward_batched.1}
  #allocation0 [shape = 'u32[]', space=smem, size = 0x4, offset = 0x4, fixed_abs, tag = 'smem constant byte address 0x4 - core index']
  #allocation1 [shape = 'u32[144,128]{1,0:T(1,128)}', space=vmem, size = 0x12000, scoped, tag = 'internal scratch']
  %s0 = inlined_call_operand.vmem [shape: f32[4,8,128], index: 0, kind: input, shape index: {}]
  %s1 = inlined_call_operand.hbm [shape: f32[128,2432], index: 1, kind: input, shape index: {}]
  %s2 = inlined_call_operand.hbm [shape: f32[1,1792], index: 2, kind: input, shape index: {}]
  %s3 = inlined_call_operand.vmem [shape: f32[4,9,128], index: 3, kind: output, shape index: {}]
  %s4 = sld [smem:[#allocation0]]
  $region53: #{forward_batched.1} parent=0
    _
  %s6 = ssub.s32 1, %s4
  %s7 = scalar_select 0, %s6, %s4
  $region1: #{forward_batched.1} parent=0
    #allocation2 [shape = 'u8[1245184]{0}', space=vmem, size = 0x130000, scoped, tag = 'input window, operand 1, single buffered']
    #allocation3 [shape = 's32[2]{0}', space=sflag, size = 0x8, scoped, tag = 'scoped memory for forward_batched.1']
    #allocation4 [shape = 'u8[7168]{0}', space=vmem, size = 0x1c00, scoped, tag = 'input window, operand 2, single buffered']
    #allocation5 [shape = 's32[1]{0}', space=sflag, size = 0x4, scoped, tag = 'scoped memory for forward_batched.1']
    %8 = vsyncpa [#allocation3], 0
    %9 = vsyncpa [#allocation5], 0
    loop: start=0, step=1, limit=6
    $region2: #{forward_batched.1} parent=1 // loop_pre_header
      _
    $region3: #{forward_batched.1} parent=1 // loop_header
      %s11 = sphi 0, %s15
      %p12 = scmp.ge.s32.totalorder %s11, 6
      %s21 = sphi 0, %s23
      %s24 = sphi 0, %s21
      %s25 = sphi 0, %s24
      %s41 = sphi 0, %s25
      %s45 = sphi 0, %s45
      %s47 = sphi 0, %s45
      %s48 = sphi 0, %s47
      %s62 = sphi 0, %s48
      %s66 = sphi 0, %s66
      %s68 = sphi 0, %s66
      %s69 = sphi 0, %s68
      %s83 = sphi 0, %s69
      %s89 = sphi 0, %s91
      %s92 = sphi 0, %s89
      %s93 = sphi 0, %s92
      %s109 = sphi 0, %s93
    $region4: #{forward_batched.1} parent=1 // loop_header_branch
      %14 = sbr.rel (%p12) target = $region8
    $region5: #{forward_batched.1} parent=1 // loop_body
      %s16 = ssub.s32 %s11, 1
      %s17 = ssub.s32 %s11, 2
      %s18 = sadd.s32 %s11, 1
      %s19 = ssub.s32 %s11, %s18
      %p20 = scmp.eq.s32.totalorder %s19, 0
      %s22 = sadd.s32 %s21, 1
      %s23 = scalar_select %p20, %s21, %s22
      %p26 = pneg %p20
      %p27 = scmp.eq.s32.totalorder %s11, 3
      %p28 = por %p26, %p27
      %p29 = scmp.ne.s32.totalorder %s21, %s24
      %p30 = scmp.eq.s32.totalorder %s11, 0
      %p31 = por %p29, %p30
      %p32 = scmp.ne.s32.totalorder %s21, %s24
      %p33 = scmp.eq.s32.totalorder %s16, 3
      %p34 = por %p32, %p33
      %p35 = scmp.ne.s32.totalorder %s24, %s25
      %p36 = scmp.eq.s32.totalorder %s16, 0
      %p37 = por %p35, %p36
      %p38 = scmp.ne.s32.totalorder %s24, %s25
      %p39 = scmp.eq.s32.totalorder %s17, 3
      %p40 = por %p38, %p39
      %p42 = scmp.ne.s32.totalorder %s25, %s41
      %p43 = scmp.eq.s32.totalorder %s17, 0
      %p44 = por %p42, %p43
      %s46 = sadd.s32 %s45, 1
      %p49 = scmp.eq.s32.totalorder %s11, 3
      %p50 = scmp.ne.s32.totalorder %s45, %s47
      %p51 = scmp.eq.s32.totalorder %s11, 0
      %p52 = por %p50, %p51
      %p53 = scmp.ne.s32.totalorder %s45, %s47
      %p54 = scmp.eq.s32.totalorder %s16, 3
      %p55 = por %p53, %p54
      %p56 = scmp.ne.s32.totalorder %s47, %s48
      %p57 = scmp.eq.s32.totalorder %s16, 0
      %p58 = por %p56, %p57
      %p59 = scmp.ne.s32.totalorder %s47, %s48
      %p60 = scmp.eq.s32.totalorder %s17, 3
      %p61 = por %p59, %p60
      %p63 = scmp.ne.s32.totalorder %s48, %s62
      %p64 = scmp.eq.s32.totalorder %s17, 0
      %p65 = por %p63, %p64
      %s67 = sadd.s32 %s66, 1
      %p70 = scmp.eq.s32.totalorder %s11, 3
      %p71 = scmp.ne.s32.totalorder %s66, %s68
      %p72 = scmp.eq.s32.totalorder %s11, 0
      %p73 = por %p71, %p72
      %p74 = scmp.ne.s32.totalorder %s66, %s68
      %p75 = scmp.eq.s32.totalorder %s16, 3
      %p76 = por %p74, %p75
      %p77 = scmp.ne.s32.totalorder %s68, %s69
      %p78 = scmp.eq.s32.totalorder %s16, 0
      %p79 = por %p77, %p78
      %p80 = scmp.ne.s32.totalorder %s68, %s69
      %p81 = scmp.eq.s32.totalorder %s17, 3
      %p82 = por %p80, %p81
      %p84 = scmp.ne.s32.totalorder %s69, %s83
      %p85 = scmp.eq.s32.totalorder %s17, 0
      %p86 = por %p84, %p85
      %s87 = ssub.s32 %s11, %s18
      %p88 = scmp.eq.s32.totalorder %s87, 0
      %s90 = sadd.s32 %s89, 1
      %s91 = scalar_select %p88, %s89, %s90
      %p94 = pneg %p88
      %p95 = scmp.eq.s32.totalorder %s11, 3
      %p96 = por %p94, %p95
      %p97 = scmp.ne.s32.totalorder %s89, %s92
      %p98 = scmp.eq.s32.totalorder %s11, 0
      %p99 = por %p97, %p98
      %p100 = scmp.ne.s32.totalorder %s89, %s92
      %p101 = scmp.eq.s32.totalorder %s16, 3
      %p102 = por %p100, %p101
      %p103 = scmp.ne.s32.totalorder %s92, %s93
      %p104 = scmp.eq.s32.totalorder %s16, 0
      %p105 = por %p103, %p104
      %p106 = scmp.ne.s32.totalorder %s92, %s93
      %p107 = scmp.eq.s32.totalorder %s17, 3
      %p108 = por %p106, %p107
      %p110 = scmp.ne.s32.totalorder %s93, %s109
      %p111 = scmp.eq.s32.totalorder %s17, 0
      %p112 = por %p110, %p111
      %p113 = scmp.le.s32.totalorder 1, %s11
      %p114 = scmp.lt.s32.totalorder %s11, 5
      %p115 = pnand %p113, %p114
      %p116 = pneg %p115
      // Predicated region
      $region9: #{forward_batched.1} parent=5 // pred_check
        _
      $region10: #{forward_batched.1} parent=5 // pred_check_branch
        %118 = sbr.rel (%p115) target = $region12
      $region11: #{forward_batched.1} parent=5 // pred_region
        %s119 = ssub.s32 %s11, 1
        // Predicated region
        $region13: #{forward_batched.1} parent=11 // pred_check
          %p120 = pneg %p58
        $region14: #{forward_batched.1} parent=11 // pred_check_branch
          %122 = sbr.rel (%p120) target = $region16
        $region15: #{forward_batched.1} parent=11 // pred_region
          %s124 = ssub.s32 38912, 38912
          %125 = vsyncadd [#allocation3], %s124
          %s126 = sshll.u32 [#allocation2], 4
          %s127 = int_to_ptr.vmem [resolvable:$true] %s126
          %132 = dma.hbm_to_vmem [thread:$0]  %s1, 38912, %s127, [#allocation3], 2432, 2432, 152
        $region16: #{forward_batched.1} parent=11 // pred_fallthru
          _
        // Predicated region
        $region17: #{forward_batched.1} parent=11 // pred_check
          %p133 = pneg %p79
        $region18: #{forward_batched.1} parent=11 // pred_check_branch
          %135 = sbr.rel (%p133) target = $region20
        $region19: #{forward_batched.1} parent=11 // pred_region
          %s137 = ssub.s32 224, 224
          %138 = vsyncadd [#allocation5], %s137
          %s140 = sshll.u32 [#allocation4], 4
          %s141 = int_to_ptr.vmem [resolvable:$true] %s140
          %143 = dma.hbm_to_vmem [thread:$0]  %s2, 224, %s141, [#allocation5]
        $region20: #{forward_batched.1} parent=11 // pred_fallthru
          _
      $region12: #{forward_batched.1} parent=5 // pred_fallthru
        _
      %p144 = scmp.lt.s32.totalorder %s11, 4
      // Predicated region
      $region21: #{forward_batched.1} parent=5 // pred_check
        %p145 = pneg %p144
      $region22: #{forward_batched.1} parent=5 // pred_check_branch
        %147 = sbr.rel (%p145) target = $region24
      $region23: #{forward_batched.1} parent=5 // pred_region
        // Predicated region
        $region25: #{forward_batched.1} parent=23 // pred_check
          %p148 = pneg %p31
        $region26: #{forward_batched.1} parent=23 // pred_check_branch
          %150 = sbr.rel (%p148) target = $region28
        $region27: #{forward_batched.1} parent=23 // pred_region
          %p151 = scmp.lt.s32.totalorder %s11, 3
          %s152 = scalar_select %p151, %s11, 3
          %s153 = smul.addr %s152, 8
          %s154 = scalar_lea.vmem %s0, %s153
        $region28: #{forward_batched.1} parent=23 // pred_fallthru
          _
      $region24: #{forward_batched.1} parent=5 // pred_fallthru
        _
      %p155 = scmp.le.s32.totalorder 1, %s11
      %p156 = scmp.lt.s32.totalorder %s11, 5
      %p157 = pnand %p155, %p156
      %p158 = pneg %p157
      // Predicated region
      $region29: #{forward_batched.1} parent=5 // pred_check
        _
      $region30: #{forward_batched.1} parent=5 // pred_check_branch
        %160 = sbr.rel (%p157) target = $region32
      $region31: #{forward_batched.1} parent=5 // pred_region
        %s161 = ssub.s32 %s11, 1
        // Predicated region
        $region33: #{forward_batched.1} parent=31 // pred_check
          %p162 = pneg %p58
        $region34: #{forward_batched.1} parent=31 // pred_check_branch
          %164 = sbr.rel (%p162) target = $region36
        $region35: #{forward_batched.1} parent=31 // pred_region
          %165 = dma.done [#allocation3], 38912
        $region36: #{forward_batched.1} parent=31 // pred_fallthru
          _
        // Predicated region
        $region37: #{forward_batched.1} parent=31 // pred_check
          %p166 = pneg %p79
        $region38: #{forward_batched.1} parent=31 // pred_check_branch
          %168 = sbr.rel (%p166) target = $region40
        $region39: #{forward_batched.1} parent=31 // pred_region
          %169 = dma.done [#allocation5], 224
        $region40: #{forward_batched.1} parent=31 // pred_fallthru
          _
        %p170 = scmp.lt.s32.totalorder %s16, 3
        %s171 = scalar_select %p170, %s16, 3
        %s172 = smul.addr %s171, 8
        %s173 = scalar_lea.vmem %s0, %s172
        %p174 = pneg %p37
        %p175 = pneg %p34
        %p176 = pneg %p58
        %p177 = pneg %p55
        %p178 = pneg %p79
        %p179 = pneg %p76
        %p180 = pneg %p105
        %p181 = pneg %p102
        %p182 = scmp.lt.s32.totalorder %s16, 3
        %s183 = scalar_select %p182, %s16, 3
        %s184 = smul.addr %s183, 2
        %s185 = smul.addr %s184, 8
        %s186 = scalar_lea.vmem %s3, %s185
        %p187 = scmp.lt.s32.totalorder %s16, 3
        %s188 = scalar_select %p187, %s16, 3
        %s189 = smul.addr %s188, 8
        %s190 = scalar_lea.vmem %s0, %s189
        %p191 = scmp.lt.s32.totalorder %s16, 3
        %s192 = scalar_select %p191, %s16, 3
        %s193 = smul.addr %s192, 2
        %s194 = smul.addr %s193, 8
        %s195 = scalar_lea.vmem %s3, %s194
        %v196 = vld [vmem:[%s190] sm:$0xff]
        %v197 = vld [vmem:[#allocation2] sm:$0xff]
        %v198 = vld [vmem:[#allocation2 + $0x8] sm:$0xff]
        %v199 = vld [vmem:[#allocation2 + $0x10] sm:$0xff]
        %v200 = vld [vmem:[#allocation2 + $0x98] sm:$0xff]
        %v201 = vld [vmem:[#allocation2 + $0xa0] sm:$0xff]
        %v202 = vld [vmem:[#allocation2 + $0xa8] sm:$0xff]
        %v203 = vld [vmem:[#allocation2 + $0x130] sm:$0xff]
        %v204 = vld [vmem:[#allocation2 + $0x138] sm:$0xff]
        %v205 = vld [vmem:[#allocation2 + $0x140] sm:$0xff]
        %v206 = vld [vmem:[#allocation2 + $0x1c8] sm:$0xff]
        %v207 = vld [vmem:[#allocation2 + $0x1d0] sm:$0xff]
        %v208 = vld [vmem:[#allocation2 + $0x1d8] sm:$0xff]
        %v209 = vld [vmem:[#allocation2 + $0x260] sm:$0xff]
        %v210 = vld [vmem:[#allocation2 + $0x268] sm:$0xff]
        %v211 = vld [vmem:[#allocation2 + $0x270] sm:$0xff]
        %v212 = vld [vmem:[#allocation2 + $0x2f8] sm:$0xff]
        %v213 = vld [vmem:[#allocation2 + $0x300] sm:$0xff]
        %v214 = vld [vmem:[#allocation2 + $0x308] sm:$0xff]
        %v215 = vld [vmem:[#allocation2 + $0x390] sm:$0xff]
        %v216 = vld [vmem:[#allocation2 + $0x398] sm:$0xff]
        %v217 = vld [vmem:[#allocation2 + $0x3a0] sm:$0xff]
        %v218 = vld [vmem:[#allocation2 + $0x428] sm:$0xff]
        %v219 = vld [vmem:[#allocation2 + $0x430] sm:$0xff]
        %v220 = vld [vmem:[#allocation2 + $0x438] sm:$0xff]
        %v221 = vld [vmem:[#allocation2 + $0x4c0] sm:$0xff]
        %v222 = vld [vmem:[#allocation2 + $0x4c8] sm:$0xff]
        %v223 = vld [vmem:[#allocation2 + $0x4d0] sm:$0xff]
        %v224 = vld [vmem:[#allocation2 + $0x558] sm:$0xff]
        %v225 = vld [vmem:[#allocation2 + $0x560] sm:$0xff]
        %v226 = vld [vmem:[#allocation2 + $0x568] sm:$0xff]
        %v227 = vld [vmem:[#allocation2 + $0x5f0] sm:$0xff]
        %v228 = vld [vmem:[#allocation2 + $0x5f8] sm:$0xff]
        %v229 = vld [vmem:[#allocation2 + $0x600] sm:$0xff]
        %v230 = vld [vmem:[#allocation2 + $0x688] sm:$0xff]
        %v231 = vld [vmem:[#allocation2 + $0x690] sm:$0xff]
        %v232 = vld [vmem:[#allocation2 + $0x698] sm:$0xff]
        %v233 = vld [vmem:[#allocation2 + $0x720] sm:$0xff]
        %v234 = vld [vmem:[#allocation2 + $0x728] sm:$0xff]
        %v235 = vld [vmem:[#allocation2 + $0x730] sm:$0xff]
        %v236 = vld [vmem:[#allocation2 + $0x7b8] sm:$0xff]
        %v237 = vld [vmem:[#allocation2 + $0x7c0] sm:$0xff]
        %v238 = vld [vmem:[#allocation2 + $0x7c8] sm:$0xff]
        %v239 = vld [vmem:[#allocation2 + $0x850] sm:$0xff]
        %v240 = vld [vmem:[#allocation2 + $0x858] sm:$0xff]
        %v241 = vld [vmem:[#allocation2 + $0x860] sm:$0xff]
        %v242 = vld [vmem:[#allocation2 + $0x8e8] sm:$0xff]
        %v243 = vld [vmem:[#allocation2 + $0x8f0] sm:$0xff]
        %v244 = vld [vmem:[#allocation2 + $0x8f8] sm:$0xff]
        %v245 = vld [vmem:[#allocation4] sm:$0x7]
        %v247 = vlaneseq
        %v248 = vshrl.u32 %v247, 7
        %v249 = vsub.s32 0, %v248
        %v250 = vrot.slane %v245, %v249
        %v251 = vlaneseq
        %v252 = vshrl.u32 %v251, 7
        %v253 = vsub.s32 1, %v252
        %v254 = vrot.slane %v245, %v253
        %v255 = vlaneseq
        %v256 = vshrl.u32 %v255, 7
        %v257 = vsub.s32 2, %v256
        %v258 = vrot.slane %v245, %v257
        %262 = vmatprep.subr.mxu0 %v243
        %263 = vmatpush1.msra.mxu0 %v242
        %264 = vmatprep.subr.mxu0 %v240
        %265 = vmatpush1.msra.mxu0 %v239
        %266 = vmatprep.subr.mxu0 %v237
        %267 = vmatpush1.msra.mxu0 %v236
        %268 = vmatprep.subr.mxu0 %v234
        %269 = vmatpush1.msra.mxu0 %v233
        %270 = vmatprep.subr.mxu0 %v231
        %271 = vmatpush1.msra.mxu0 %v230
        %272 = vmatprep.subr.mxu0 %v228
        %273 = vmatpush1.msra.mxu0 %v227
        %274 = vmatprep.subr.mxu0 %v225
        %275 = vmatpush1.msra.mxu0 %v224
        %276 = vmatprep.subr.mxu0 %v222
        %277 = vmatpush1.msra.mxu0 %v221
        %278 = vmatprep.subr.mxu0 %v219
        %279 = vmatpush1.msra.mxu0 %v218
        %280 = vmatprep.subr.mxu0 %v216
        %281 = vmatpush1.msra.mxu0 %v215
        %282 = vmatprep.subr.mxu0 %v213
        %283 = vmatpush1.msra.mxu0 %v212
        %284 = vmatprep.subr.mxu0 %v210
        %285 = vmatpush1.msra.mxu0 %v209
        %286 = vmatprep.subr.mxu0 %v207
        %287 = vmatpush1.msra.mxu0 %v206
        %288 = vmatprep.subr.mxu0 %v204
        %289 = vmatpush1.msra.mxu0 %v203
        %290 = vmatprep.subr.mxu0 %v201
        %291 = vmatpush1.msra.mxu0 %v200
        %292 = vmatprep.subr.mxu0 %v198
        %293 = vmatpush1.msra.mxu0 %v197
        %294 = vmatprep.subr.mxu0 0.0
        %295 = vmatpush2.msra.mxu0 0.0
        %296 = vmatprep.subr.mxu0 0.0
        %297 = vmatpush2.msra.mxu0 0.0
        %298 = vmatprep.subr.mxu0 0.0
        %299 = vmatpush2.msra.mxu0 0.0
        %300 = vmatprep.subr.mxu0 0.0
        %301 = vmatpush2.msra.mxu0 0.0
        %302 = vmatprep.subr.mxu0 0.0
        %303 = vmatpush2.msra.mxu0 0.0
        %304 = vmatprep.subr.mxu0 0.0
        %305 = vmatpush2.msra.mxu0 0.0
        %306 = vmatprep.subr.mxu0 0.0
        %307 = vmatpush2.msra.mxu0 0.0
        %308 = vmatprep.subr.mxu0 0.0
        %309 = vmatpush2.msra.mxu0 0.0
        %310 = vmatprep.subr.mxu0 0.0
        %311 = vmatpush2.msra.mxu0 0.0
        %312 = vmatprep.subr.mxu0 0.0
        %313 = vmatpush2.msra.mxu0 0.0
        %314 = vmatprep.subr.mxu0 0.0
        %315 = vmatpush2.msra.mxu0 0.0
        %316 = vmatprep.subr.mxu0 0.0
        %317 = vmatpush2.msra.mxu0 0.0
        %318 = vmatprep.subr.mxu0 0.0
        %319 = vmatpush2.msra.mxu0 0.0
        %320 = vmatprep.subr.mxu0 0.0
        %321 = vmatpush2.msra.mxu0 0.0
        %322 = vmatprep.subr.mxu0 0.0
        %323 = vmatpush2.msra.mxu0 0.0
        %324 = vmatprep.subr.mxu0 0.0
        %325 = vmatpush2.msra.mxu0 0.0
        %326 = vmatprep.mubr.f32.mxu0 0.0
        %327 = vmatmul.mubr.f32.gmra.mxu0 %v196
        %v328 = vpop.f32.mrf.mxu0
        %v329 = vadd.f32 %v250, %v328
        %v330 = vpop.f32.mrf.mxu0
        %v331 = vadd.f32 %v254, %v330
        %332 = vdwg.mxu0
        %333 = vmatprep.subr.mxu0 0.0
        %334 = vmatpush1.msra.mxu0 %v244
        %335 = vmatprep.subr.mxu0 0.0
        %336 = vmatpush1.msra.mxu0 %v241
        %337 = vmatprep.subr.mxu0 0.0
        %338 = vmatpush1.msra.mxu0 %v238
        %339 = vmatprep.subr.mxu0 0.0
        %340 = vmatpush1.msra.mxu0 %v235
        %341 = vmatprep.subr.mxu0 0.0
        %342 = vmatpush1.msra.mxu0 %v232
        %343 = vmatprep.subr.mxu0 0.0
        %344 = vmatpush1.msra.mxu0 %v229
        %345 = vmatprep.subr.mxu0 0.0
        %346 = vmatpush1.msra.mxu0 %v226
        %347 = vmatprep.subr.mxu0 0.0
        %348 = vmatpush1.msra.mxu0 %v223
        %349 = vmatprep.subr.mxu0 0.0
        %350 = vmatpush1.msra.mxu0 %v220
        %351 = vmatprep.subr.mxu0 0.0
        %352 = vmatpush1.msra.mxu0 %v217
        %353 = vmatprep.subr.mxu0 0.0
        %354 = vmatpush1.msra.mxu0 %v214
        %355 = vmatprep.subr.mxu0 0.0
        %356 = vmatpush1.msra.mxu0 %v211
        %357 = vmatprep.subr.mxu0 0.0
        %358 = vmatpush1.msra.mxu0 %v208
        %359 = vmatprep.subr.mxu0 0.0
        %360 = vmatpush1.msra.mxu0 %v205
        %361 = vmatprep.subr.mxu0 0.0
        %362 = vmatpush1.msra.mxu0 %v202
        %363 = vmatprep.subr.mxu0 0.0
        %364 = vmatpush1.msra.mxu0 %v199
        %365 = vmatprep.subr.mxu0 0.0
        %366 = vmatpush2.msra.mxu0 0.0
        %367 = vmatprep.subr.mxu0 0.0
        %368 = vmatpush2.msra.mxu0 0.0
        %369 = vmatprep.subr.mxu0 0.0
        %370 = vmatpush2.msra.mxu0 0.0
        %371 = vmatprep.subr.mxu0 0.0
        %372 = vmatpush2.msra.mxu0 0.0
        %373 = vmatprep.subr.mxu0 0.0
        %374 = vmatpush2.msra.mxu0 0.0
        %375 = vmatprep.subr.mxu0 0.0
        %376 = vmatpush2.msra.mxu0 0.0
        %377 = vmatprep.subr.mxu0 0.0
        %378 = vmatpush2.msra.mxu0 0.0
        %379 = vmatprep.subr.mxu0 0.0
        %380 = vmatpush2.msra.mxu0 0.0
        %381 = vmatprep.subr.mxu0 0.0
        %382 = vmatpush2.msra.mxu0 0.0
        %383 = vmatprep.subr.mxu0 0.0
        %384 = vmatpush2.msra.mxu0 0.0
        %385 = vmatprep.subr.mxu0 0.0
        %386 = vmatpush2.msra.mxu0 0.0
        %387 = vmatprep.subr.mxu0 0.0
        %388 = vmatpush2.msra.mxu0 0.0
        %389 = vmatprep.subr.mxu0 0.0
        %390 = vmatpush2.msra.mxu0 0.0
        %391 = vmatprep.subr.mxu0 0.0
        %392 = vmatpush2.msra.mxu0 0.0
        %393 = vmatprep.subr.mxu0 0.0
        %394 = vmatpush2.msra.mxu0 0.0
        %395 = vmatprep.subr.mxu0 0.0
        %396 = vmatpush2.msra.mxu0 0.0
        %397 = vmatprep.mubr.f32.mxu0 0.0
        %398 = vmatmul.mubr.f32.gmra.mxu0 %v196
        %v399 = vpop.f32.mrf.mxu0
        %v400 = vadd.f32 %v258, %v399
        %v401 = vpop.f32.mrf.mxu0
        %402 = vdwg.mxu0
        %v403 = vmax.f32 %v329, 0.0
        %v404 = vmax.f32 %v331, 0.0
        %v405 = vmax.f32 %v400, 0.0
        %v406 = vld [vmem:[#allocation2 + $0x18] sm:$0xff]
        %v407 = vld [vmem:[#allocation2 + $0xb0] sm:$0xff]
        %v408 = vld [vmem:[#allocation2 + $0x148] sm:$0xff]
        %v409 = vld [vmem:[#allocation2 + $0x1e0] sm:$0xff]
        %v410 = vld [vmem:[#allocation2 + $0x278] sm:$0xff]
        %v411 = vld [vmem:[#allocation2 + $0x310] sm:$0xff]
        %v412 = vld [vmem:[#allocation2 + $0x3a8] sm:$0xff]
        %v413 = vld [vmem:[#allocation2 + $0x440] sm:$0xff]
        %v414 = vld [vmem:[#allocation2 + $0x4d8] sm:$0xff]
        %v415 = vld [vmem:[#allocation2 + $0x570] sm:$0xff]
        %v416 = vld [vmem:[#allocation2 + $0x608] sm:$0xff]
        %v417 = vld [vmem:[#allocation2 + $0x6a0] sm:$0xff]
        %v418 = vld [vmem:[#allocation2 + $0x738] sm:$0xff]
        %v419 = vld [vmem:[#allocation2 + $0x7d0] sm:$0xff]
        %v420 = vld [vmem:[#allocation2 + $0x868] sm:$0xff]
        %v421 = vld [vmem:[#allocation2 + $0x900] sm:$0xff]
        %v422 = vld [vmem:[#allocation4 + $0x3] sm:$0x1]
        %v424 = vlaneseq
        %v425 = vshrl.u32 %v424, 7
        %v426 = vsub.s32 0, %v425
        %v427 = vrot.slane %v422, %v426
        %429 = vmatprep.subr.mxu0 0.0
        %430 = vmatpush1.msra.mxu0 %v421
        %431 = vmatprep.subr.mxu0 0.0
        %432 = vmatpush1.msra.mxu0 %v420
        %433 = vmatprep.subr.mxu0 0.0
        %434 = vmatpush1.msra.mxu0 %v419
        %435 = vmatprep.subr.mxu0 0.0
        %436 = vmatpush1.msra.mxu0 %v418
        %437 = vmatprep.subr.mxu0 0.0
        %438 = vmatpush1.msra.mxu0 %v417
        %439 = vmatprep.subr.mxu0 0.0
        %440 = vmatpush1.msra.mxu0 %v416
        %441 = vmatprep.subr.mxu0 0.0
        %442 = vmatpush1.msra.mxu0 %v415
        %443 = vmatprep.subr.mxu0 0.0
        %444 = vmatpush1.msra.mxu0 %v414
        %445 = vmatprep.subr.mxu0 0.0
        %446 = vmatpush1.msra.mxu0 %v413
        %447 = vmatprep.subr.mxu0 0.0
        %448 = vmatpush1.msra.mxu0 %v412
        %449 = vmatprep.subr.mxu0 0.0
        %450 = vmatpush1.msra.mxu0 %v411
        %451 = vmatprep.subr.mxu0 0.0
        %452 = vmatpush1.msra.mxu0 %v410
        %453 = vmatprep.subr.mxu0 0.0
        %454 = vmatpush1.msra.mxu0 %v409
        %455 = vmatprep.subr.mxu0 0.0
        %456 = vmatpush1.msra.mxu0 %v408
        %457 = vmatprep.subr.mxu0 0.0
        %458 = vmatpush1.msra.mxu0 %v407
        %459 = vmatprep.subr.mxu0 0.0
        %460 = vmatpush1.msra.mxu0 %v406
        %461 = vmatprep.subr.mxu0 0.0
        %462 = vmatpush2.msra.mxu0 0.0
        %463 = vmatprep.subr.mxu0 0.0
        %464 = vmatpush2.msra.mxu0 0.0
        %465 = vmatprep.subr.mxu0 0.0
        %466 = vmatpush2.msra.mxu0 0.0
        %467 = vmatprep.subr.mxu0 0.0
        %468 = vmatpush2.msra.mxu0 0.0
        %469 = vmatprep.subr.mxu0 0.0
        %470 = vmatpush2.msra.mxu0 0.0
        %471 = vmatprep.subr.mxu0 0.0
        %472 = vmatpush2.msra.mxu0 0.0
        %473 = vmatprep.subr.mxu0 0.0
        %474 = vmatpush2.msra.mxu0 0.0
        %475 = vmatprep.subr.mxu0 0.0
        %476 = vmatpush2.msra.mxu0 0.0
        %477 = vmatprep.subr.mxu0 0.0
        %478 = vmatpush2.msra.mxu0 0.0
        %479 = vmatprep.subr.mxu0 0.0
        %480 = vmatpush2.msra.mxu0 0.0
        %481 = vmatprep.subr.mxu0 0.0
        %482 = vmatpush2.msra.mxu0 0.0
        %483 = vmatprep.subr.mxu0 0.0
        %484 = vmatpush2.msra.mxu0 0.0
        %485 = vmatprep.subr.mxu0 0.0
        %486 = vmatpush2.msra.mxu0 0.0
        %487 = vmatprep.subr.mxu0 0.0
        %488 = vmatpush2.msra.mxu0 0.0
        %489 = vmatprep.subr.mxu0 0.0
        %490 = vmatpush2.msra.mxu0 0.0
        %491 = vmatprep.subr.mxu0 0.0
        %492 = vmatpush2.msra.mxu0 0.0
        %493 = vmatprep.mubr.f32.mxu0 0.0
        %494 = vmatmul.mubr.f32.gmra.mxu0 %v403
        %v495 = vpop.f32.mrf.mxu0
        %v496 = vadd.f32 %v427, %v495
        %v497 = vpop.f32.mrf.mxu0
        %498 = vdwg.mxu0
        %v499 = vld [vmem:[#allocation2 + $0x20] sm:$0xff]
        %v500 = vld [vmem:[#allocation2 + $0xb8] sm:$0xff]
        %v501 = vld [vmem:[#allocation2 + $0x150] sm:$0xff]
        %v502 = vld [vmem:[#allocation2 + $0x1e8] sm:$0xff]
        %v503 = vld [vmem:[#allocation2 + $0x280] sm:$0xff]
        %v504 = vld [vmem:[#allocation2 + $0x318] sm:$0xff]
        %v505 = vld [vmem:[#allocation2 + $0x3b0] sm:$0xff]
        %v506 = vld [vmem:[#allocation2 + $0x448] sm:$0xff]
        %v507 = vld [vmem:[#allocation2 + $0x4e0] sm:$0xff]
        %v508 = vld [vmem:[#allocation2 + $0x578] sm:$0xff]
        %v509 = vld [vmem:[#allocation2 + $0x610] sm:$0xff]
        %v510 = vld [vmem:[#allocation2 + $0x6a8] sm:$0xff]
        %v511 = vld [vmem:[#allocation2 + $0x740] sm:$0xff]
        %v512 = vld [vmem:[#allocation2 + $0x7d8] sm:$0xff]
        %v513 = vld [vmem:[#allocation2 + $0x870] sm:$0xff]
        %v514 = vld [vmem:[#allocation2 + $0x908] sm:$0xff]
        %v515 = vld [vmem:[#allocation4 + $0x4] sm:$0x1]
        %v517 = vlaneseq
        %v518 = vshrl.u32 %v517, 7
        %v519 = vsub.s32 0, %v518
        %v520 = vrot.slane %v515, %v519
        %522 = vmatprep.subr.mxu0 0.0
        %523 = vmatpush1.msra.mxu0 %v514
        %524 = vmatprep.subr.mxu0 0.0
        %525 = vmatpush1.msra.mxu0 %v513
        %526 = vmatprep.subr.mxu0 0.0
        %527 = vmatpush1.msra.mxu0 %v512
        %528 = vmatprep.subr.mxu0 0.0
        %529 = vmatpush1.msra.mxu0 %v511
        %530 = vmatprep.subr.mxu0 0.0
        %531 = vmatpush1.msra.mxu0 %v510
        %532 = vmatprep.subr.mxu0 0.0
        %533 = vmatpush1.msra.mxu0 %v509
        %534 = vmatprep.subr.mxu0 0.0
        %535 = vmatpush1.msra.mxu0 %v508
        %536 = vmatprep.subr.mxu0 0.0
        %537 = vmatpush1.msra.mxu0 %v507
        %538 = vmatprep.subr.mxu0 0.0
        %539 = vmatpush1.msra.mxu0 %v506
        %540 = vmatprep.subr.mxu0 0.0
        %541 = vmatpush1.msra.mxu0 %v505
        %542 = vmatprep.subr.mxu0 0.0
        %543 = vmatpush1.msra.mxu0 %v504
        %544 = vmatprep.subr.mxu0 0.0
        %545 = vmatpush1.msra.mxu0 %v503
        %546 = vmatprep.subr.mxu0 0.0
        %547 = vmatpush1.msra.mxu0 %v502
        %548 = vmatprep.subr.mxu0 0.0
        %549 = vmatpush1.msra.mxu0 %v501
        %550 = vmatprep.subr.mxu0 0.0
        %551 = vmatpush1.msra.mxu0 %v500
        %552 = vmatprep.subr.mxu0 0.0
        %553 = vmatpush1.msra.mxu0 %v499
        %554 = vmatprep.subr.mxu0 0.0
        %555 = vmatpush2.msra.mxu0 0.0
        %556 = vmatprep.subr.mxu0 0.0
        %557 = vmatpush2.msra.mxu0 0.0
        %558 = vmatprep.subr.mxu0 0.0
        %559 = vmatpush2.msra.mxu0 0.0
        %560 = vmatprep.subr.mxu0 0.0
        %561 = vmatpush2.msra.mxu0 0.0
        %562 = vmatprep.subr.mxu0 0.0
        %563 = vmatpush2.msra.mxu0 0.0
        %564 = vmatprep.subr.mxu0 0.0
        %565 = vmatpush2.msra.mxu0 0.0
        %566 = vmatprep.subr.mxu0 0.0
        %567 = vmatpush2.msra.mxu0 0.0
        %568 = vmatprep.subr.mxu0 0.0
        %569 = vmatpush2.msra.mxu0 0.0
        %570 = vmatprep.subr.mxu0 0.0
        %571 = vmatpush2.msra.mxu0 0.0
        %572 = vmatprep.subr.mxu0 0.0
        %573 = vmatpush2.msra.mxu0 0.0
        %574 = vmatprep.subr.mxu0 0.0
        %575 = vmatpush2.msra.mxu0 0.0
        %576 = vmatprep.subr.mxu0 0.0
        %577 = vmatpush2.msra.mxu0 0.0
        %578 = vmatprep.subr.mxu0 0.0
        %579 = vmatpush2.msra.mxu0 0.0
        %580 = vmatprep.subr.mxu0 0.0
        %581 = vmatpush2.msra.mxu0 0.0
        %582 = vmatprep.subr.mxu0 0.0
        %583 = vmatpush2.msra.mxu0 0.0
        %584 = vmatprep.subr.mxu0 0.0
        %585 = vmatpush2.msra.mxu0 0.0
        %586 = vmatprep.mubr.f32.mxu0 0.0
        %587 = vmatmul.mubr.f32.gmra.mxu0 %v404
        %v588 = vpop.f32.mrf.mxu0
        %v589 = vadd.f32 %v520, %v588
        %v590 = vpop.f32.mrf.mxu0
        %591 = vdwg.mxu0
        %v592 = vld [vmem:[#allocation2 + $0x28] sm:$0xff]
        %v593 = vld [vmem:[#allocation2 + $0xc0] sm:$0xff]
        %v594 = vld [vmem:[#allocation2 + $0x158] sm:$0xff]
        %v595 = vld [vmem:[#allocation2 + $0x1f0] sm:$0xff]
        %v596 = vld [vmem:[#allocation2 + $0x288] sm:$0xff]
        %v597 = vld [vmem:[#allocation2 + $0x320] sm:$0xff]
        %v598 = vld [vmem:[#allocation2 + $0x3b8] sm:$0xff]
        %v599 = vld [vmem:[#allocation2 + $0x450] sm:$0xff]
        %v600 = vld [vmem:[#allocation2 + $0x4e8] sm:$0xff]
        %v601 = vld [vmem:[#allocation2 + $0x580] sm:$0xff]
        %v602 = vld [vmem:[#allocation2 + $0x618] sm:$0xff]
        %v603 = vld [vmem:[#allocation2 + $0x6b0] sm:$0xff]
        %v604 = vld [vmem:[#allocation2 + $0x748] sm:$0xff]
        %v605 = vld [vmem:[#allocation2 + $0x7e0] sm:$0xff]
        %v606 = vld [vmem:[#allocation2 + $0x878] sm:$0xff]
        %v607 = vld [vmem:[#allocation2 + $0x910] sm:$0xff]
        %v608 = vld [vmem:[#allocation4 + $0x5] sm:$0x1]
        %v610 = vlaneseq
        %v611 = vshrl.u32 %v610, 7
        %v612 = vsub.s32 0, %v611
        %v613 = vrot.slane %v608, %v612
        %615 = vmatprep.subr.mxu0 0.0
        %616 = vmatpush1.msra.mxu0 %v607
        %617 = vmatprep.subr.mxu0 0.0
        %618 = vmatpush1.msra.mxu0 %v606
        %619 = vmatprep.subr.mxu0 0.0
        %620 = vmatpush1.msra.mxu0 %v605
        %621 = vmatprep.subr.mxu0 0.0
        %622 = vmatpush1.msra.mxu0 %v604
        %623 = vmatprep.subr.mxu0 0.0
        %624 = vmatpush1.msra.mxu0 %v603
        %625 = vmatprep.subr.mxu0 0.0
        %626 = vmatpush1.msra.mxu0 %v602
        %627 = vmatprep.subr.mxu0 0.0
        %628 = vmatpush1.msra.mxu0 %v601
        %629 = vmatprep.subr.mxu0 0.0
        %630 = vmatpush1.msra.mxu0 %v600
        %631 = vmatprep.subr.mxu0 0.0
        %632 = vmatpush1.msra.mxu0 %v599
        %633 = vmatprep.subr.mxu0 0.0
        %634 = vmatpush1.msra.mxu0 %v598
        %635 = vmatprep.subr.mxu0 0.0
        %636 = vmatpush1.msra.mxu0 %v597
        %637 = vmatprep.subr.mxu0 0.0
        %638 = vmatpush1.msra.mxu0 %v596
        %639 = vmatprep.subr.mxu0 0.0
        %640 = vmatpush1.msra.mxu0 %v595
        %641 = vmatprep.subr.mxu0 0.0
        %642 = vmatpush1.msra.mxu0 %v594
        %643 = vmatprep.subr.mxu0 0.0
        %644 = vmatpush1.msra.mxu0 %v593
        %645 = vmatprep.subr.mxu0 0.0
        %646 = vmatpush1.msra.mxu0 %v592
        %647 = vmatprep.subr.mxu0 0.0
        %648 = vmatpush2.msra.mxu0 0.0
        %649 = vmatprep.subr.mxu0 0.0
        %650 = vmatpush2.msra.mxu0 0.0
        %651 = vmatprep.subr.mxu0 0.0
        %652 = vmatpush2.msra.mxu0 0.0
        %653 = vmatprep.subr.mxu0 0.0
        %654 = vmatpush2.msra.mxu0 0.0
        %655 = vmatprep.subr.mxu0 0.0
        %656 = vmatpush2.msra.mxu0 0.0
        %657 = vmatprep.subr.mxu0 0.0
        %658 = vmatpush2.msra.mxu0 0.0
        %659 = vmatprep.subr.mxu0 0.0
        %660 = vmatpush2.msra.mxu0 0.0
        %661 = vmatprep.subr.mxu0 0.0
        %662 = vmatpush2.msra.mxu0 0.0
        %663 = vmatprep.subr.mxu0 0.0
        %664 = vmatpush2.msra.mxu0 0.0
        %665 = vmatprep.subr.mxu0 0.0
        %666 = vmatpush2.msra.mxu0 0.0
        %667 = vmatprep.subr.mxu0 0.0
        %668 = vmatpush2.msra.mxu0 0.0
        %669 = vmatprep.subr.mxu0 0.0
        %670 = vmatpush2.msra.mxu0 0.0
        %671 = vmatprep.subr.mxu0 0.0
        %672 = vmatpush2.msra.mxu0 0.0
        %673 = vmatprep.subr.mxu0 0.0
        %674 = vmatpush2.msra.mxu0 0.0
        %675 = vmatprep.subr.mxu0 0.0
        %676 = vmatpush2.msra.mxu0 0.0
        %677 = vmatprep.subr.mxu0 0.0
        %678 = vmatpush2.msra.mxu0 0.0
        %679 = vmatprep.mubr.f32.mxu0 0.0
        %680 = vmatmul.mubr.f32.gmra.mxu0 %v405
        %v681 = vpop.f32.mrf.mxu0
        %v682 = vadd.f32 %v613, %v681
        %v683 = vpop.f32.mrf.mxu0
        %684 = vdwg.mxu0
        %v685 = vlaneseq
        %v686 = vshrl.u32 %v685, 7
        %vm687 = vcmp.eq.s32.totalorder %v686, 0
        %v688 = vsel %vm687, 1, 0
        %v689 = vcvt.s32.f32 %v688
        %vm690 = vcmp.ge.s32.totalorder %v686, 1
        %vm691 = vcmp.lt.s32.totalorder %v686, 4
        %vm692 = vmand %vm690, %vm691
        %v693 = vsel %vm692, 1, 0
        %v694 = vcvt.s32.f32 %v693
        %vm695 = vcmp.ge.s32.totalorder %v686, 4
        %vm696 = vcmp.lt.s32.totalorder %v686, 6
        %vm697 = vmand %vm695, %vm696
        %v698 = vsel %vm697, 1, 0
        %v699 = vcvt.s32.f32 %v698
        %vm700 = vcmp.ge.s32.totalorder %v686, 6
        %v701 = vsel %vm700, 1, 0
        %v702 = vcvt.s32.f32 %v701
        %v703 = vld [vmem:[#allocation4 + $0x6] sm:$0x1]
        %v705 = vlaneseq
        %v706 = vshrl.u32 %v705, 7
        %v707 = vsub.s32 0, %v706
        %v708 = vrot.slane %v703, %v707
        %v710 = vmul.f32 %v689, %v708
        %v711 = vmul.f32 %v694, %v496
        %v712 = vadd.f32 %v710, %v711
        %v713 = vmul.f32 %v699, %v589
        %v714 = vadd.f32 %v712, %v713
        %v715 = vmul.f32 %v702, %v682
        %v716 = vadd.f32 %v714, %v715
        %v717 = vld [vmem:[#allocation2 + $0x30] sm:$0xff]
        %v718 = vld [vmem:[#allocation2 + $0x38] sm:$0xff]
        %v719 = vld [vmem:[#allocation2 + $0x40] sm:$0xff]
        %v720 = vld [vmem:[#allocation2 + $0x48] sm:$0xff]
        %v721 = vld [vmem:[#allocation2 + $0x50] sm:$0xff]
        %v722 = vld [vmem:[#allocation2 + $0x58] sm:$0xff]
        %v723 = vld [vmem:[#allocation2 + $0xc8] sm:$0xff]
        %v724 = vld [vmem:[#allocation2 + $0xd0] sm:$0xff]
        %v725 = vld [vmem:[#allocation2 + $0xd8] sm:$0xff]
        %v726 = vld [vmem:[#allocation2 + $0xe0] sm:$0xff]
        %v727 = vld [vmem:[#allocation2 + $0xe8] sm:$0xff]
        %v728 = vld [vmem:[#allocation2 + $0xf0] sm:$0xff]
        %v729 = vld [vmem:[#allocation2 + $0x160] sm:$0xff]
        %v730 = vld [vmem:[#allocation2 + $0x168] sm:$0xff]
        %v731 = vld [vmem:[#allocation2 + $0x170] sm:$0xff]
        %v732 = vld [vmem:[#allocation2 + $0x178] sm:$0xff]
        %v733 = vld [vmem:[#allocation2 + $0x180] sm:$0xff]
        %v734 = vld [vmem:[#allocation2 + $0x188] sm:$0xff]
        %v735 = vld [vmem:[#allocation2 + $0x1f8] sm:$0xff]
        %v736 = vld [vmem:[#allocation2 + $0x200] sm:$0xff]
        %v737 = vld [vmem:[#allocation2 + $0x208] sm:$0xff]
        %v738 = vld [vmem:[#allocation2 + $0x210] sm:$0xff]
        %v739 = vld [vmem:[#allocation2 + $0x218] sm:$0xff]
        %v740 = vld [vmem:[#allocation2 + $0x220] sm:$0xff]
        %v741 = vld [vmem:[#allocation2 + $0x290] sm:$0xff]
        %v742 = vld [vmem:[#allocation2 + $0x298] sm:$0xff]
        %v743 = vld [vmem:[#allocation2 + $0x2a0] sm:$0xff]
        %v744 = vld [vmem:[#allocation2 + $0x2a8] sm:$0xff]
        %v745 = vld [vmem:[#allocation2 + $0x2b0] sm:$0xff]
        %v746 = vld [vmem:[#allocation2 + $0x2b8] sm:$0xff]
        %v747 = vld [vmem:[#allocation2 + $0x328] sm:$0xff]
        %v748 = vld [vmem:[#allocation2 + $0x330] sm:$0xff]
        %v749 = vld [vmem:[#allocation2 + $0x338] sm:$0xff]
        %v750 = vld [vmem:[#allocation2 + $0x340] sm:$0xff]
        %v751 = vld [vmem:[#allocation2 + $0x348] sm:$0xff]
        %v752 = vld [vmem:[#allocation2 + $0x350] sm:$0xff]
        %v753 = vld [vmem:[#allocation2 + $0x3c0] sm:$0xff]
        %v754 = vld [vmem:[#allocation2 + $0x3c8] sm:$0xff]
        %v755 = vld [vmem:[#allocation2 + $0x3d0] sm:$0xff]
        %v756 = vld [vmem:[#allocation2 + $0x3d8] sm:$0xff]
        %v757 = vld [vmem:[#allocation2 + $0x3e0] sm:$0xff]
        %v758 = vld [vmem:[#allocation2 + $0x3e8] sm:$0xff]
        %v759 = vld [vmem:[#allocation2 + $0x458] sm:$0xff]
        %v760 = vld [vmem:[#allocation2 + $0x460] sm:$0xff]
        %v761 = vld [vmem:[#allocation2 + $0x468] sm:$0xff]
        %v762 = vld [vmem:[#allocation2 + $0x470] sm:$0xff]
        %v763 = vld [vmem:[#allocation2 + $0x478] sm:$0xff]
        %v764 = vld [vmem:[#allocation2 + $0x480] sm:$0xff]
        %v765 = vld [vmem:[#allocation2 + $0x4f0] sm:$0xff]
        %v766 = vld [vmem:[#allocation2 + $0x4f8] sm:$0xff]
        %v767 = vld [vmem:[#allocation2 + $0x500] sm:$0xff]
        %v768 = vld [vmem:[#allocation2 + $0x508] sm:$0xff]
        %v769 = vld [vmem:[#allocation2 + $0x510] sm:$0xff]
        %v770 = vld [vmem:[#allocation2 + $0x518] sm:$0xff]
        %v771 = vld [vmem:[#allocation2 + $0x588] sm:$0xff]
        %v772 = vld [vmem:[#allocation2 + $0x590] sm:$0xff]
        %v773 = vld [vmem:[#allocation2 + $0x598] sm:$0xff]
        %v774 = vld [vmem:[#allocation2 + $0x5a0] sm:$0xff]
        %v775 = vld [vmem:[#allocation2 + $0x5a8] sm:$0xff]
        %v776 = vld [vmem:[#allocation2 + $0x5b0] sm:$0xff]
        %v777 = vld [vmem:[#allocation2 + $0x620] sm:$0xff]
        %v778 = vld [vmem:[#allocation2 + $0x628] sm:$0xff]
        %v779 = vld [vmem:[#allocation2 + $0x630] sm:$0xff]
        %v780 = vld [vmem:[#allocation2 + $0x638] sm:$0xff]
        %v781 = vld [vmem:[#allocation2 + $0x640] sm:$0xff]
        %v782 = vld [vmem:[#allocation2 + $0x648] sm:$0xff]
        %v783 = vld [vmem:[#allocation2 + $0x6b8] sm:$0xff]
        %v784 = vld [vmem:[#allocation2 + $0x6c0] sm:$0xff]
        %v785 = vld [vmem:[#allocation2 + $0x6c8] sm:$0xff]
        %v786 = vld [vmem:[#allocation2 + $0x6d0] sm:$0xff]
        %v787 = vld [vmem:[#allocation2 + $0x6d8] sm:$0xff]
        %v788 = vld [vmem:[#allocation2 + $0x6e0] sm:$0xff]
        %v789 = vld [vmem:[#allocation2 + $0x750] sm:$0xff]
        %v790 = vld [vmem:[#allocation2 + $0x758] sm:$0xff]
        %v791 = vld [vmem:[#allocation2 + $0x760] sm:$0xff]
        %v792 = vld [vmem:[#allocation2 + $0x768] sm:$0xff]
        %v793 = vld [vmem:[#allocation2 + $0x770] sm:$0xff]
        %v794 = vld [vmem:[#allocation2 + $0x778] sm:$0xff]
        %v795 = vld [vmem:[#allocation2 + $0x7e8] sm:$0xff]
        %v796 = vld [vmem:[#allocation2 + $0x7f0] sm:$0xff]
        %v797 = vld [vmem:[#allocation2 + $0x7f8] sm:$0xff]
        %v798 = vld [vmem:[#allocation2 + $0x800] sm:$0xff]
        %v799 = vld [vmem:[#allocation2 + $0x808] sm:$0xff]
        %v800 = vld [vmem:[#allocation2 + $0x810] sm:$0xff]
        %v801 = vld [vmem:[#allocation2 + $0x880] sm:$0xff]
        %v802 = vld [vmem:[#allocation2 + $0x888] sm:$0xff]
        %v803 = vld [vmem:[#allocation2 + $0x890] sm:$0xff]
        %v804 = vld [vmem:[#allocation2 + $0x898] sm:$0xff]
        %v805 = vld [vmem:[#allocation2 + $0x8a0] sm:$0xff]
        %v806 = vld [vmem:[#allocation2 + $0x8a8] sm:$0xff]
        %v807 = vld [vmem:[#allocation2 + $0x918] sm:$0xff]
        %v808 = vld [vmem:[#allocation2 + $0x920] sm:$0xff]
        %v809 = vld [vmem:[#allocation2 + $0x928] sm:$0xff]
        %v810 = vld [vmem:[#allocation2 + $0x930] sm:$0xff]
        %v811 = vld [vmem:[#allocation2 + $0x938] sm:$0xff]
        %v812 = vld [vmem:[#allocation2 + $0x940] sm:$0xff]
        %813 = vmatprep.subr.mxu0 %v808
        %814 = vmatpush1.msra.mxu0 %v807
        %815 = vmatprep.subr.mxu0 %v802
        %816 = vmatpush1.msra.mxu0 %v801
        %817 = vmatprep.subr.mxu0 %v796
        %818 = vmatpush1.msra.mxu0 %v795
        %819 = vmatprep.subr.mxu0 %v790
        %820 = vmatpush1.msra.mxu0 %v789
        %821 = vmatprep.subr.mxu0 %v784
        %822 = vmatpush1.msra.mxu0 %v783
        %823 = vmatprep.subr.mxu0 %v778
        %824 = vmatpush1.msra.mxu0 %v777
        %825 = vmatprep.subr.mxu0 %v772
        %826 = vmatpush1.msra.mxu0 %v771
        %827 = vmatprep.subr.mxu0 %v766
        %828 = vmatpush1.msra.mxu0 %v765
        %829 = vmatprep.subr.mxu0 %v760
        %830 = vmatpush1.msra.mxu0 %v759
        %831 = vmatprep.subr.mxu0 %v754
        %832 = vmatpush1.msra.mxu0 %v753
        %833 = vmatprep.subr.mxu0 %v748
        %834 = vmatpush1.msra.mxu0 %v747
        %835 = vmatprep.subr.mxu0 %v742
        %836 = vmatpush1.msra.mxu0 %v741
        %837 = vmatprep.subr.mxu0 %v736
        %838 = vmatpush1.msra.mxu0 %v735
        %839 = vmatprep.subr.mxu0 %v730
        %840 = vmatpush1.msra.mxu0 %v729
        %841 = vmatprep.subr.mxu0 %v724
        %842 = vmatpush1.msra.mxu0 %v723
        %843 = vmatprep.subr.mxu0 %v718
        %844 = vmatpush1.msra.mxu0 %v717
        %845 = vmatprep.subr.mxu0 0.0
        %846 = vmatpush2.msra.mxu0 0.0
        %847 = vmatprep.subr.mxu0 0.0
        %848 = vmatpush2.msra.mxu0 0.0
        %849 = vmatprep.subr.mxu0 0.0
        %850 = vmatpush2.msra.mxu0 0.0
        %851 = vmatprep.subr.mxu0 0.0
        %852 = vmatpush2.msra.mxu0 0.0
        %853 = vmatprep.subr.mxu0 0.0
        %854 = vmatpush2.msra.mxu0 0.0
        %855 = vmatprep.subr.mxu0 0.0
        %856 = vmatpush2.msra.mxu0 0.0
        %857 = vmatprep.subr.mxu0 0.0
        %858 = vmatpush2.msra.mxu0 0.0
        %859 = vmatprep.subr.mxu0 0.0
        %860 = vmatpush2.msra.mxu0 0.0
        %861 = vmatprep.subr.mxu0 0.0
        %862 = vmatpush2.msra.mxu0 0.0
        %863 = vmatprep.subr.mxu0 0.0
        %864 = vmatpush2.msra.mxu0 0.0
        %865 = vmatprep.subr.mxu0 0.0
        %866 = vmatpush2.msra.mxu0 0.0
        %867 = vmatprep.subr.mxu0 0.0
        %868 = vmatpush2.msra.mxu0 0.0
        %869 = vmatprep.subr.mxu0 0.0
        %870 = vmatpush2.msra.mxu0 0.0
        %871 = vmatprep.subr.mxu0 0.0
        %872 = vmatpush2.msra.mxu0 0.0
        %873 = vmatprep.subr.mxu0 0.0
        %874 = vmatpush2.msra.mxu0 0.0
        %875 = vmatprep.subr.mxu0 0.0
        %876 = vmatpush2.msra.mxu0 0.0
        %877 = vmatprep.mubr.f32.mxu0 0.0
        %878 = vmatmul.mubr.f32.gmra.mxu0 %v716
        %v879 = vpop.f32.mrf.mxu0
        %v880 = vadd.f32 0.0, %v879
        %v881 = vpop.f32.mrf.mxu0
        %v882 = vadd.f32 0.0, %v881
        %883 = vdwg.mxu0
        %884 = vmatprep.subr.mxu0 %v810
        %885 = vmatpush1.msra.mxu0 %v809
        %886 = vmatprep.subr.mxu0 %v804
        %887 = vmatpush1.msra.mxu0 %v803
        %888 = vmatprep.subr.mxu0 %v798
        %889 = vmatpush1.msra.mxu0 %v797
        %890 = vmatprep.subr.mxu0 %v792
        %891 = vmatpush1.msra.mxu0 %v791
        %892 = vmatprep.subr.mxu0 %v786
        %893 = vmatpush1.msra.mxu0 %v785
        %894 = vmatprep.subr.mxu0 %v780
        %895 = vmatpush1.msra.mxu0 %v779
        %896 = vmatprep.subr.mxu0 %v774
        %897 = vmatpush1.msra.mxu0 %v773
        %898 = vmatprep.subr.mxu0 %v768
        %899 = vmatpush1.msra.mxu0 %v767
        %900 = vmatprep.subr.mxu0 %v762
        %901 = vmatpush1.msra.mxu0 %v761
        %902 = vmatprep.subr.mxu0 %v756
        %903 = vmatpush1.msra.mxu0 %v755
        %904 = vmatprep.subr.mxu0 %v750
        %905 = vmatpush1.msra.mxu0 %v749
        %906 = vmatprep.subr.mxu0 %v744
        %907 = vmatpush1.msra.mxu0 %v743
        %908 = vmatprep.subr.mxu0 %v738
        %909 = vmatpush1.msra.mxu0 %v737
        %910 = vmatprep.subr.mxu0 %v732
        %911 = vmatpush1.msra.mxu0 %v731
        %912 = vmatprep.subr.mxu0 %v726
        %913 = vmatpush1.msra.mxu0 %v725
        %914 = vmatprep.subr.mxu0 %v720
        %915 = vmatpush1.msra.mxu0 %v719
        %916 = vmatprep.subr.mxu0 0.0
        %917 = vmatpush2.msra.mxu0 0.0
        %918 = vmatprep.subr.mxu0 0.0
        %919 = vmatpush2.msra.mxu0 0.0
        %920 = vmatprep.subr.mxu0 0.0
        %921 = vmatpush2.msra.mxu0 0.0
        %922 = vmatprep.subr.mxu0 0.0
        %923 = vmatpush2.msra.mxu0 0.0
        %924 = vmatprep.subr.mxu0 0.0
        %925 = vmatpush2.msra.mxu0 0.0
        %926 = vmatprep.subr.mxu0 0.0
        %927 = vmatpush2.msra.mxu0 0.0
        %928 = vmatprep.subr.mxu0 0.0
        %929 = vmatpush2.msra.mxu0 0.0
        %930 = vmatprep.subr.mxu0 0.0
        %931 = vmatpush2.msra.mxu0 0.0
        %932 = vmatprep.subr.mxu0 0.0
        %933 = vmatpush2.msra.mxu0 0.0
        %934 = vmatprep.subr.mxu0 0.0
        %935 = vmatpush2.msra.mxu0 0.0
        %936 = vmatprep.subr.mxu0 0.0
        %937 = vmatpush2.msra.mxu0 0.0
        %938 = vmatprep.subr.mxu0 0.0
        %939 = vmatpush2.msra.mxu0 0.0
        %940 = vmatprep.subr.mxu0 0.0
        %941 = vmatpush2.msra.mxu0 0.0
        %942 = vmatprep.subr.mxu0 0.0
        %943 = vmatpush2.msra.mxu0 0.0
        %944 = vmatprep.subr.mxu0 0.0
        %945 = vmatpush2.msra.mxu0 0.0
        %946 = vmatprep.subr.mxu0 0.0
        %947 = vmatpush2.msra.mxu0 0.0
        %948 = vmatprep.mubr.f32.mxu0 0.0
        %949 = vmatmul.mubr.f32.gmra.mxu0 %v716
        %v950 = vpop.f32.mrf.mxu0
        %v951 = vadd.f32 0.0, %v950
        %v952 = vpop.f32.mrf.mxu0
        %v953 = vadd.f32 0.0, %v952
        %954 = vdwg.mxu0
        %955 = vmatprep.subr.mxu0 %v812
        %956 = vmatpush1.msra.mxu0 %v811
        %957 = vmatprep.subr.mxu0 %v806
        %958 = vmatpush1.msra.mxu0 %v805
        %959 = vmatprep.subr.mxu0 %v800
        %960 = vmatpush1.msra.mxu0 %v799
        %961 = vmatprep.subr.mxu0 %v794
        %962 = vmatpush1.msra.mxu0 %v793
        %963 = vmatprep.subr.mxu0 %v788
        %964 = vmatpush1.msra.mxu0 %v787
        %965 = vmatprep.subr.mxu0 %v782
        %966 = vmatpush1.msra.mxu0 %v781
        %967 = vmatprep.subr.mxu0 %v776
        %968 = vmatpush1.msra.mxu0 %v775
        %969 = vmatprep.subr.mxu0 %v770
        %970 = vmatpush1.msra.mxu0 %v769
        %971 = vmatprep.subr.mxu0 %v764
        %972 = vmatpush1.msra.mxu0 %v763
        %973 = vmatprep.subr.mxu0 %v758
        %974 = vmatpush1.msra.mxu0 %v757
        %975 = vmatprep.subr.mxu0 %v752
        %976 = vmatpush1.msra.mxu0 %v751
        %977 = vmatprep.subr.mxu0 %v746
        %978 = vmatpush1.msra.mxu0 %v745
        %979 = vmatprep.subr.mxu0 %v740
        %980 = vmatpush1.msra.mxu0 %v739
        %981 = vmatprep.subr.mxu0 %v734
        %982 = vmatpush1.msra.mxu0 %v733
        %983 = vmatprep.subr.mxu0 %v728
        %984 = vmatpush1.msra.mxu0 %v727
        %985 = vmatprep.subr.mxu0 %v722
        %986 = vmatpush1.msra.mxu0 %v721
        %987 = vmatprep.subr.mxu0 0.0
        %988 = vmatpush2.msra.mxu0 0.0
        %989 = vmatprep.subr.mxu0 0.0
        %990 = vmatpush2.msra.mxu0 0.0
        %991 = vmatprep.subr.mxu0 0.0
        %992 = vmatpush2.msra.mxu0 0.0
        %993 = vmatprep.subr.mxu0 0.0
        %994 = vmatpush2.msra.mxu0 0.0
        %995 = vmatprep.subr.mxu0 0.0
        %996 = vmatpush2.msra.mxu0 0.0
        %997 = vmatprep.subr.mxu0 0.0
        %998 = vmatpush2.msra.mxu0 0.0
        %999 = vmatprep.subr.mxu0 0.0
        %1000 = vmatpush2.msra.mxu0 0.0
        %1001 = vmatprep.subr.mxu0 0.0
        %1002 = vmatpush2.msra.mxu0 0.0
        %1003 = vmatprep.subr.mxu0 0.0
        %1004 = vmatpush2.msra.mxu0 0.0
        %1005 = vmatprep.subr.mxu0 0.0
        %1006 = vmatpush2.msra.mxu0 0.0
        %1007 = vmatprep.subr.mxu0 0.0
        %1008 = vmatpush2.msra.mxu0 0.0
        %1009 = vmatprep.subr.mxu0 0.0
        %1010 = vmatpush2.msra.mxu0 0.0
        %1011 = vmatprep.subr.mxu0 0.0
        %1012 = vmatpush2.msra.mxu0 0.0
        %1013 = vmatprep.subr.mxu0 0.0
        %1014 = vmatpush2.msra.mxu0 0.0
        %1015 = vmatprep.subr.mxu0 0.0
        %1016 = vmatpush2.msra.mxu0 0.0
        %1017 = vmatprep.subr.mxu0 0.0
        %1018 = vmatpush2.msra.mxu0 0.0
        %1019 = vmatprep.mubr.f32.mxu0 0.0
        %1020 = vmatmul.mubr.f32.gmra.mxu0 %v716
        %v1021 = vpop.f32.mrf.mxu0
        %v1022 = vadd.f32 0.0, %v1021
        %v1023 = vpop.f32.mrf.mxu0
        %v1024 = vadd.f32 0.0, %v1023
        %1025 = vdwg.mxu0
        %1026 = vmatprep.subr.mxu0 0.0
        %1027 = vmatpush1.xpose.msra.mxu0 0.0
        %1028 = vmatprep.subr.mxu0 0.0
        %1029 = vmatpush1.xpose.msra.mxu0 0.0
        %1030 = vmatprep.subr.mxu0 0.0
        %1031 = vmatpush1.xpose.msra.mxu0 0.0
        %1032 = vmatprep.subr.mxu0 0.0
        %1033 = vmatpush1.xpose.msra.mxu0 0.0
        %1034 = vmatprep.subr.mxu0 0.0
        %1035 = vmatpush1.xpose.msra.mxu0 0.0
        %1036 = vmatprep.subr.mxu0 0.0
        %1037 = vmatpush1.xpose.msra.mxu0 0.0
        %1038 = vmatprep.subr.mxu0 0.0
        %1039 = vmatpush1.xpose.msra.mxu0 0.0
        %1040 = vmatprep.subr.mxu0 0.0
        %1041 = vmatpush1.xpose.msra.mxu0 0.0
        %1042 = vmatprep.subr.mxu0 0.0
        %1043 = vmatpush1.xpose.msra.mxu0 0.0
        %1044 = vmatprep.subr.mxu0 0.0
        %1045 = vmatpush1.xpose.msra.mxu0 0.0
        %1046 = vmatprep.subr.mxu0 0.0
        %1047 = vmatpush1.xpose.msra.mxu0 0.0
        %1048 = vmatprep.subr.mxu0 0.0
        %1049 = vmatpush1.xpose.msra.mxu0 0.0
        %1050 = vmatprep.subr.mxu0 0.0
        %1051 = vmatpush1.xpose.msra.mxu0 0.0
        %1052 = vmatprep.subr.mxu0 0.0
        %1053 = vmatpush1.xpose.msra.mxu0 0.0
        %1054 = vmatprep.subr.mxu0 0.0
        %1055 = vmatpush1.xpose.msra.mxu0 0.0
        %1056 = vmatprep.subr.mxu0 0.0
        %1057 = vmatpush1.xpose.msra.mxu0 %v951
        %1058 = vmatprep.subr.mxu0 0.0
        %1059 = vmatpush2.xpose.msra.mxu0 0.0
        %1060 = vmatprep.subr.mxu0 0.0
        %1061 = vmatpush2.xpose.msra.mxu0 0.0
        %1062 = vmatprep.subr.mxu0 0.0
        %1063 = vmatpush2.xpose.msra.mxu0 0.0
        %1064 = vmatprep.subr.mxu0 0.0
        %1065 = vmatpush2.xpose.msra.mxu0 0.0
        %1066 = vmatprep.subr.mxu0 0.0
        %1067 = vmatpush2.xpose.msra.mxu0 0.0
        %1068 = vmatprep.subr.mxu0 0.0
        %1069 = vmatpush2.xpose.msra.mxu0 0.0
        %1070 = vmatprep.subr.mxu0 0.0
        %1071 = vmatpush2.xpose.msra.mxu0 0.0
        %1072 = vmatprep.subr.mxu0 0.0
        %1073 = vmatpush2.xpose.msra.mxu0 0.0
        %1074 = vmatprep.subr.mxu0 0.0
        %1075 = vmatpush2.xpose.msra.mxu0 0.0
        %1076 = vmatprep.subr.mxu0 0.0
        %1077 = vmatpush2.xpose.msra.mxu0 0.0
        %1078 = vmatprep.subr.mxu0 0.0
        %1079 = vmatpush2.xpose.msra.mxu0 0.0
        %1080 = vmatprep.subr.mxu0 0.0
        %1081 = vmatpush2.xpose.msra.mxu0 0.0
        %1082 = vmatprep.subr.mxu0 0.0
        %1083 = vmatpush2.xpose.msra.mxu0 0.0
        %1084 = vmatprep.subr.mxu0 0.0
        %1085 = vmatpush2.xpose.msra.mxu0 0.0
        %1086 = vmatprep.subr.mxu0 0.0
        %1087 = vmatpush2.xpose.msra.mxu0 0.0
        %1088 = vmatprep.subr.mxu0 0.0
        %1089 = vmatpush2.xpose.msra.mxu0 0.0
        %1090 = vmatprep.mubr.f32.mxu0 0.0
        %1091 = vmatmul.mubr.f32.gmra.mxu0 %v880
        %v1092 = vpop.f32.mrf.mxu0
        %v1093 = vadd.f32 0.0, %v1092
        %v1094 = vpop.f32.mrf.mxu0
        %1095 = vdwg.mxu0
        %vm1096 = vcmask 64512
        %v1097 = vsel %vm1096, %v1093, -inf
        %1098 = vmax.xlane.f32.xlu0 %v1097
        %v1099 = vpop.xlane.xlu0 %1098
        %v1100 = vsub.f32 %v1093, %v1099
        %v1101 = vmul.f32 %v1100, 1.442695
        %v1102 = vpow.pop %v1101
        %v1103 = vsel %vm1096, %v1102, 0.0
        %1104 = vadd.xlane.f32.xlu0 %v1103
        %v1105 = vpop.xlane.xlu0 %1104
        %v1106 = vrcp.pop %v1105
        %v1107 = vmul.f32 1.0, %v1106
        %v1108 = vmul.f32 %v1102, %v1107
        %1109 = vmatprep.subr.mxu0 0.0
        %1110 = vmatpush1.xpose.msra.mxu0 0.0
        %1111 = vmatprep.subr.mxu0 0.0
        %1112 = vmatpush1.xpose.msra.mxu0 0.0
        %1113 = vmatprep.subr.mxu0 0.0
        %1114 = vmatpush1.xpose.msra.mxu0 0.0
        %1115 = vmatprep.subr.mxu0 0.0
        %1116 = vmatpush1.xpose.msra.mxu0 0.0
        %1117 = vmatprep.subr.mxu0 0.0
        %1118 = vmatpush1.xpose.msra.mxu0 0.0
        %1119 = vmatprep.subr.mxu0 0.0
        %1120 = vmatpush1.xpose.msra.mxu0 0.0
        %1121 = vmatprep.subr.mxu0 0.0
        %1122 = vmatpush1.xpose.msra.mxu0 0.0
        %1123 = vmatprep.subr.mxu0 0.0
        %1124 = vmatpush1.xpose.msra.mxu0 0.0
        %1125 = vmatprep.subr.mxu0 0.0
        %1126 = vmatpush1.xpose.msra.mxu0 0.0
        %1127 = vmatprep.subr.mxu0 0.0
        %1128 = vmatpush1.xpose.msra.mxu0 0.0
        %1129 = vmatprep.subr.mxu0 0.0
        %1130 = vmatpush1.xpose.msra.mxu0 0.0
        %1131 = vmatprep.subr.mxu0 0.0
        %1132 = vmatpush1.xpose.msra.mxu0 0.0
        %1133 = vmatprep.subr.mxu0 0.0
        %1134 = vmatpush1.xpose.msra.mxu0 0.0
        %1135 = vmatprep.subr.mxu0 0.0
        %1136 = vmatpush1.xpose.msra.mxu0 0.0
        %1137 = vmatprep.subr.mxu0 0.0
        %1138 = vmatpush1.xpose.msra.mxu0 0.0
        %1139 = vmatprep.subr.mxu0 0.0
        %1140 = vmatpush1.xpose.msra.mxu0 %v953
        %1141 = vmatprep.subr.mxu0 0.0
        %1142 = vmatpush2.xpose.msra.mxu0 0.0
        %1143 = vmatprep.subr.mxu0 0.0
        %1144 = vmatpush2.xpose.msra.mxu0 0.0
        %1145 = vmatprep.subr.mxu0 0.0
        %1146 = vmatpush2.xpose.msra.mxu0 0.0
        %1147 = vmatprep.subr.mxu0 0.0
        %1148 = vmatpush2.xpose.msra.mxu0 0.0
        %1149 = vmatprep.subr.mxu0 0.0
        %1150 = vmatpush2.xpose.msra.mxu0 0.0
        %1151 = vmatprep.subr.mxu0 0.0
        %1152 = vmatpush2.xpose.msra.mxu0 0.0
        %1153 = vmatprep.subr.mxu0 0.0
        %1154 = vmatpush2.xpose.msra.mxu0 0.0
        %1155 = vmatprep.subr.mxu0 0.0
        %1156 = vmatpush2.xpose.msra.mxu0 0.0
        %1157 = vmatprep.subr.mxu0 0.0
        %1158 = vmatpush2.xpose.msra.mxu0 0.0
        %1159 = vmatprep.subr.mxu0 0.0
        %1160 = vmatpush2.xpose.msra.mxu0 0.0
        %1161 = vmatprep.subr.mxu0 0.0
        %1162 = vmatpush2.xpose.msra.mxu0 0.0
        %1163 = vmatprep.subr.mxu0 0.0
        %1164 = vmatpush2.xpose.msra.mxu0 0.0
        %1165 = vmatprep.subr.mxu0 0.0
        %1166 = vmatpush2.xpose.msra.mxu0 0.0
        %1167 = vmatprep.subr.mxu0 0.0
        %1168 = vmatpush2.xpose.msra.mxu0 0.0
        %1169 = vmatprep.subr.mxu0 0.0
        %1170 = vmatpush2.xpose.msra.mxu0 0.0
        %1171 = vmatprep.subr.mxu0 0.0
        %1172 = vmatpush2.xpose.msra.mxu0 0.0
        %1173 = vmatprep.mubr.f32.mxu0 0.0
        %1174 = vmatmul.mubr.f32.gmra.mxu0 %v882
        %v1175 = vpop.f32.mrf.mxu0
        %v1176 = vadd.f32 0.0, %v1175
        %v1177 = vpop.f32.mrf.mxu0
        %1178 = vdwg.mxu0
        %v1179 = vsel %vm1096, %v1176, -inf
        %1180 = vmax.xlane.f32.xlu0 %v1179
        %v1181 = vpop.xlane.xlu0 %1180
        %v1182 = vsub.f32 %v1176, %v1181
        %v1183 = vmul.f32 %v1182, 1.442695
        %v1184 = vpow.pop %v1183
        %v1185 = vsel %vm1096, %v1184, 0.0
        %1186 = vadd.xlane.f32.xlu0 %v1185
        %v1187 = vpop.xlane.xlu0 %1186
        %v1188 = vrcp.pop %v1187
        %v1189 = vmul.f32 1.0, %v1188
        %v1190 = vmul.f32 %v1184, %v1189
        %v1192 = vsel %vm1096, %v1190, 0
        %1194 = vmatprep.subr.mxu0 0.0
        %1195 = vmatpush1.msra.mxu0 0.0
        %1196 = vmatprep.subr.mxu0 0.0
        %1197 = vmatpush1.msra.mxu0 0.0
        %1198 = vmatprep.subr.mxu0 0.0
        %1199 = vmatpush1.msra.mxu0 0.0
        %1200 = vmatprep.subr.mxu0 0.0
        %1201 = vmatpush1.msra.mxu0 0.0
        %1202 = vmatprep.subr.mxu0 0.0
        %1203 = vmatpush1.msra.mxu0 0.0
        %1204 = vmatprep.subr.mxu0 0.0
        %1205 = vmatpush1.msra.mxu0 0.0
        %1206 = vmatprep.subr.mxu0 0.0
        %1207 = vmatpush1.msra.mxu0 0.0
        %1208 = vmatprep.subr.mxu0 0.0
        %1209 = vmatpush1.msra.mxu0 0.0
        %1210 = vmatprep.subr.mxu0 0.0
        %1211 = vmatpush1.msra.mxu0 0.0
        %1212 = vmatprep.subr.mxu0 0.0
        %1213 = vmatpush1.msra.mxu0 0.0
        %1214 = vmatprep.subr.mxu0 0.0
        %1215 = vmatpush1.msra.mxu0 0.0
        %1216 = vmatprep.subr.mxu0 0.0
        %1217 = vmatpush1.msra.mxu0 0.0
        %1218 = vmatprep.subr.mxu0 0.0
        %1219 = vmatpush1.msra.mxu0 0.0
        %1220 = vmatprep.subr.mxu0 0.0
        %1221 = vmatpush1.msra.mxu0 0.0
        %1222 = vmatprep.subr.mxu0 0.0
        %1223 = vmatpush1.msra.mxu0 0.0
        %1224 = vmatprep.subr.mxu0 0.0
        %1225 = vmatpush1.msra.mxu0 %v1024
        %1226 = vmatprep.subr.mxu0 0.0
        %1227 = vmatpush2.msra.mxu0 0.0
        %1228 = vmatprep.subr.mxu0 0.0
        %1229 = vmatpush2.msra.mxu0 0.0
        %1230 = vmatprep.subr.mxu0 0.0
        %1231 = vmatpush2.msra.mxu0 0.0
        %1232 = vmatprep.subr.mxu0 0.0
        %1233 = vmatpush2.msra.mxu0 0.0
        %1234 = vmatprep.subr.mxu0 0.0
        %1235 = vmatpush2.msra.mxu0 0.0
        %1236 = vmatprep.subr.mxu0 0.0
        %1237 = vmatpush2.msra.mxu0 0.0
        %1238 = vmatprep.subr.mxu0 0.0
        %1239 = vmatpush2.msra.mxu0 0.0
        %1240 = vmatprep.subr.mxu0 0.0
        %1241 = vmatpush2.msra.mxu0 0.0
        %1242 = vmatprep.subr.mxu0 0.0
        %1243 = vmatpush2.msra.mxu0 0.0
        %1244 = vmatprep.subr.mxu0 0.0
        %1245 = vmatpush2.msra.mxu0 0.0
        %1246 = vmatprep.subr.mxu0 0.0
        %1247 = vmatpush2.msra.mxu0 0.0
        %1248 = vmatprep.subr.mxu0 0.0
        %1249 = vmatpush2.msra.mxu0 0.0
        %1250 = vmatprep.subr.mxu0 0.0
        %1251 = vmatpush2.msra.mxu0 0.0
        %1252 = vmatprep.subr.mxu0 0.0
        %1253 = vmatpush2.msra.mxu0 0.0
        %1254 = vmatprep.subr.mxu0 0.0
        %1255 = vmatpush2.msra.mxu0 0.0
        %1256 = vmatprep.subr.mxu0 0.0
        %1257 = vmatpush2.msra.mxu0 0.0
        %1258 = vmatprep.mubr.f32.mxu0 0.0
        %1259 = vmatmul.mubr.f32.gmra.mxu0 %v1192
        %v1260 = vpop.f32.mrf.mxu0
        %v1261 = vadd.f32 0.0, %v1260
        %v1262 = vpop.f32.mrf.mxu0
        %1263 = vdwg.mxu0
        %v1265 = vsel %vm1096, %v1108, 0
        %1267 = vmatprep.subr.mxu0 0.0
        %1268 = vmatpush1.msra.mxu0 0.0
        %1269 = vmatprep.subr.mxu0 0.0
        %1270 = vmatpush1.msra.mxu0 0.0
        %1271 = vmatprep.subr.mxu0 0.0
        %1272 = vmatpush1.msra.mxu0 0.0
        %1273 = vmatprep.subr.mxu0 0.0
        %1274 = vmatpush1.msra.mxu0 0.0
        %1275 = vmatprep.subr.mxu0 0.0
        %1276 = vmatpush1.msra.mxu0 0.0
        %1277 = vmatprep.subr.mxu0 0.0
        %1278 = vmatpush1.msra.mxu0 0.0
        %1279 = vmatprep.subr.mxu0 0.0
        %1280 = vmatpush1.msra.mxu0 0.0
        %1281 = vmatprep.subr.mxu0 0.0
        %1282 = vmatpush1.msra.mxu0 0.0
        %1283 = vmatprep.subr.mxu0 0.0
        %1284 = vmatpush1.msra.mxu0 0.0
        %1285 = vmatprep.subr.mxu0 0.0
        %1286 = vmatpush1.msra.mxu0 0.0
        %1287 = vmatprep.subr.mxu0 0.0
        %1288 = vmatpush1.msra.mxu0 0.0
        %1289 = vmatprep.subr.mxu0 0.0
        %1290 = vmatpush1.msra.mxu0 0.0
        %1291 = vmatprep.subr.mxu0 0.0
        %1292 = vmatpush1.msra.mxu0 0.0
        %1293 = vmatprep.subr.mxu0 0.0
        %1294 = vmatpush1.msra.mxu0 0.0
        %1295 = vmatprep.subr.mxu0 0.0
        %1296 = vmatpush1.msra.mxu0 0.0
        %1297 = vmatprep.subr.mxu0 0.0
        %1298 = vmatpush1.msra.mxu0 %v1022
        %1299 = vmatprep.subr.mxu0 0.0
        %1300 = vmatpush2.msra.mxu0 0.0
        %1301 = vmatprep.subr.mxu0 0.0
        %1302 = vmatpush2.msra.mxu0 0.0
        %1303 = vmatprep.subr.mxu0 0.0
        %1304 = vmatpush2.msra.mxu0 0.0
        %1305 = vmatprep.subr.mxu0 0.0
        %1306 = vmatpush2.msra.mxu0 0.0
        %1307 = vmatprep.subr.mxu0 0.0
        %1308 = vmatpush2.msra.mxu0 0.0
        %1309 = vmatprep.subr.mxu0 0.0
        %1310 = vmatpush2.msra.mxu0 0.0
        %1311 = vmatprep.subr.mxu0 0.0
        %1312 = vmatpush2.msra.mxu0 0.0
        %1313 = vmatprep.subr.mxu0 0.0
        %1314 = vmatpush2.msra.mxu0 0.0
        %1315 = vmatprep.subr.mxu0 0.0
        %1316 = vmatpush2.msra.mxu0 0.0
        %1317 = vmatprep.subr.mxu0 0.0
        %1318 = vmatpush2.msra.mxu0 0.0
        %1319 = vmatprep.subr.mxu0 0.0
        %1320 = vmatpush2.msra.mxu0 0.0
        %1321 = vmatprep.subr.mxu0 0.0
        %1322 = vmatpush2.msra.mxu0 0.0
        %1323 = vmatprep.subr.mxu0 0.0
        %1324 = vmatpush2.msra.mxu0 0.0
        %1325 = vmatprep.subr.mxu0 0.0
        %1326 = vmatpush2.msra.mxu0 0.0
        %1327 = vmatprep.subr.mxu0 0.0
        %1328 = vmatpush2.msra.mxu0 0.0
        %1329 = vmatprep.subr.mxu0 0.0
        %1330 = vmatpush2.msra.mxu0 0.0
        %1331 = vmatprep.mubr.f32.mxu0 0.0
        %1332 = vmatmul.mubr.f32.gmra.mxu0 %v1265
        %v1333 = vpop.f32.mrf.mxu0
        %v1334 = vadd.f32 %v1261, %v1333
        %v1335 = vpop.f32.mrf.mxu0
        %1336 = vdwg.mxu0
        %v1337 = vadd.f32 %v716, %v1334
        %v1338 = vld [vmem:[#allocation2 + $0x60] sm:$0xff]
        %v1339 = vld [vmem:[#allocation2 + $0xf8] sm:$0xff]
        %v1340 = vld [vmem:[#allocation2 + $0x190] sm:$0xff]
        %v1341 = vld [vmem:[#allocation2 + $0x228] sm:$0xff]
        %v1342 = vld [vmem:[#allocation2 + $0x2c0] sm:$0xff]
        %v1343 = vld [vmem:[#allocation2 + $0x358] sm:$0xff]
        %v1344 = vld [vmem:[#allocation2 + $0x3f0] sm:$0xff]
        %v1345 = vld [vmem:[#allocation2 + $0x488] sm:$0xff]
        %v1346 = vld [vmem:[#allocation2 + $0x520] sm:$0xff]
        %v1347 = vld [vmem:[#allocation2 + $0x5b8] sm:$0xff]
        %v1348 = vld [vmem:[#allocation2 + $0x650] sm:$0xff]
        %v1349 = vld [vmem:[#allocation2 + $0x6e8] sm:$0xff]
        %v1350 = vld [vmem:[#allocation2 + $0x780] sm:$0xff]
        %v1351 = vld [vmem:[#allocation2 + $0x818] sm:$0xff]
        %v1352 = vld [vmem:[#allocation2 + $0x8b0] sm:$0xff]
        %v1353 = vld [vmem:[#allocation2 + $0x948] sm:$0xff]
        %v1354 = vld [vmem:[#allocation4 + $0x7] sm:$0x1]
        %v1356 = vlaneseq
        %v1357 = vshrl.u32 %v1356, 7
        %v1358 = vsub.s32 0, %v1357
        %v1359 = vrot.slane %v1354, %v1358
        %1361 = vmatprep.subr.mxu0 0.0
        %1362 = vmatpush1.msra.mxu0 %v1353
        %1363 = vmatprep.subr.mxu0 0.0
        %1364 = vmatpush1.msra.mxu0 %v1352
        %1365 = vmatprep.subr.mxu0 0.0
        %1366 = vmatpush1.msra.mxu0 %v1351
        %1367 = vmatprep.subr.mxu0 0.0
        %1368 = vmatpush1.msra.mxu0 %v1350
        %1369 = vmatprep.subr.mxu0 0.0
        %1370 = vmatpush1.msra.mxu0 %v1349
        %1371 = vmatprep.subr.mxu0 0.0
        %1372 = vmatpush1.msra.mxu0 %v1348
        %1373 = vmatprep.subr.mxu0 0.0
        %1374 = vmatpush1.msra.mxu0 %v1347
        %1375 = vmatprep.subr.mxu0 0.0
        %1376 = vmatpush1.msra.mxu0 %v1346
        %1377 = vmatprep.subr.mxu0 0.0
        %1378 = vmatpush1.msra.mxu0 %v1345
        %1379 = vmatprep.subr.mxu0 0.0
        %1380 = vmatpush1.msra.mxu0 %v1344
        %1381 = vmatprep.subr.mxu0 0.0
        %1382 = vmatpush1.msra.mxu0 %v1343
        %1383 = vmatprep.subr.mxu0 0.0
        %1384 = vmatpush1.msra.mxu0 %v1342
        %1385 = vmatprep.subr.mxu0 0.0
        %1386 = vmatpush1.msra.mxu0 %v1341
        %1387 = vmatprep.subr.mxu0 0.0
        %1388 = vmatpush1.msra.mxu0 %v1340
        %1389 = vmatprep.subr.mxu0 0.0
        %1390 = vmatpush1.msra.mxu0 %v1339
        %1391 = vmatprep.subr.mxu0 0.0
        %1392 = vmatpush1.msra.mxu0 %v1338
        %1393 = vmatprep.subr.mxu0 0.0
        %1394 = vmatpush2.msra.mxu0 0.0
        %1395 = vmatprep.subr.mxu0 0.0
        %1396 = vmatpush2.msra.mxu0 0.0
        %1397 = vmatprep.subr.mxu0 0.0
        %1398 = vmatpush2.msra.mxu0 0.0
        %1399 = vmatprep.subr.mxu0 0.0
        %1400 = vmatpush2.msra.mxu0 0.0
        %1401 = vmatprep.subr.mxu0 0.0
        %1402 = vmatpush2.msra.mxu0 0.0
        %1403 = vmatprep.subr.mxu0 0.0
        %1404 = vmatpush2.msra.mxu0 0.0
        %1405 = vmatprep.subr.mxu0 0.0
        %1406 = vmatpush2.msra.mxu0 0.0
        %1407 = vmatprep.subr.mxu0 0.0
        %1408 = vmatpush2.msra.mxu0 0.0
        %1409 = vmatprep.subr.mxu0 0.0
        %1410 = vmatpush2.msra.mxu0 0.0
        %1411 = vmatprep.subr.mxu0 0.0
        %1412 = vmatpush2.msra.mxu0 0.0
        %1413 = vmatprep.subr.mxu0 0.0
        %1414 = vmatpush2.msra.mxu0 0.0
        %1415 = vmatprep.subr.mxu0 0.0
        %1416 = vmatpush2.msra.mxu0 0.0
        %1417 = vmatprep.subr.mxu0 0.0
        %1418 = vmatpush2.msra.mxu0 0.0
        %1419 = vmatprep.subr.mxu0 0.0
        %1420 = vmatpush2.msra.mxu0 0.0
        %1421 = vmatprep.subr.mxu0 0.0
        %1422 = vmatpush2.msra.mxu0 0.0
        %1423 = vmatprep.subr.mxu0 0.0
        %1424 = vmatpush2.msra.mxu0 0.0
        %1425 = vmatprep.mubr.f32.mxu0 0.0
        %1426 = vmatmul.mubr.f32.gmra.mxu0 %v1337
        %v1427 = vpop.f32.mrf.mxu0
        %v1428 = vadd.f32 %v1359, %v1427
        %v1429 = vpop.f32.mrf.mxu0
        %1430 = vdwg.mxu0
        %v1431 = vmax.f32 %v1428, 0.0
        %v1432 = vadd.f32 %v716, %v1431
        %1433 = vmatprep.subr.mxu0 %v808
        %1434 = vmatpush1.msra.mxu0 %v807
        %1435 = vmatprep.subr.mxu0 %v802
        %1436 = vmatpush1.msra.mxu0 %v801
        %1437 = vmatprep.subr.mxu0 %v796
        %1438 = vmatpush1.msra.mxu0 %v795
        %1439 = vmatprep.subr.mxu0 %v790
        %1440 = vmatpush1.msra.mxu0 %v789
        %1441 = vmatprep.subr.mxu0 %v784
        %1442 = vmatpush1.msra.mxu0 %v783
        %1443 = vmatprep.subr.mxu0 %v778
        %1444 = vmatpush1.msra.mxu0 %v777
        %1445 = vmatprep.subr.mxu0 %v772
        %1446 = vmatpush1.msra.mxu0 %v771
        %1447 = vmatprep.subr.mxu0 %v766
        %1448 = vmatpush1.msra.mxu0 %v765
        %1449 = vmatprep.subr.mxu0 %v760
        %1450 = vmatpush1.msra.mxu0 %v759
        %1451 = vmatprep.subr.mxu0 %v754
        %1452 = vmatpush1.msra.mxu0 %v753
        %1453 = vmatprep.subr.mxu0 %v748
        %1454 = vmatpush1.msra.mxu0 %v747
        %1455 = vmatprep.subr.mxu0 %v742
        %1456 = vmatpush1.msra.mxu0 %v741
        %1457 = vmatprep.subr.mxu0 %v736
        %1458 = vmatpush1.msra.mxu0 %v735
        %1459 = vmatprep.subr.mxu0 %v730
        %1460 = vmatpush1.msra.mxu0 %v729
        %1461 = vmatprep.subr.mxu0 %v724
        %1462 = vmatpush1.msra.mxu0 %v723
        %1463 = vmatprep.subr.mxu0 %v718
        %1464 = vmatpush1.msra.mxu0 %v717
        %1465 = vmatprep.subr.mxu0 0.0
        %1466 = vmatpush2.msra.mxu0 0.0
        %1467 = vmatprep.subr.mxu0 0.0
        %1468 = vmatpush2.msra.mxu0 0.0
        %1469 = vmatprep.subr.mxu0 0.0
        %1470 = vmatpush2.msra.mxu0 0.0
        %1471 = vmatprep.subr.mxu0 0.0
        %1472 = vmatpush2.msra.mxu0 0.0
        %1473 = vmatprep.subr.mxu0 0.0
        %1474 = vmatpush2.msra.mxu0 0.0
        %1475 = vmatprep.subr.mxu0 0.0
        %1476 = vmatpush2.msra.mxu0 0.0
        %1477 = vmatprep.subr.mxu0 0.0
        %1478 = vmatpush2.msra.mxu0 0.0
        %1479 = vmatprep.subr.mxu0 0.0
        %1480 = vmatpush2.msra.mxu0 0.0
        %1481 = vmatprep.subr.mxu0 0.0
        %1482 = vmatpush2.msra.mxu0 0.0
        %1483 = vmatprep.subr.mxu0 0.0
        %1484 = vmatpush2.msra.mxu0 0.0
        %1485 = vmatprep.subr.mxu0 0.0
        %1486 = vmatpush2.msra.mxu0 0.0
        %1487 = vmatprep.subr.mxu0 0.0
        %1488 = vmatpush2.msra.mxu0 0.0
        %1489 = vmatprep.subr.mxu0 0.0
        %1490 = vmatpush2.msra.mxu0 0.0
        %1491 = vmatprep.subr.mxu0 0.0
        %1492 = vmatpush2.msra.mxu0 0.0
        %1493 = vmatprep.subr.mxu0 0.0
        %1494 = vmatpush2.msra.mxu0 0.0
        %1495 = vmatprep.subr.mxu0 0.0
        %1496 = vmatpush2.msra.mxu0 0.0
        %1497 = vmatprep.mubr.f32.mxu0 0.0
        %1498 = vmatmul.mubr.f32.gmra.mxu0 %v1432
        %v1499 = vpop.f32.mrf.mxu0
        %v1500 = vadd.f32 0.0, %v1499
        %v1501 = vpop.f32.mrf.mxu0
        %v1502 = vadd.f32 0.0, %v1501
        %1503 = vdwg.mxu0
        %1504 = vmatprep.subr.mxu0 %v810
        %1505 = vmatpush1.msra.mxu0 %v809
        %1506 = vmatprep.subr.mxu0 %v804
        %1507 = vmatpush1.msra.mxu0 %v803
        %1508 = vmatprep.subr.mxu0 %v798
        %1509 = vmatpush1.msra.mxu0 %v797
        %1510 = vmatprep.subr.mxu0 %v792
        %1511 = vmatpush1.msra.mxu0 %v791
        %1512 = vmatprep.subr.mxu0 %v786
        %1513 = vmatpush1.msra.mxu0 %v785
        %1514 = vmatprep.subr.mxu0 %v780
        %1515 = vmatpush1.msra.mxu0 %v779
        %1516 = vmatprep.subr.mxu0 %v774
        %1517 = vmatpush1.msra.mxu0 %v773
        %1518 = vmatprep.subr.mxu0 %v768
        %1519 = vmatpush1.msra.mxu0 %v767
        %1520 = vmatprep.subr.mxu0 %v762
        %1521 = vmatpush1.msra.mxu0 %v761
        %1522 = vmatprep.subr.mxu0 %v756
        %1523 = vmatpush1.msra.mxu0 %v755
        %1524 = vmatprep.subr.mxu0 %v750
        %1525 = vmatpush1.msra.mxu0 %v749
        %1526 = vmatprep.subr.mxu0 %v744
        %1527 = vmatpush1.msra.mxu0 %v743
        %1528 = vmatprep.subr.mxu0 %v738
        %1529 = vmatpush1.msra.mxu0 %v737
        %1530 = vmatprep.subr.mxu0 %v732
        %1531 = vmatpush1.msra.mxu0 %v731
        %1532 = vmatprep.subr.mxu0 %v726
        %1533 = vmatpush1.msra.mxu0 %v725
        %1534 = vmatprep.subr.mxu0 %v720
        %1535 = vmatpush1.msra.mxu0 %v719
        %1536 = vmatprep.subr.mxu0 0.0
        %1537 = vmatpush2.msra.mxu0 0.0
        %1538 = vmatprep.subr.mxu0 0.0
        %1539 = vmatpush2.msra.mxu0 0.0
        %1540 = vmatprep.subr.mxu0 0.0
        %1541 = vmatpush2.msra.mxu0 0.0
        %1542 = vmatprep.subr.mxu0 0.0
        %1543 = vmatpush2.msra.mxu0 0.0
        %1544 = vmatprep.subr.mxu0 0.0
        %1545 = vmatpush2.msra.mxu0 0.0
        %1546 = vmatprep.subr.mxu0 0.0
        %1547 = vmatpush2.msra.mxu0 0.0
        %1548 = vmatprep.subr.mxu0 0.0
        %1549 = vmatpush2.msra.mxu0 0.0
        %1550 = vmatprep.subr.mxu0 0.0
        %1551 = vmatpush2.msra.mxu0 0.0
        %1552 = vmatprep.subr.mxu0 0.0
        %1553 = vmatpush2.msra.mxu0 0.0
        %1554 = vmatprep.subr.mxu0 0.0
        %1555 = vmatpush2.msra.mxu0 0.0
        %1556 = vmatprep.subr.mxu0 0.0
        %1557 = vmatpush2.msra.mxu0 0.0
        %1558 = vmatprep.subr.mxu0 0.0
        %1559 = vmatpush2.msra.mxu0 0.0
        %1560 = vmatprep.subr.mxu0 0.0
        %1561 = vmatpush2.msra.mxu0 0.0
        %1562 = vmatprep.subr.mxu0 0.0
        %1563 = vmatpush2.msra.mxu0 0.0
        %1564 = vmatprep.subr.mxu0 0.0
        %1565 = vmatpush2.msra.mxu0 0.0
        %1566 = vmatprep.subr.mxu0 0.0
        %1567 = vmatpush2.msra.mxu0 0.0
        %1568 = vmatprep.mubr.f32.mxu0 0.0
        %1569 = vmatmul.mubr.f32.gmra.mxu0 %v1432
        %v1570 = vpop.f32.mrf.mxu0
        %v1571 = vadd.f32 0.0, %v1570
        %v1572 = vpop.f32.mrf.mxu0
        %v1573 = vadd.f32 0.0, %v1572
        %1574 = vdwg.mxu0
        %1575 = vmatprep.subr.mxu0 %v812
        %1576 = vmatpush1.msra.mxu0 %v811
        %1577 = vmatprep.subr.mxu0 %v806
        %1578 = vmatpush1.msra.mxu0 %v805
        %1579 = vmatprep.subr.mxu0 %v800
        %1580 = vmatpush1.msra.mxu0 %v799
        %1581 = vmatprep.subr.mxu0 %v794
        %1582 = vmatpush1.msra.mxu0 %v793
        %1583 = vmatprep.subr.mxu0 %v788
        %1584 = vmatpush1.msra.mxu0 %v787
        %1585 = vmatprep.subr.mxu0 %v782
        %1586 = vmatpush1.msra.mxu0 %v781
        %1587 = vmatprep.subr.mxu0 %v776
        %1588 = vmatpush1.msra.mxu0 %v775
        %1589 = vmatprep.subr.mxu0 %v770
        %1590 = vmatpush1.msra.mxu0 %v769
        %1591 = vmatprep.subr.mxu0 %v764
        %1592 = vmatpush1.msra.mxu0 %v763
        %1593 = vmatprep.subr.mxu0 %v758
        %1594 = vmatpush1.msra.mxu0 %v757
        %1595 = vmatprep.subr.mxu0 %v752
        %1596 = vmatpush1.msra.mxu0 %v751
        %1597 = vmatprep.subr.mxu0 %v746
        %1598 = vmatpush1.msra.mxu0 %v745
        %1599 = vmatprep.subr.mxu0 %v740
        %1600 = vmatpush1.msra.mxu0 %v739
        %1601 = vmatprep.subr.mxu0 %v734
        %1602 = vmatpush1.msra.mxu0 %v733
        %1603 = vmatprep.subr.mxu0 %v728
        %1604 = vmatpush1.msra.mxu0 %v727
        %1605 = vmatprep.subr.mxu0 %v722
        %1606 = vmatpush1.msra.mxu0 %v721
        %1607 = vmatprep.subr.mxu0 0.0
        %1608 = vmatpush2.msra.mxu0 0.0
        %1609 = vmatprep.subr.mxu0 0.0
        %1610 = vmatpush2.msra.mxu0 0.0
        %1611 = vmatprep.subr.mxu0 0.0
        %1612 = vmatpush2.msra.mxu0 0.0
        %1613 = vmatprep.subr.mxu0 0.0
        %1614 = vmatpush2.msra.mxu0 0.0
        %1615 = vmatprep.subr.mxu0 0.0
        %1616 = vmatpush2.msra.mxu0 0.0
        %1617 = vmatprep.subr.mxu0 0.0
        %1618 = vmatpush2.msra.mxu0 0.0
        %1619 = vmatprep.subr.mxu0 0.0
        %1620 = vmatpush2.msra.mxu0 0.0
        %1621 = vmatprep.subr.mxu0 0.0
        %1622 = vmatpush2.msra.mxu0 0.0
        %1623 = vmatprep.subr.mxu0 0.0
        %1624 = vmatpush2.msra.mxu0 0.0
        %1625 = vmatprep.subr.mxu0 0.0
        %1626 = vmatpush2.msra.mxu0 0.0
        %1627 = vmatprep.subr.mxu0 0.0
        %1628 = vmatpush2.msra.mxu0 0.0
        %1629 = vmatprep.subr.mxu0 0.0
        %1630 = vmatpush2.msra.mxu0 0.0
        %1631 = vmatprep.subr.mxu0 0.0
        %1632 = vmatpush2.msra.mxu0 0.0
        %1633 = vmatprep.subr.mxu0 0.0
        %1634 = vmatpush2.msra.mxu0 0.0
        %1635 = vmatprep.subr.mxu0 0.0
        %1636 = vmatpush2.msra.mxu0 0.0
        %1637 = vmatprep.subr.mxu0 0.0
        %1638 = vmatpush2.msra.mxu0 0.0
        %1639 = vmatprep.mubr.f32.mxu0 0.0
        %1640 = vmatmul.mubr.f32.gmra.mxu0 %v1432
        %v1641 = vpop.f32.mrf.mxu0
        %v1642 = vadd.f32 0.0, %v1641
        %v1643 = vpop.f32.mrf.mxu0
        %v1644 = vadd.f32 0.0, %v1643
        %1645 = vdwg.mxu0
        %1646 = vmatprep.subr.mxu0 0.0
        %1647 = vmatpush1.xpose.msra.mxu0 0.0
        %1648 = vmatprep.subr.mxu0 0.0
        %1649 = vmatpush1.xpose.msra.mxu0 0.0
        %1650 = vmatprep.subr.mxu0 0.0
        %1651 = vmatpush1.xpose.msra.mxu0 0.0
        %1652 = vmatprep.subr.mxu0 0.0
        %1653 = vmatpush1.xpose.msra.mxu0 0.0
        %1654 = vmatprep.subr.mxu0 0.0
        %1655 = vmatpush1.xpose.msra.mxu0 0.0
        %1656 = vmatprep.subr.mxu0 0.0
        %1657 = vmatpush1.xpose.msra.mxu0 0.0
        %1658 = vmatprep.subr.mxu0 0.0
        %1659 = vmatpush1.xpose.msra.mxu0 0.0
        %1660 = vmatprep.subr.mxu0 0.0
        %1661 = vmatpush1.xpose.msra.mxu0 0.0
        %1662 = vmatprep.subr.mxu0 0.0
        %1663 = vmatpush1.xpose.msra.mxu0 0.0
        %1664 = vmatprep.subr.mxu0 0.0
        %1665 = vmatpush1.xpose.msra.mxu0 0.0
        %1666 = vmatprep.subr.mxu0 0.0
        %1667 = vmatpush1.xpose.msra.mxu0 0.0
        %1668 = vmatprep.subr.mxu0 0.0
        %1669 = vmatpush1.xpose.msra.mxu0 0.0
        %1670 = vmatprep.subr.mxu0 0.0
        %1671 = vmatpush1.xpose.msra.mxu0 0.0
        %1672 = vmatprep.subr.mxu0 0.0
        %1673 = vmatpush1.xpose.msra.mxu0 0.0
        %1674 = vmatprep.subr.mxu0 0.0
        %1675 = vmatpush1.xpose.msra.mxu0 0.0
        %1676 = vmatprep.subr.mxu0 0.0
        %1677 = vmatpush1.xpose.msra.mxu0 %v1571
        %1678 = vmatprep.subr.mxu0 0.0
        %1679 = vmatpush2.xpose.msra.mxu0 0.0
        %1680 = vmatprep.subr.mxu0 0.0
        %1681 = vmatpush2.xpose.msra.mxu0 0.0
        %1682 = vmatprep.subr.mxu0 0.0
        %1683 = vmatpush2.xpose.msra.mxu0 0.0
        %1684 = vmatprep.subr.mxu0 0.0
        %1685 = vmatpush2.xpose.msra.mxu0 0.0
        %1686 = vmatprep.subr.mxu0 0.0
        %1687 = vmatpush2.xpose.msra.mxu0 0.0
        %1688 = vmatprep.subr.mxu0 0.0
        %1689 = vmatpush2.xpose.msra.mxu0 0.0
        %1690 = vmatprep.subr.mxu0 0.0
        %1691 = vmatpush2.xpose.msra.mxu0 0.0
        %1692 = vmatprep.subr.mxu0 0.0
        %1693 = vmatpush2.xpose.msra.mxu0 0.0
        %1694 = vmatprep.subr.mxu0 0.0
        %1695 = vmatpush2.xpose.msra.mxu0 0.0
        %1696 = vmatprep.subr.mxu0 0.0
        %1697 = vmatpush2.xpose.msra.mxu0 0.0
        %1698 = vmatprep.subr.mxu0 0.0
        %1699 = vmatpush2.xpose.msra.mxu0 0.0
        %1700 = vmatprep.subr.mxu0 0.0
        %1701 = vmatpush2.xpose.msra.mxu0 0.0
        %1702 = vmatprep.subr.mxu0 0.0
        %1703 = vmatpush2.xpose.msra.mxu0 0.0
        %1704 = vmatprep.subr.mxu0 0.0
        %1705 = vmatpush2.xpose.msra.mxu0 0.0
        %1706 = vmatprep.subr.mxu0 0.0
        %1707 = vmatpush2.xpose.msra.mxu0 0.0
        %1708 = vmatprep.subr.mxu0 0.0
        %1709 = vmatpush2.xpose.msra.mxu0 0.0
        %1710 = vmatprep.mubr.f32.mxu0 0.0
        %1711 = vmatmul.mubr.f32.gmra.mxu0 %v1500
        %v1712 = vpop.f32.mrf.mxu0
        %v1713 = vadd.f32 0.0, %v1712
        %v1714 = vpop.f32.mrf.mxu0
        %1715 = vdwg.mxu0
        %v1716 = vsel %vm1096, %v1713, -inf
        %1717 = vmax.xlane.f32.xlu0 %v1716
        %v1718 = vpop.xlane.xlu0 %1717
        %v1719 = vsub.f32 %v1713, %v1718
        %v1720 = vmul.f32 %v1719, 1.442695
        %v1721 = vpow.pop %v1720
        %v1722 = vsel %vm1096, %v1721, 0.0
        %1723 = vadd.xlane.f32.xlu0 %v1722
        %v1724 = vpop.xlane.xlu0 %1723
        %v1725 = vrcp.pop %v1724
        %v1726 = vmul.f32 1.0, %v1725
        %v1727 = vmul.f32 %v1721, %v1726
        %1728 = vmatprep.subr.mxu0 0.0
        %1729 = vmatpush1.xpose.msra.mxu0 0.0
        %1730 = vmatprep.subr.mxu0 0.0
        %1731 = vmatpush1.xpose.msra.mxu0 0.0
        %1732 = vmatprep.subr.mxu0 0.0
        %1733 = vmatpush1.xpose.msra.mxu0 0.0
        %1734 = vmatprep.subr.mxu0 0.0
        %1735 = vmatpush1.xpose.msra.mxu0 0.0
        %1736 = vmatprep.subr.mxu0 0.0
        %1737 = vmatpush1.xpose.msra.mxu0 0.0
        %1738 = vmatprep.subr.mxu0 0.0
        %1739 = vmatpush1.xpose.msra.mxu0 0.0
        %1740 = vmatprep.subr.mxu0 0.0
        %1741 = vmatpush1.xpose.msra.mxu0 0.0
        %1742 = vmatprep.subr.mxu0 0.0
        %1743 = vmatpush1.xpose.msra.mxu0 0.0
        %1744 = vmatprep.subr.mxu0 0.0
        %1745 = vmatpush1.xpose.msra.mxu0 0.0
        %1746 = vmatprep.subr.mxu0 0.0
        %1747 = vmatpush1.xpose.msra.mxu0 0.0
        %1748 = vmatprep.subr.mxu0 0.0
        %1749 = vmatpush1.xpose.msra.mxu0 0.0
        %1750 = vmatprep.subr.mxu0 0.0
        %1751 = vmatpush1.xpose.msra.mxu0 0.0
        %1752 = vmatprep.subr.mxu0 0.0
        %1753 = vmatpush1.xpose.msra.mxu0 0.0
        %1754 = vmatprep.subr.mxu0 0.0
        %1755 = vmatpush1.xpose.msra.mxu0 0.0
        %1756 = vmatprep.subr.mxu0 0.0
        %1757 = vmatpush1.xpose.msra.mxu0 0.0
        %1758 = vmatprep.subr.mxu0 0.0
        %1759 = vmatpush1.xpose.msra.mxu0 %v1573
        %1760 = vmatprep.subr.mxu0 0.0
        %1761 = vmatpush2.xpose.msra.mxu0 0.0
        %1762 = vmatprep.subr.mxu0 0.0
        %1763 = vmatpush2.xpose.msra.mxu0 0.0
        %1764 = vmatprep.subr.mxu0 0.0
        %1765 = vmatpush2.xpose.msra.mxu0 0.0
        %1766 = vmatprep.subr.mxu0 0.0
        %1767 = vmatpush2.xpose.msra.mxu0 0.0
        %1768 = vmatprep.subr.mxu0 0.0
        %1769 = vmatpush2.xpose.msra.mxu0 0.0
        %1770 = vmatprep.subr.mxu0 0.0
        %1771 = vmatpush2.xpose.msra.mxu0 0.0
        %1772 = vmatprep.subr.mxu0 0.0
        %1773 = vmatpush2.xpose.msra.mxu0 0.0
        %1774 = vmatprep.subr.mxu0 0.0
        %1775 = vmatpush2.xpose.msra.mxu0 0.0
        %1776 = vmatprep.subr.mxu0 0.0
        %1777 = vmatpush2.xpose.msra.mxu0 0.0
        %1778 = vmatprep.subr.mxu0 0.0
        %1779 = vmatpush2.xpose.msra.mxu0 0.0
        %1780 = vmatprep.subr.mxu0 0.0
        %1781 = vmatpush2.xpose.msra.mxu0 0.0
        %1782 = vmatprep.subr.mxu0 0.0
        %1783 = vmatpush2.xpose.msra.mxu0 0.0
        %1784 = vmatprep.subr.mxu0 0.0
        %1785 = vmatpush2.xpose.msra.mxu0 0.0
        %1786 = vmatprep.subr.mxu0 0.0
        %1787 = vmatpush2.xpose.msra.mxu0 0.0
        %1788 = vmatprep.subr.mxu0 0.0
        %1789 = vmatpush2.xpose.msra.mxu0 0.0
        %1790 = vmatprep.subr.mxu0 0.0
        %1791 = vmatpush2.xpose.msra.mxu0 0.0
        %1792 = vmatprep.mubr.f32.mxu0 0.0
        %1793 = vmatmul.mubr.f32.gmra.mxu0 %v1502
        %v1794 = vpop.f32.mrf.mxu0
        %v1795 = vadd.f32 0.0, %v1794
        %v1796 = vpop.f32.mrf.mxu0
        %1797 = vdwg.mxu0
        %v1798 = vsel %vm1096, %v1795, -inf
        %1799 = vmax.xlane.f32.xlu0 %v1798
        %v1800 = vpop.xlane.xlu0 %1799
        %v1801 = vsub.f32 %v1795, %v1800
        %v1802 = vmul.f32 %v1801, 1.442695
        %v1803 = vpow.pop %v1802
        %v1804 = vsel %vm1096, %v1803, 0.0
        %1805 = vadd.xlane.f32.xlu0 %v1804
        %v1806 = vpop.xlane.xlu0 %1805
        %v1807 = vrcp.pop %v1806
        %v1808 = vmul.f32 1.0, %v1807
        %v1809 = vmul.f32 %v1803, %v1808
        %v1811 = vsel %vm1096, %v1809, 0
        %1813 = vmatprep.subr.mxu0 0.0
        %1814 = vmatpush1.msra.mxu0 0.0
        %1815 = vmatprep.subr.mxu0 0.0
        %1816 = vmatpush1.msra.mxu0 0.0
        %1817 = vmatprep.subr.mxu0 0.0
        %1818 = vmatpush1.msra.mxu0 0.0
        %1819 = vmatprep.subr.mxu0 0.0
        %1820 = vmatpush1.msra.mxu0 0.0
        %1821 = vmatprep.subr.mxu0 0.0
        %1822 = vmatpush1.msra.mxu0 0.0
        %1823 = vmatprep.subr.mxu0 0.0
        %1824 = vmatpush1.msra.mxu0 0.0
        %1825 = vmatprep.subr.mxu0 0.0
        %1826 = vmatpush1.msra.mxu0 0.0
        %1827 = vmatprep.subr.mxu0 0.0
        %1828 = vmatpush1.msra.mxu0 0.0
        %1829 = vmatprep.subr.mxu0 0.0
        %1830 = vmatpush1.msra.mxu0 0.0
        %1831 = vmatprep.subr.mxu0 0.0
        %1832 = vmatpush1.msra.mxu0 0.0
        %1833 = vmatprep.subr.mxu0 0.0
        %1834 = vmatpush1.msra.mxu0 0.0
        %1835 = vmatprep.subr.mxu0 0.0
        %1836 = vmatpush1.msra.mxu0 0.0
        %1837 = vmatprep.subr.mxu0 0.0
        %1838 = vmatpush1.msra.mxu0 0.0
        %1839 = vmatprep.subr.mxu0 0.0
        %1840 = vmatpush1.msra.mxu0 0.0
        %1841 = vmatprep.subr.mxu0 0.0
        %1842 = vmatpush1.msra.mxu0 0.0
        %1843 = vmatprep.subr.mxu0 0.0
        %1844 = vmatpush1.msra.mxu0 %v1644
        %1845 = vmatprep.subr.mxu0 0.0
        %1846 = vmatpush2.msra.mxu0 0.0
        %1847 = vmatprep.subr.mxu0 0.0
        %1848 = vmatpush2.msra.mxu0 0.0
        %1849 = vmatprep.subr.mxu0 0.0
        %1850 = vmatpush2.msra.mxu0 0.0
        %1851 = vmatprep.subr.mxu0 0.0
        %1852 = vmatpush2.msra.mxu0 0.0
        %1853 = vmatprep.subr.mxu0 0.0
        %1854 = vmatpush2.msra.mxu0 0.0
        %1855 = vmatprep.subr.mxu0 0.0
        %1856 = vmatpush2.msra.mxu0 0.0
        %1857 = vmatprep.subr.mxu0 0.0
        %1858 = vmatpush2.msra.mxu0 0.0
        %1859 = vmatprep.subr.mxu0 0.0
        %1860 = vmatpush2.msra.mxu0 0.0
        %1861 = vmatprep.subr.mxu0 0.0
        %1862 = vmatpush2.msra.mxu0 0.0
        %1863 = vmatprep.subr.mxu0 0.0
        %1864 = vmatpush2.msra.mxu0 0.0
        %1865 = vmatprep.subr.mxu0 0.0
        %1866 = vmatpush2.msra.mxu0 0.0
        %1867 = vmatprep.subr.mxu0 0.0
        %1868 = vmatpush2.msra.mxu0 0.0
        %1869 = vmatprep.subr.mxu0 0.0
        %1870 = vmatpush2.msra.mxu0 0.0
        %1871 = vmatprep.subr.mxu0 0.0
        %1872 = vmatpush2.msra.mxu0 0.0
        %1873 = vmatprep.subr.mxu0 0.0
        %1874 = vmatpush2.msra.mxu0 0.0
        %1875 = vmatprep.subr.mxu0 0.0
        %1876 = vmatpush2.msra.mxu0 0.0
        %1877 = vmatprep.mubr.f32.mxu0 0.0
        %1878 = vmatmul.mubr.f32.gmra.mxu0 %v1811
        %v1879 = vpop.f32.mrf.mxu0
        %v1880 = vadd.f32 0.0, %v1879
        %v1881 = vpop.f32.mrf.mxu0
        %1882 = vdwg.mxu0
        %v1884 = vsel %vm1096, %v1727, 0
        %1886 = vmatprep.subr.mxu0 0.0
        %1887 = vmatpush1.msra.mxu0 0.0
        %1888 = vmatprep.subr.mxu0 0.0
        %1889 = vmatpush1.msra.mxu0 0.0
        %1890 = vmatprep.subr.mxu0 0.0
        %1891 = vmatpush1.msra.mxu0 0.0
        %1892 = vmatprep.subr.mxu0 0.0
        %1893 = vmatpush1.msra.mxu0 0.0
        %1894 = vmatprep.subr.mxu0 0.0
        %1895 = vmatpush1.msra.mxu0 0.0
        %1896 = vmatprep.subr.mxu0 0.0
        %1897 = vmatpush1.msra.mxu0 0.0
        %1898 = vmatprep.subr.mxu0 0.0
        %1899 = vmatpush1.msra.mxu0 0.0
        %1900 = vmatprep.subr.mxu0 0.0
        %1901 = vmatpush1.msra.mxu0 0.0
        %1902 = vmatprep.subr.mxu0 0.0
        %1903 = vmatpush1.msra.mxu0 0.0
        %1904 = vmatprep.subr.mxu0 0.0
        %1905 = vmatpush1.msra.mxu0 0.0
        %1906 = vmatprep.subr.mxu0 0.0
        %1907 = vmatpush1.msra.mxu0 0.0
        %1908 = vmatprep.subr.mxu0 0.0
        %1909 = vmatpush1.msra.mxu0 0.0
        %1910 = vmatprep.subr.mxu0 0.0
        %1911 = vmatpush1.msra.mxu0 0.0
        %1912 = vmatprep.subr.mxu0 0.0
        %1913 = vmatpush1.msra.mxu0 0.0
        %1914 = vmatprep.subr.mxu0 0.0
        %1915 = vmatpush1.msra.mxu0 0.0
        %1916 = vmatprep.subr.mxu0 0.0
        %1917 = vmatpush1.msra.mxu0 %v1642
        %1918 = vmatprep.subr.mxu0 0.0
        %1919 = vmatpush2.msra.mxu0 0.0
        %1920 = vmatprep.subr.mxu0 0.0
        %1921 = vmatpush2.msra.mxu0 0.0
        %1922 = vmatprep.subr.mxu0 0.0
        %1923 = vmatpush2.msra.mxu0 0.0
        %1924 = vmatprep.subr.mxu0 0.0
        %1925 = vmatpush2.msra.mxu0 0.0
        %1926 = vmatprep.subr.mxu0 0.0
        %1927 = vmatpush2.msra.mxu0 0.0
        %1928 = vmatprep.subr.mxu0 0.0
        %1929 = vmatpush2.msra.mxu0 0.0
        %1930 = vmatprep.subr.mxu0 0.0
        %1931 = vmatpush2.msra.mxu0 0.0
        %1932 = vmatprep.subr.mxu0 0.0
        %1933 = vmatpush2.msra.mxu0 0.0
        %1934 = vmatprep.subr.mxu0 0.0
        %1935 = vmatpush2.msra.mxu0 0.0
        %1936 = vmatprep.subr.mxu0 0.0
        %1937 = vmatpush2.msra.mxu0 0.0
        %1938 = vmatprep.subr.mxu0 0.0
        %1939 = vmatpush2.msra.mxu0 0.0
        %1940 = vmatprep.subr.mxu0 0.0
        %1941 = vmatpush2.msra.mxu0 0.0
        %1942 = vmatprep.subr.mxu0 0.0
        %1943 = vmatpush2.msra.mxu0 0.0
        %1944 = vmatprep.subr.mxu0 0.0
        %1945 = vmatpush2.msra.mxu0 0.0
        %1946 = vmatprep.subr.mxu0 0.0
        %1947 = vmatpush2.msra.mxu0 0.0
        %1948 = vmatprep.subr.mxu0 0.0
        %1949 = vmatpush2.msra.mxu0 0.0
        %1950 = vmatprep.mubr.f32.mxu0 0.0
        %1951 = vmatmul.mubr.f32.gmra.mxu0 %v1884
        %v1952 = vpop.f32.mrf.mxu0
        %v1953 = vadd.f32 %v1880, %v1952
        %v1954 = vpop.f32.mrf.mxu0
        %1955 = vdwg.mxu0
        %v1956 = vadd.f32 %v1432, %v1953
        %1957 = vmatprep.subr.mxu0 0.0
        %1958 = vmatpush1.msra.mxu0 %v1353
        %1959 = vmatprep.subr.mxu0 0.0
        %1960 = vmatpush1.msra.mxu0 %v1352
        %1961 = vmatprep.subr.mxu0 0.0
        %1962 = vmatpush1.msra.mxu0 %v1351
        %1963 = vmatprep.subr.mxu0 0.0
        %1964 = vmatpush1.msra.mxu0 %v1350
        %1965 = vmatprep.subr.mxu0 0.0
        %1966 = vmatpush1.msra.mxu0 %v1349
        %1967 = vmatprep.subr.mxu0 0.0
        %1968 = vmatpush1.msra.mxu0 %v1348
        %1969 = vmatprep.subr.mxu0 0.0
        %1970 = vmatpush1.msra.mxu0 %v1347
        %1971 = vmatprep.subr.mxu0 0.0
        %1972 = vmatpush1.msra.mxu0 %v1346
        %1973 = vmatprep.subr.mxu0 0.0
        %1974 = vmatpush1.msra.mxu0 %v1345
        %1975 = vmatprep.subr.mxu0 0.0
        %1976 = vmatpush1.msra.mxu0 %v1344
        %1977 = vmatprep.subr.mxu0 0.0
        %1978 = vmatpush1.msra.mxu0 %v1343
        %1979 = vmatprep.subr.mxu0 0.0
        %1980 = vmatpush1.msra.mxu0 %v1342
        %1981 = vmatprep.subr.mxu0 0.0
        %1982 = vmatpush1.msra.mxu0 %v1341
        %1983 = vmatprep.subr.mxu0 0.0
        %1984 = vmatpush1.msra.mxu0 %v1340
        %1985 = vmatprep.subr.mxu0 0.0
        %1986 = vmatpush1.msra.mxu0 %v1339
        %1987 = vmatprep.subr.mxu0 0.0
        %1988 = vmatpush1.msra.mxu0 %v1338
        %1989 = vmatprep.subr.mxu0 0.0
        %1990 = vmatpush2.msra.mxu0 0.0
        %1991 = vmatprep.subr.mxu0 0.0
        %1992 = vmatpush2.msra.mxu0 0.0
        %1993 = vmatprep.subr.mxu0 0.0
        %1994 = vmatpush2.msra.mxu0 0.0
        %1995 = vmatprep.subr.mxu0 0.0
        %1996 = vmatpush2.msra.mxu0 0.0
        %1997 = vmatprep.subr.mxu0 0.0
        %1998 = vmatpush2.msra.mxu0 0.0
        %1999 = vmatprep.subr.mxu0 0.0
        %2000 = vmatpush2.msra.mxu0 0.0
        %2001 = vmatprep.subr.mxu0 0.0
        %2002 = vmatpush2.msra.mxu0 0.0
        %2003 = vmatprep.subr.mxu0 0.0
        %2004 = vmatpush2.msra.mxu0 0.0
        %2005 = vmatprep.subr.mxu0 0.0
        %2006 = vmatpush2.msra.mxu0 0.0
        %2007 = vmatprep.subr.mxu0 0.0
        %2008 = vmatpush2.msra.mxu0 0.0
        %2009 = vmatprep.subr.mxu0 0.0
        %2010 = vmatpush2.msra.mxu0 0.0
        %2011 = vmatprep.subr.mxu0 0.0
        %2012 = vmatpush2.msra.mxu0 0.0
        %2013 = vmatprep.subr.mxu0 0.0
        %2014 = vmatpush2.msra.mxu0 0.0
        %2015 = vmatprep.subr.mxu0 0.0
        %2016 = vmatpush2.msra.mxu0 0.0
        %2017 = vmatprep.subr.mxu0 0.0
        %2018 = vmatpush2.msra.mxu0 0.0
        %2019 = vmatprep.subr.mxu0 0.0
        %2020 = vmatpush2.msra.mxu0 0.0
        %2021 = vmatprep.mubr.f32.mxu0 0.0
        %2022 = vmatmul.mubr.f32.gmra.mxu0 %v1956
        %v2023 = vpop.f32.mrf.mxu0
        %v2024 = vadd.f32 %v1359, %v2023
        %v2025 = vpop.f32.mrf.mxu0
        %2026 = vdwg.mxu0
        %v2027 = vmax.f32 %v2024, 0.0
        %v2028 = vadd.f32 %v1432, %v2027
        %v2029 = vld [vmem:[#allocation2 + $0x68] sm:$0xff]
        %v2030 = vld [vmem:[#allocation2 + $0x70] sm:$0xff]
        %v2031 = vld [vmem:[#allocation2 + $0x100] sm:$0xff]
        %v2032 = vld [vmem:[#allocation2 + $0x108] sm:$0xff]
        %v2033 = vld [vmem:[#allocation2 + $0x198] sm:$0xff]
        %v2034 = vld [vmem:[#allocation2 + $0x1a0] sm:$0xff]
        %v2035 = vld [vmem:[#allocation2 + $0x230] sm:$0xff]
        %v2036 = vld [vmem:[#allocation2 + $0x238] sm:$0xff]
        %v2037 = vld [vmem:[#allocation2 + $0x2c8] sm:$0xff]
        %v2038 = vld [vmem:[#allocation2 + $0x2d0] sm:$0xff]
        %v2039 = vld [vmem:[#allocation2 + $0x360] sm:$0xff]
        %v2040 = vld [vmem:[#allocation2 + $0x368] sm:$0xff]
        %v2041 = vld [vmem:[#allocation2 + $0x3f8] sm:$0xff]
        %v2042 = vld [vmem:[#allocation2 + $0x400] sm:$0xff]
        %v2043 = vld [vmem:[#allocation2 + $0x490] sm:$0xff]
        %v2044 = vld [vmem:[#allocation2 + $0x498] sm:$0xff]
        %v2045 = vld [vmem:[#allocation2 + $0x528] sm:$0xff]
        %v2046 = vld [vmem:[#allocation2 + $0x530] sm:$0xff]
        %v2047 = vld [vmem:[#allocation2 + $0x5c0] sm:$0xff]
        %v2048 = vld [vmem:[#allocation2 + $0x5c8] sm:$0xff]
        %v2049 = vld [vmem:[#allocation2 + $0x658] sm:$0xff]
        %v2050 = vld [vmem:[#allocation2 + $0x660] sm:$0xff]
        %v2051 = vld [vmem:[#allocation2 + $0x6f0] sm:$0xff]
        %v2052 = vld [vmem:[#allocation2 + $0x6f8] sm:$0xff]
        %v2053 = vld [vmem:[#allocation2 + $0x788] sm:$0xff]
        %v2054 = vld [vmem:[#allocation2 + $0x790] sm:$0xff]
        %v2055 = vld [vmem:[#allocation2 + $0x820] sm:$0xff]
        %v2056 = vld [vmem:[#allocation2 + $0x828] sm:$0xff]
        %v2057 = vld [vmem:[#allocation2 + $0x8b8] sm:$0xff]
        %v2058 = vld [vmem:[#allocation2 + $0x8c0] sm:$0xff]
        %v2059 = vld [vmem:[#allocation2 + $0x950] sm:$0xff]
        %v2060 = vld [vmem:[#allocation2 + $0x958] sm:$0xff]
        %v2061 = vld [vmem:[#allocation4 + $0x8] sm:$0x3]
        %v2063 = vlaneseq
        %v2064 = vshrl.u32 %v2063, 7
        %v2065 = vsub.s32 0, %v2064
        %v2066 = vrot.slane %v2061, %v2065
        %v2067 = vlaneseq
        %v2068 = vshrl.u32 %v2067, 7
        %v2069 = vsub.s32 1, %v2068
        %v2070 = vrot.slane %v2061, %v2069
        %2073 = vmatprep.subr.mxu0 %v2060
        %2074 = vmatpush1.msra.mxu0 %v2059
        %2075 = vmatprep.subr.mxu0 %v2058
        %2076 = vmatpush1.msra.mxu0 %v2057
        %2077 = vmatprep.subr.mxu0 %v2056
        %2078 = vmatpush1.msra.mxu0 %v2055
        %2079 = vmatprep.subr.mxu0 %v2054
        %2080 = vmatpush1.msra.mxu0 %v2053
        %2081 = vmatprep.subr.mxu0 %v2052
        %2082 = vmatpush1.msra.mxu0 %v2051
        %2083 = vmatprep.subr.mxu0 %v2050
        %2084 = vmatpush1.msra.mxu0 %v2049
        %2085 = vmatprep.subr.mxu0 %v2048
        %2086 = vmatpush1.msra.mxu0 %v2047
        %2087 = vmatprep.subr.mxu0 %v2046
        %2088 = vmatpush1.msra.mxu0 %v2045
        %2089 = vmatprep.subr.mxu0 %v2044
        %2090 = vmatpush1.msra.mxu0 %v2043
        %2091 = vmatprep.subr.mxu0 %v2042
        %2092 = vmatpush1.msra.mxu0 %v2041
        %2093 = vmatprep.subr.mxu0 %v2040
        %2094 = vmatpush1.msra.mxu0 %v2039
        %2095 = vmatprep.subr.mxu0 %v2038
        %2096 = vmatpush1.msra.mxu0 %v2037
        %2097 = vmatprep.subr.mxu0 %v2036
        %2098 = vmatpush1.msra.mxu0 %v2035
        %2099 = vmatprep.subr.mxu0 %v2034
        %2100 = vmatpush1.msra.mxu0 %v2033
        %2101 = vmatprep.subr.mxu0 %v2032
        %2102 = vmatpush1.msra.mxu0 %v2031
        %2103 = vmatprep.subr.mxu0 %v2030
        %2104 = vmatpush1.msra.mxu0 %v2029
        %2105 = vmatprep.subr.mxu0 0.0
        %2106 = vmatpush2.msra.mxu0 0.0
        %2107 = vmatprep.subr.mxu0 0.0
        %2108 = vmatpush2.msra.mxu0 0.0
        %2109 = vmatprep.subr.mxu0 0.0
        %2110 = vmatpush2.msra.mxu0 0.0
        %2111 = vmatprep.subr.mxu0 0.0
        %2112 = vmatpush2.msra.mxu0 0.0
        %2113 = vmatprep.subr.mxu0 0.0
        %2114 = vmatpush2.msra.mxu0 0.0
        %2115 = vmatprep.subr.mxu0 0.0
        %2116 = vmatpush2.msra.mxu0 0.0
        %2117 = vmatprep.subr.mxu0 0.0
        %2118 = vmatpush2.msra.mxu0 0.0
        %2119 = vmatprep.subr.mxu0 0.0
        %2120 = vmatpush2.msra.mxu0 0.0
        %2121 = vmatprep.subr.mxu0 0.0
        %2122 = vmatpush2.msra.mxu0 0.0
        %2123 = vmatprep.subr.mxu0 0.0
        %2124 = vmatpush2.msra.mxu0 0.0
        %2125 = vmatprep.subr.mxu0 0.0
        %2126 = vmatpush2.msra.mxu0 0.0
        %2127 = vmatprep.subr.mxu0 0.0
        %2128 = vmatpush2.msra.mxu0 0.0
        %2129 = vmatprep.subr.mxu0 0.0
        %2130 = vmatpush2.msra.mxu0 0.0
        %2131 = vmatprep.subr.mxu0 0.0
        %2132 = vmatpush2.msra.mxu0 0.0
        %2133 = vmatprep.subr.mxu0 0.0
        %2134 = vmatpush2.msra.mxu0 0.0
        %2135 = vmatprep.subr.mxu0 0.0
        %2136 = vmatpush2.msra.mxu0 0.0
        %2137 = vmatprep.mubr.f32.mxu0 0.0
        %2138 = vmatmul.mubr.f32.gmra.mxu0 %v2028
        %v2139 = vpop.f32.mrf.mxu0
        %v2140 = vadd.f32 %v2066, %v2139
        %v2141 = vpop.f32.mrf.mxu0
        %v2142 = vadd.f32 %v2070, %v2141
        %2143 = vdwg.mxu0
        %v2144 = vmax.f32 %v2140, 0.0
        %v2145 = vmax.f32 %v2142, 0.0
        %v2146 = vrot.slane %v2028, 4
        %v2147 = vadd.f32 %v2028, %v2146
        %v2148 = vrot.slane %v2147, 2
        %v2149 = vadd.f32 %v2147, %v2148
        %v2150 = vrot.slane %v2149, 1
        %v2151 = vadd.f32 %v2149, %v2150
        %v2152 = vrcp.pop 8.0
        %v2153 = vmul.f32 %v2151, %v2152
        %v2154 = vld [vmem:[#allocation2 + $0x78] sm:$0xff]
        %v2155 = vld [vmem:[#allocation2 + $0x110] sm:$0xff]
        %v2156 = vld [vmem:[#allocation2 + $0x1a8] sm:$0xff]
        %v2157 = vld [vmem:[#allocation2 + $0x240] sm:$0xff]
        %v2158 = vld [vmem:[#allocation2 + $0x2d8] sm:$0xff]
        %v2159 = vld [vmem:[#allocation2 + $0x370] sm:$0xff]
        %v2160 = vld [vmem:[#allocation2 + $0x408] sm:$0xff]
        %v2161 = vld [vmem:[#allocation2 + $0x4a0] sm:$0xff]
        %v2162 = vld [vmem:[#allocation2 + $0x538] sm:$0xff]
        %v2163 = vld [vmem:[#allocation2 + $0x5d0] sm:$0xff]
        %v2164 = vld [vmem:[#allocation2 + $0x668] sm:$0xff]
        %v2165 = vld [vmem:[#allocation2 + $0x700] sm:$0xff]
        %v2166 = vld [vmem:[#allocation2 + $0x798] sm:$0xff]
        %v2167 = vld [vmem:[#allocation2 + $0x830] sm:$0xff]
        %v2168 = vld [vmem:[#allocation2 + $0x8c8] sm:$0xff]
        %v2169 = vld [vmem:[#allocation2 + $0x960] sm:$0xff]
        %v2170 = vld [vmem:[#allocation4 + $0xa] sm:$0x1]
        %2171 = vmatprep.subr.mxu0 0.0
        %2172 = vmatpush1.msra.mxu0 %v2169
        %2173 = vmatprep.subr.mxu0 0.0
        %2174 = vmatpush1.msra.mxu0 %v2168
        %2175 = vmatprep.subr.mxu0 0.0
        %2176 = vmatpush1.msra.mxu0 %v2167
        %2177 = vmatprep.subr.mxu0 0.0
        %2178 = vmatpush1.msra.mxu0 %v2166
        %2179 = vmatprep.subr.mxu0 0.0
        %2180 = vmatpush1.msra.mxu0 %v2165
        %2181 = vmatprep.subr.mxu0 0.0
        %2182 = vmatpush1.msra.mxu0 %v2164
        %2183 = vmatprep.subr.mxu0 0.0
        %2184 = vmatpush1.msra.mxu0 %v2163
        %2185 = vmatprep.subr.mxu0 0.0
        %2186 = vmatpush1.msra.mxu0 %v2162
        %2187 = vmatprep.subr.mxu0 0.0
        %2188 = vmatpush1.msra.mxu0 %v2161
        %2189 = vmatprep.subr.mxu0 0.0
        %2190 = vmatpush1.msra.mxu0 %v2160
        %2191 = vmatprep.subr.mxu0 0.0
        %2192 = vmatpush1.msra.mxu0 %v2159
        %2193 = vmatprep.subr.mxu0 0.0
        %2194 = vmatpush1.msra.mxu0 %v2158
        %2195 = vmatprep.subr.mxu0 0.0
        %2196 = vmatpush1.msra.mxu0 %v2157
        %2197 = vmatprep.subr.mxu0 0.0
        %2198 = vmatpush1.msra.mxu0 %v2156
        %2199 = vmatprep.subr.mxu0 0.0
        %2200 = vmatpush1.msra.mxu0 %v2155
        %2201 = vmatprep.subr.mxu0 0.0
        %2202 = vmatpush1.msra.mxu0 %v2154
        %2203 = vmatprep.subr.mxu0 0.0
        %2204 = vmatpush2.msra.mxu0 0.0
        %2205 = vmatprep.subr.mxu0 0.0
        %2206 = vmatpush2.msra.mxu0 0.0
        %2207 = vmatprep.subr.mxu0 0.0
        %2208 = vmatpush2.msra.mxu0 0.0
        %2209 = vmatprep.subr.mxu0 0.0
        %2210 = vmatpush2.msra.mxu0 0.0
        %2211 = vmatprep.subr.mxu0 0.0
        %2212 = vmatpush2.msra.mxu0 0.0
        %2213 = vmatprep.subr.mxu0 0.0
        %2214 = vmatpush2.msra.mxu0 0.0
        %2215 = vmatprep.subr.mxu0 0.0
        %2216 = vmatpush2.msra.mxu0 0.0
        %2217 = vmatprep.subr.mxu0 0.0
        %2218 = vmatpush2.msra.mxu0 0.0
        %2219 = vmatprep.subr.mxu0 0.0
        %2220 = vmatpush2.msra.mxu0 0.0
        %2221 = vmatprep.subr.mxu0 0.0
        %2222 = vmatpush2.msra.mxu0 0.0
        %2223 = vmatprep.subr.mxu0 0.0
        %2224 = vmatpush2.msra.mxu0 0.0
        %2225 = vmatprep.subr.mxu0 0.0
        %2226 = vmatpush2.msra.mxu0 0.0
        %2227 = vmatprep.subr.mxu0 0.0
        %2228 = vmatpush2.msra.mxu0 0.0
        %2229 = vmatprep.subr.mxu0 0.0
        %2230 = vmatpush2.msra.mxu0 0.0
        %2231 = vmatprep.subr.mxu0 0.0
        %2232 = vmatpush2.msra.mxu0 0.0
        %2233 = vmatprep.subr.mxu0 0.0
        %2234 = vmatpush2.msra.mxu0 0.0
        %2235 = vmatprep.mubr.f32.mxu0 0.0
        %2236 = vmatmul.mubr.f32.gmra.mxu0 %v2153
        %v2237 = vpop.f32.mrf.mxu0
        %v2238 = vadd.f32 %v2170, %v2237
        %v2239 = vpop.f32.mrf.mxu0
        %2240 = vdwg.mxu0
        %v2241 = vmax.f32 %v2238, 0.0
        %v2242 = vld [vmem:[#allocation2 + $0x80] sm:$0xff]
        %v2243 = vld [vmem:[#allocation2 + $0x118] sm:$0xff]
        %v2244 = vld [vmem:[#allocation2 + $0x1b0] sm:$0xff]
        %v2245 = vld [vmem:[#allocation2 + $0x248] sm:$0xff]
        %v2246 = vld [vmem:[#allocation2 + $0x2e0] sm:$0xff]
        %v2247 = vld [vmem:[#allocation2 + $0x378] sm:$0xff]
        %v2248 = vld [vmem:[#allocation2 + $0x410] sm:$0xff]
        %v2249 = vld [vmem:[#allocation2 + $0x4a8] sm:$0xff]
        %v2250 = vld [vmem:[#allocation2 + $0x540] sm:$0xff]
        %v2251 = vld [vmem:[#allocation2 + $0x5d8] sm:$0xff]
        %v2252 = vld [vmem:[#allocation2 + $0x670] sm:$0xff]
        %v2253 = vld [vmem:[#allocation2 + $0x708] sm:$0xff]
        %v2254 = vld [vmem:[#allocation2 + $0x7a0] sm:$0xff]
        %v2255 = vld [vmem:[#allocation2 + $0x838] sm:$0xff]
        %v2256 = vld [vmem:[#allocation2 + $0x8d0] sm:$0xff]
        %v2257 = vld [vmem:[#allocation2 + $0x968] sm:$0xff]
        %v2258 = vld [vmem:[#allocation4 + $0xb] sm:$0x1]
        %2259 = vmatprep.subr.mxu0 0.0
        %2260 = vmatpush1.msra.mxu0 %v2257
        %2261 = vmatprep.subr.mxu0 0.0
        %2262 = vmatpush1.msra.mxu0 %v2256
        %2263 = vmatprep.subr.mxu0 0.0
        %2264 = vmatpush1.msra.mxu0 %v2255
        %2265 = vmatprep.subr.mxu0 0.0
        %2266 = vmatpush1.msra.mxu0 %v2254
        %2267 = vmatprep.subr.mxu0 0.0
        %2268 = vmatpush1.msra.mxu0 %v2253
        %2269 = vmatprep.subr.mxu0 0.0
        %2270 = vmatpush1.msra.mxu0 %v2252
        %2271 = vmatprep.subr.mxu0 0.0
        %2272 = vmatpush1.msra.mxu0 %v2251
        %2273 = vmatprep.subr.mxu0 0.0
        %2274 = vmatpush1.msra.mxu0 %v2250
        %2275 = vmatprep.subr.mxu0 0.0
        %2276 = vmatpush1.msra.mxu0 %v2249
        %2277 = vmatprep.subr.mxu0 0.0
        %2278 = vmatpush1.msra.mxu0 %v2248
        %2279 = vmatprep.subr.mxu0 0.0
        %2280 = vmatpush1.msra.mxu0 %v2247
        %2281 = vmatprep.subr.mxu0 0.0
        %2282 = vmatpush1.msra.mxu0 %v2246
        %2283 = vmatprep.subr.mxu0 0.0
        %2284 = vmatpush1.msra.mxu0 %v2245
        %2285 = vmatprep.subr.mxu0 0.0
        %2286 = vmatpush1.msra.mxu0 %v2244
        %2287 = vmatprep.subr.mxu0 0.0
        %2288 = vmatpush1.msra.mxu0 %v2243
        %2289 = vmatprep.subr.mxu0 0.0
        %2290 = vmatpush1.msra.mxu0 %v2242
        %2291 = vmatprep.subr.mxu0 0.0
        %2292 = vmatpush2.msra.mxu0 0.0
        %2293 = vmatprep.subr.mxu0 0.0
        %2294 = vmatpush2.msra.mxu0 0.0
        %2295 = vmatprep.subr.mxu0 0.0
        %2296 = vmatpush2.msra.mxu0 0.0
        %2297 = vmatprep.subr.mxu0 0.0
        %2298 = vmatpush2.msra.mxu0 0.0
        %2299 = vmatprep.subr.mxu0 0.0
        %2300 = vmatpush2.msra.mxu0 0.0
        %2301 = vmatprep.subr.mxu0 0.0
        %2302 = vmatpush2.msra.mxu0 0.0
        %2303 = vmatprep.subr.mxu0 0.0
        %2304 = vmatpush2.msra.mxu0 0.0
        %2305 = vmatprep.subr.mxu0 0.0
        %2306 = vmatpush2.msra.mxu0 0.0
        %2307 = vmatprep.subr.mxu0 0.0
        %2308 = vmatpush2.msra.mxu0 0.0
        %2309 = vmatprep.subr.mxu0 0.0
        %2310 = vmatpush2.msra.mxu0 0.0
        %2311 = vmatprep.subr.mxu0 0.0
        %2312 = vmatpush2.msra.mxu0 0.0
        %2313 = vmatprep.subr.mxu0 0.0
        %2314 = vmatpush2.msra.mxu0 0.0
        %2315 = vmatprep.subr.mxu0 0.0
        %2316 = vmatpush2.msra.mxu0 0.0
        %2317 = vmatprep.subr.mxu0 0.0
        %2318 = vmatpush2.msra.mxu0 0.0
        %2319 = vmatprep.subr.mxu0 0.0
        %2320 = vmatpush2.msra.mxu0 0.0
        %2321 = vmatprep.subr.mxu0 0.0
        %2322 = vmatpush2.msra.mxu0 0.0
        %2323 = vmatprep.mubr.f32.mxu0 0.0
        %2324 = vmatmul.mubr.f32.gmra.mxu0 %v2144
        %v2325 = vpop.f32.mrf.mxu0
        %v2326 = vadd.f32 %v2258, %v2325
        %v2327 = vpop.f32.mrf.mxu0
        %2328 = vdwg.mxu0
        %v2329 = vld [vmem:[#allocation2 + $0x88] sm:$0xff]
        %v2330 = vld [vmem:[#allocation2 + $0x120] sm:$0xff]
        %v2331 = vld [vmem:[#allocation2 + $0x1b8] sm:$0xff]
        %v2332 = vld [vmem:[#allocation2 + $0x250] sm:$0xff]
        %v2333 = vld [vmem:[#allocation2 + $0x2e8] sm:$0xff]
        %v2334 = vld [vmem:[#allocation2 + $0x380] sm:$0xff]
        %v2335 = vld [vmem:[#allocation2 + $0x418] sm:$0xff]
        %v2336 = vld [vmem:[#allocation2 + $0x4b0] sm:$0xff]
        %v2337 = vld [vmem:[#allocation2 + $0x548] sm:$0xff]
        %v2338 = vld [vmem:[#allocation2 + $0x5e0] sm:$0xff]
        %v2339 = vld [vmem:[#allocation2 + $0x678] sm:$0xff]
        %v2340 = vld [vmem:[#allocation2 + $0x710] sm:$0xff]
        %v2341 = vld [vmem:[#allocation2 + $0x7a8] sm:$0xff]
        %v2342 = vld [vmem:[#allocation2 + $0x840] sm:$0xff]
        %v2343 = vld [vmem:[#allocation2 + $0x8d8] sm:$0xff]
        %v2344 = vld [vmem:[#allocation2 + $0x970] sm:$0xff]
        %v2345 = vld [vmem:[#allocation4 + $0xc] sm:$0x1]
        %v2347 = vlaneseq
        %v2348 = vshrl.u32 %v2347, 7
        %v2349 = vsub.s32 0, %v2348
        %v2350 = vrot.slane %v2345, %v2349
        %2352 = vmatprep.subr.mxu0 0.0
        %2353 = vmatpush1.msra.mxu0 %v2344
        %2354 = vmatprep.subr.mxu0 0.0
        %2355 = vmatpush1.msra.mxu0 %v2343
        %2356 = vmatprep.subr.mxu0 0.0
        %2357 = vmatpush1.msra.mxu0 %v2342
        %2358 = vmatprep.subr.mxu0 0.0
        %2359 = vmatpush1.msra.mxu0 %v2341
        %2360 = vmatprep.subr.mxu0 0.0
        %2361 = vmatpush1.msra.mxu0 %v2340
        %2362 = vmatprep.subr.mxu0 0.0
        %2363 = vmatpush1.msra.mxu0 %v2339
        %2364 = vmatprep.subr.mxu0 0.0
        %2365 = vmatpush1.msra.mxu0 %v2338
        %2366 = vmatprep.subr.mxu0 0.0
        %2367 = vmatpush1.msra.mxu0 %v2337
        %2368 = vmatprep.subr.mxu0 0.0
        %2369 = vmatpush1.msra.mxu0 %v2336
        %2370 = vmatprep.subr.mxu0 0.0
        %2371 = vmatpush1.msra.mxu0 %v2335
        %2372 = vmatprep.subr.mxu0 0.0
        %2373 = vmatpush1.msra.mxu0 %v2334
        %2374 = vmatprep.subr.mxu0 0.0
        %2375 = vmatpush1.msra.mxu0 %v2333
        %2376 = vmatprep.subr.mxu0 0.0
        %2377 = vmatpush1.msra.mxu0 %v2332
        %2378 = vmatprep.subr.mxu0 0.0
        %2379 = vmatpush1.msra.mxu0 %v2331
        %2380 = vmatprep.subr.mxu0 0.0
        %2381 = vmatpush1.msra.mxu0 %v2330
        %2382 = vmatprep.subr.mxu0 0.0
        %2383 = vmatpush1.msra.mxu0 %v2329
        %2384 = vmatprep.subr.mxu0 0.0
        %2385 = vmatpush2.msra.mxu0 0.0
        %2386 = vmatprep.subr.mxu0 0.0
        %2387 = vmatpush2.msra.mxu0 0.0
        %2388 = vmatprep.subr.mxu0 0.0
        %2389 = vmatpush2.msra.mxu0 0.0
        %2390 = vmatprep.subr.mxu0 0.0
        %2391 = vmatpush2.msra.mxu0 0.0
        %2392 = vmatprep.subr.mxu0 0.0
        %2393 = vmatpush2.msra.mxu0 0.0
        %2394 = vmatprep.subr.mxu0 0.0
        %2395 = vmatpush2.msra.mxu0 0.0
        %2396 = vmatprep.subr.mxu0 0.0
        %2397 = vmatpush2.msra.mxu0 0.0
        %2398 = vmatprep.subr.mxu0 0.0
        %2399 = vmatpush2.msra.mxu0 0.0
        %2400 = vmatprep.subr.mxu0 0.0
        %2401 = vmatpush2.msra.mxu0 0.0
        %2402 = vmatprep.subr.mxu0 0.0
        %2403 = vmatpush2.msra.mxu0 0.0
        %2404 = vmatprep.subr.mxu0 0.0
        %2405 = vmatpush2.msra.mxu0 0.0
        %2406 = vmatprep.subr.mxu0 0.0
        %2407 = vmatpush2.msra.mxu0 0.0
        %2408 = vmatprep.subr.mxu0 0.0
        %2409 = vmatpush2.msra.mxu0 0.0
        %2410 = vmatprep.subr.mxu0 0.0
        %2411 = vmatpush2.msra.mxu0 0.0
        %2412 = vmatprep.subr.mxu0 0.0
        %2413 = vmatpush2.msra.mxu0 0.0
        %2414 = vmatprep.subr.mxu0 0.0
        %2415 = vmatpush2.msra.mxu0 0.0
        %2416 = vmatprep.mubr.f32.mxu0 0.0
        %2417 = vmatmul.mubr.f32.gmra.mxu0 %v2145
        %v2418 = vpop.f32.mrf.mxu0
        %v2419 = vadd.f32 %v2350, %v2418
        %v2420 = vpop.f32.mrf.mxu0
        %2421 = vdwg.mxu0
        %v2422 = vld [vmem:[#allocation2 + $0x90] sm:$0xff]
        %v2423 = vld [vmem:[#allocation2 + $0x128] sm:$0xff]
        %v2424 = vld [vmem:[#allocation2 + $0x1c0] sm:$0xff]
        %v2425 = vld [vmem:[#allocation2 + $0x258] sm:$0xff]
        %v2426 = vld [vmem:[#allocation2 + $0x2f0] sm:$0xff]
        %v2427 = vld [vmem:[#allocation2 + $0x388] sm:$0xff]
        %v2428 = vld [vmem:[#allocation2 + $0x420] sm:$0xff]
        %v2429 = vld [vmem:[#allocation2 + $0x4b8] sm:$0xff]
        %v2430 = vld [vmem:[#allocation2 + $0x550] sm:$0xff]
        %v2431 = vld [vmem:[#allocation2 + $0x5e8] sm:$0xff]
        %v2432 = vld [vmem:[#allocation2 + $0x680] sm:$0xff]
        %v2433 = vld [vmem:[#allocation2 + $0x718] sm:$0xff]
        %v2434 = vld [vmem:[#allocation2 + $0x7b0] sm:$0xff]
        %v2435 = vld [vmem:[#allocation2 + $0x848] sm:$0xff]
        %v2436 = vld [vmem:[#allocation2 + $0x8e0] sm:$0xff]
        %v2437 = vld [vmem:[#allocation2 + $0x978] sm:$0xff]
        %v2438 = vld [vmem:[#allocation4 + $0xd] sm:$0x1]
        %2439 = vmatprep.subr.mxu0 0.0
        %2440 = vmatpush1.msra.mxu0 %v2437
        %2441 = vmatprep.subr.mxu0 0.0
        %2442 = vmatpush1.msra.mxu0 %v2436
        %2443 = vmatprep.subr.mxu0 0.0
        %2444 = vmatpush1.msra.mxu0 %v2435
        %2445 = vmatprep.subr.mxu0 0.0
        %2446 = vmatpush1.msra.mxu0 %v2434
        %2447 = vmatprep.subr.mxu0 0.0
        %2448 = vmatpush1.msra.mxu0 %v2433
        %2449 = vmatprep.subr.mxu0 0.0
        %2450 = vmatpush1.msra.mxu0 %v2432
        %2451 = vmatprep.subr.mxu0 0.0
        %2452 = vmatpush1.msra.mxu0 %v2431
        %2453 = vmatprep.subr.mxu0 0.0
        %2454 = vmatpush1.msra.mxu0 %v2430
        %2455 = vmatprep.subr.mxu0 0.0
        %2456 = vmatpush1.msra.mxu0 %v2429
        %2457 = vmatprep.subr.mxu0 0.0
        %2458 = vmatpush1.msra.mxu0 %v2428
        %2459 = vmatprep.subr.mxu0 0.0
        %2460 = vmatpush1.msra.mxu0 %v2427
        %2461 = vmatprep.subr.mxu0 0.0
        %2462 = vmatpush1.msra.mxu0 %v2426
        %2463 = vmatprep.subr.mxu0 0.0
        %2464 = vmatpush1.msra.mxu0 %v2425
        %2465 = vmatprep.subr.mxu0 0.0
        %2466 = vmatpush1.msra.mxu0 %v2424
        %2467 = vmatprep.subr.mxu0 0.0
        %2468 = vmatpush1.msra.mxu0 %v2423
        %2469 = vmatprep.subr.mxu0 0.0
        %2470 = vmatpush1.msra.mxu0 %v2422
        %2471 = vmatprep.subr.mxu0 0.0
        %2472 = vmatpush2.msra.mxu0 0.0
        %2473 = vmatprep.subr.mxu0 0.0
        %2474 = vmatpush2.msra.mxu0 0.0
        %2475 = vmatprep.subr.mxu0 0.0
        %2476 = vmatpush2.msra.mxu0 0.0
        %2477 = vmatprep.subr.mxu0 0.0
        %2478 = vmatpush2.msra.mxu0 0.0
        %2479 = vmatprep.subr.mxu0 0.0
        %2480 = vmatpush2.msra.mxu0 0.0
        %2481 = vmatprep.subr.mxu0 0.0
        %2482 = vmatpush2.msra.mxu0 0.0
        %2483 = vmatprep.subr.mxu0 0.0
        %2484 = vmatpush2.msra.mxu0 0.0
        %2485 = vmatprep.subr.mxu0 0.0
        %2486 = vmatpush2.msra.mxu0 0.0
        %2487 = vmatprep.subr.mxu0 0.0
        %2488 = vmatpush2.msra.mxu0 0.0
        %2489 = vmatprep.subr.mxu0 0.0
        %2490 = vmatpush2.msra.mxu0 0.0
        %2491 = vmatprep.subr.mxu0 0.0
        %2492 = vmatpush2.msra.mxu0 0.0
        %2493 = vmatprep.subr.mxu0 0.0
        %2494 = vmatpush2.msra.mxu0 0.0
        %2495 = vmatprep.subr.mxu0 0.0
        %2496 = vmatpush2.msra.mxu0 0.0
        %2497 = vmatprep.subr.mxu0 0.0
        %2498 = vmatpush2.msra.mxu0 0.0
        %2499 = vmatprep.subr.mxu0 0.0
        %2500 = vmatpush2.msra.mxu0 0.0
        %2501 = vmatprep.subr.mxu0 0.0
        %2502 = vmatpush2.msra.mxu0 0.0
        %2503 = vmatprep.mubr.f32.mxu0 0.0
        %2504 = vmatmul.mubr.f32.gmra.mxu0 %v2241
        %v2505 = vpop.f32.mrf.mxu0
        %v2506 = vadd.f32 %v2438, %v2505
        %v2507 = vpop.f32.mrf.mxu0
        %2508 = vdwg.mxu0
        %vm2509 = vcmask 1040384
        %v2510 = vsel %vm2509, %v2326, 0.0
        %2511 = vadd.xlane.f32.xlu0 %v2510
        %v2512 = vpop.xlane.xlu0 %2511
        %v2513 = vrot.slane %v2512, 4
        %v2514 = vadd.f32 %v2512, %v2513
        %v2515 = vrot.slane %v2514, 2
        %v2516 = vadd.f32 %v2514, %v2515
        %v2517 = vrot.slane %v2516, 1
        %v2518 = vadd.f32 %v2516, %v2517
        %s2519 = vtos %v2518
        %v2520 = vstv %s2519
        %v2521 = vmul.f32 %v2419, %v694
        %2522 = vadd.xlane.f32.xlu0 %v2521
        %v2523 = vpop.xlane.xlu0 %2522
        %v2524 = vrot.slane %v2523, 4
        %v2525 = vadd.f32 %v2523, %v2524
        %v2526 = vrot.slane %v2525, 2
        %v2527 = vadd.f32 %v2525, %v2526
        %v2528 = vrot.slane %v2527, 1
        %v2529 = vadd.f32 %v2527, %v2528
        %s2530 = vtos %v2529
        %v2531 = vstv %s2530
        %v2532 = vadd.f32 %v2520, %v2531
        %v2533 = vmul.f32 %v2532, 0.03846154
        %v2534 = vlaneseq
        %v2535 = vshrl.u32 %v2534, 7
        %v2536 = vsub.s32 0, %v2535
        %v2537 = vrot.slane %v2506, %v2536
        %v2538 = vadd.f32 %v2537, %v2419
        %v2539 = vsub.f32 %v2538, %v2533
        %2540 = vst [vmem:[%s195] sm:$0xff] %v2539
        %v2541 = vadd.f32 %v2506, %v2326
        %v2542 = vsub.f32 %v2541, %v2533
        %2543 = vst [vmem:[%s195 + $0x8] sm:$0x1] %v2542
        %p2544 = scmp.lt.s32.totalorder %s16, 3
        %s2545 = scalar_select %p2544, %s16, 3
        %s2546 = smul.addr %s2545, 2
        %s2547 = smul.addr %s2546, 8
        %s2548 = scalar_lea.vmem %s3, %s2547
        // Predicated region
        $region41: #{forward_batched.1} parent=31 // pred_check
          %p2549 = pneg %p102
        $region42: #{forward_batched.1} parent=31 // pred_check_branch
          %2551 = sbr.rel (%p2549) target = $region44
        $region43: #{forward_batched.1} parent=31 // pred_region
          _
        $region44: #{forward_batched.1} parent=31 // pred_fallthru
          _
      $region32: #{forward_batched.1} parent=5 // pred_fallthru
        _
      %p2552 = scmp.le.s32.totalorder 2, %s11
      // Predicated region
      $region45: #{forward_batched.1} parent=5 // pred_check
        %p2553 = pneg %p2552
      $region46: #{forward_batched.1} parent=5 // pred_check_branch
        %2555 = sbr.rel (%p2553) target = $region48
      $region47: #{forward_batched.1} parent=5 // pred_region
        %s2556 = ssub.s32 %s11, 2
        // Predicated region
        $region49: #{forward_batched.1} parent=47 // pred_check
          %p2557 = pneg %p108
        $region50: #{forward_batched.1} parent=47 // pred_check_branch
          %2559 = sbr.rel (%p2557) target = $region52
        $region51: #{forward_batched.1} parent=47 // pred_region
          %p2560 = scmp.lt.s32.totalorder %s17, 3
          %s2561 = scalar_select %p2560, %s17, 3
          %s2562 = smul.addr %s2561, 2
          %s2563 = smul.addr %s2562, 8
          %s2564 = scalar_lea.vmem %s3, %s2563
        $region52: #{forward_batched.1} parent=47 // pred_fallthru
          _
      $region48: #{forward_batched.1} parent=5 // pred_fallthru
        _
    $region6: #{forward_batched.1} parent=1 // loop_footer
      %s15 = sadd.s32 1, %s11
    $region7: #{forward_batched.1} parent=1 // loop_footer_branch
      %10 = sbr.rel target = $region3
    $region8: #{forward_batched.1} parent=1 // loop_exit
      _
    %2565 = vsyncpa [#allocation3], 1
    %s2566 = scalar_lea.sflag [#allocation3], 1
    %2567 = vsyncpa %s2566, 1
    %2568 = vsyncpa [#allocation5], 1

</llo_original>
